<compile_context>
chip_gen: v5e
topology: v5e:2x2
jax: 0.10.0
libtpu: 0.0.40
codegen_flags: <defaults>
</compile_context>

<pallas_src>
import math

import jax
import jax.numpy as jnp
from jax import lax
from jax.experimental import pallas as pl
from jax.experimental.pallas import tpu as pltpu


def _upsample_block_kernel(x_ref, w_ref, p_ref, o_ref):
    # x_ref: (1, TH+2, W+2, Cin)   zero-padded low-res row tile (1-row/col halo)
    # w_ref: (2, 9*Cin, 2*Cout)    sub-pixel weights, one matrix per output row parity
    # p_ref: (3, Cout)             [conv bias; LN gamma; LN beta]   (f32)
    # o_ref: (1, TH, 2, W, 2*Cout) output rows 2*j+py, lanes packed as (px, cout)
    TH = x_ref.shape[1] - 2
    W = x_ref.shape[2] - 2
    Cin = x_ref.shape[3]
    Cout = p_ref.shape[1]

    xp = x_ref[0]                                         # (TH+2, W+2, Cin)

    # Single im2col pass over the low-res tile: (TH*W, 9*Cin), taps ordered (r, c, ci).
    cols = []
    for r in range(3):
        for c in range(3):
            cols.append(xp[r:r + TH, c:c + W, :].reshape(TH * W, Cin))
    patches = jnp.concatenate(cols, axis=-1)              # (TH*W, 9*Cin)

    # Per-channel params: loaded/broadcast once per tile (not per parity).
    bias = p_ref[0:1, :]                                  # (1, Cout)
    gamma = p_ref[1:2, :]
    beta = p_ref[2:3, :]
    inv_c = 1.0 / Cout
    inv_sqrt2 = 1.0 / math.sqrt(2.0)

    def ln_gelu(y):
        # y: (TH*W, Cout) f32 conv output (bias already added).
        # One-pass LayerNorm stats over channels, then affine + exact erf GELU.
        s1 = jnp.sum(y, axis=-1, keepdims=True)
        s2 = jnp.sum(y * y, axis=-1, keepdims=True)
        mu = s1 * inv_c
        var = s2 * inv_c - mu * mu
        z = (y - mu) * lax.rsqrt(var + 1e-6) * gamma + beta
        return 0.5 * z * (1.0 + lax.erf(z * inv_sqrt2))   # torch.nn.GELU() default

    slabs = []
    for py in range(2):                                   # output row parity
        # One fat MXU call per parity: (TH*W, 9*Cin) @ (9*Cin, 2*Cout), f32 acc.
        acc = jnp.dot(patches, w_ref[py],
                      preferred_element_type=jnp.float32)  # (TH*W, 2*Cout)
        z0 = ln_gelu(acc[:, :Cout] + bias)                 # px = 0
        z1 = ln_gelu(acc[:, Cout:] + bias)                 # px = 1
        zc = jnp.concatenate([z0, z1], axis=-1)            # lanes = (px, cout)
        slabs.append(zc.reshape(TH, W, 2 * Cout))

    out = jnp.stack(slabs, axis=1)                         # (TH, 2, W, 2*Cout)
    o_ref[...] = out[None].astype(o_ref.dtype)


def upsample_block(x_nchw, w_hwio, bias, gamma, beta, *, scale_factor=2,
                   row_tile=None, mxu_dtype=jnp.float32):
    """x_nchw: (B, Cin, H, W).  Returns (B, Cout, 2H, 2W) (NCHW, like the module)."""
    assert int(scale_factor) == 2, "kernel specializes the module default scale_factor=2"
    # TODO(synk): generalize the sub-pixel identity to other integer scale factors.
    B, Cin, H, W = x_nchw.shape
    Cout = w_hwio.shape[-1]
    Hu, Wu = 2 * H, 2 * W

    if row_tile is None:
        row_tile = 8 if H % 8 == 0 else H     # low-res rows per tile; tune per chip VMEM
    TH = int(row_tile)
    assert H % TH == 0
    nT = H // TH

    # NCHW -> NHWC, zero-pad the *low-res* image (the 4x upsampled image is never
    # materialized), and cut overlapping row tiles with a one-row halo.
    x = jnp.transpose(x_nchw, (0, 2, 3, 1))                        # (B, H, W, Cin)
    xpad = jnp.pad(x, ((0, 0), (1, 1), (1, 1), (0, 0)))            # (B, H+2, W+2, Cin)
    tiles = jnp.stack([xpad[:, t * TH:t * TH + TH + 2] for t in range(nT)], axis=1)
    tiles = tiles.reshape(B * nT, TH + 2, W + 2, Cin).astype(mxu_dtype)

    # Fold the 3x3 conv on the upsampled image into parity-dependent low-res taps:
    # for output parity (py, px) the 3x3 conv collapses to a 2x2 conv on the low-res
    # input.  Express all parities over the common 9-tap low-res im2col; columns are
    # ordered (px, cout) so the matmul result is already in the output lane layout.
    Bmat = jnp.array([[[1., 0., 0.], [0., 1., 1.], [0., 0., 0.]],
                      [[0., 0., 0.], [1., 1., 0.], [0., 0., 1.]]], jnp.float32)
    T = jnp.einsum('prd,qce,deio->prciqo', Bmat, Bmat, w_hwio.astype(jnp.float32))
    w_sub = T.reshape(2, 9 * Cin, 2 * Cout).astype(mxu_dtype)      # (2, 9*Cin, 2*Cout)

    params = jnp.stack([bias, gamma, beta]).astype(jnp.float32)    # (3, Cout)

    out5 = pl.pallas_call(
        _upsample_block_kernel,
        out_shape=jax.ShapeDtypeStruct((B, H, 2, W, 2 * Cout), x_nchw.dtype),
        grid_spec=pltpu.PrefetchScalarGridSpec(
            num_scalar_prefetch=0,
            grid=(B, nT),
            in_specs=[
                pl.BlockSpec((1, TH + 2, W + 2, Cin),
                             lambda b, t: (b * nT + t, 0, 0, 0)),
                pl.BlockSpec((2, 9 * Cin, 2 * Cout), lambda b, t: (0, 0, 0)),
                pl.BlockSpec((3, Cout), lambda b, t: (0, 0)),
            ],
            out_specs=pl.BlockSpec((1, TH, 2, W, 2 * Cout),
                                   lambda b, t: (b, t, 0, 0, 0)),
        ),
        compiler_params=pltpu.CompilerParams(
            dimension_semantics=("parallel", "parallel"),
            vmem_limit_bytes=32 * 1024 * 1024,
        ),
    )(tiles, w_sub, params)

    # De-interleave parities and go to NCHW in the single transpose we need anyway.
    out = out5.reshape(B, H, 2, W, 2, Cout)              # (b, j, py, i, px, c)
    out = jnp.transpose(out, (0, 5, 1, 2, 3, 4))          # (b, c, j, py, i, px)
    return out.reshape(B, Cout, Hu, Wu)


def _reference(x_nchw, w_hwio, bias, gamma, beta, sf=2):
    """Plain-JAX reference (direct upsample -> conv -> LN -> GELU)."""
    x = jnp.transpose(x_nchw, (0, 2, 3, 1))
    x = jnp.repeat(jnp.repeat(x, sf, axis=1), sf, axis=2)
    y = lax.conv_general_dilated(
        x, w_hwio, window_strides=(1, 1), padding="SAME",
        dimension_numbers=("NHWC", "HWIO", "NHWC"))
    y = y + bias[None, None, None, :]
    mu = jnp.mean(y, axis=-1, keepdims=True)
    var = jnp.mean((y - mu) ** 2, axis=-1, keepdims=True)
    y = (y - mu) / jnp.sqrt(var + 1e-6)
    y = y * gamma[None, None, None, :] + beta[None, None, None, :]
    y = 0.5 * y * (1.0 + lax.erf(y / jnp.sqrt(2.0)))
    return jnp.transpose(y, (0, 3, 1, 2))


if __name__ == "__main__":
    key = jax.random.PRNGKey(0)
    B, Cin, Cout, H, W = 2, 4, 8, 16, 16

    k1, k2, k3, k4, k5 = jax.random.split(key, 5)
    x = jax.random.normal(k1, (B, Cin, H, W), jnp.float32)
    # Conv2d weights: PyTorch is (Cout, Cin, 3, 3); we build HWIO directly.
    w_hwio = jax.random.normal(k2, (3, 3, Cin, Cout), jnp.float32) * 0.1
    bias = jax.random.normal(k3, (Cout,), jnp.float32) * 0.1
    gamma = 1.0 + 0.1 * jax.random.normal(k4, (Cout,), jnp.float32)
    beta = 0.1 * jax.random.normal(k5, (Cout,), jnp.float32)

    ref = _reference(x, w_hwio, bias, gamma, beta, sf=2)

    # f32 MXU operands: tight check against the f32 reference.
    out_f32 = upsample_block(x, w_hwio, bias, gamma, beta,
                             row_tile=8, mxu_dtype=jnp.float32)
    out_f32 = jax.block_until_ready(out_f32)
    assert out_f32.shape == (B, Cout, 2 * H, 2 * W)
    assert jnp.allclose(out_f32, ref, atol=1e-4, rtol=1e-4)

    # bf16 MXU operands (v6e/v7x fast path): f32 accumulation + f32 LN/GELU, so
    # only the conv inputs are rounded -> loose tolerance vs the f32 reference.
    out_bf16 = upsample_block(x, w_hwio, bias, gamma, beta,
                              row_tile=8, mxu_dtype=jnp.bfloat16)
    out_bf16 = jax.block_until_ready(out_bf16)
    assert jnp.allclose(out_bf16, ref, atol=1e-1, rtol=1e-1)

    print("KERNEL_OK")
</pallas_src>

<mosaic_0001>
module attributes {stable_mosaic.version = 11 : i64} {
  func.func @_upsample_block_kernel(%arg0: i32, %arg1: i32, %arg2: memref<1x10x18x4xf32, #tpu.memory_space<vmem>>, %arg3: memref<2x36x16xf32, #tpu.memory_space<vmem>>, %arg4: memref<3x8xf32, #tpu.memory_space<vmem>>, %arg5: memref<1x8x2x16x16xf32, #tpu.memory_space<vmem>>) attributes {dimension_semantics = [#tpu.dimension_semantics<parallel>, #tpu.dimension_semantics<parallel>], iteration_bounds = array<i64: 2, 2>, scalar_prefetch = 0 : i64, scratch_operands = 0 : i64, tpu.core_type = #tpu.core_type<tc>, window_params = [{transform_indices = @transform_0, window_bounds = array<i64: 1, 10, 18, 4>}, {pipeline_mode = #tpu.pipeline_mode<synchronous>, transform_indices = @transform_1, window_bounds = array<i64: 2, 36, 16>}, {pipeline_mode = #tpu.pipeline_mode<synchronous>, transform_indices = @transform_2, window_bounds = array<i64: 3, 8>}, {transform_indices = @transform_3, window_bounds = array<i64: 1, 8, 2, 16, 16>}]} {
    %c0 = arith.constant 0 : index
    %c0_0 = arith.constant 0 : index
    %c0_1 = arith.constant 0 : index
    %c0_2 = arith.constant 0 : index
    %0 = vector.load %arg2[%c0, %c0_0, %c0_1, %c0_2] : memref<1x10x18x4xf32, #tpu.memory_space<vmem>>, vector<1x10x18x4xf32>
    %1 = vector.shape_cast %0 : vector<1x10x18x4xf32> to vector<10x18x4xf32>
    %2 = vector.extract_strided_slice %1 {offsets = [0, 0, 0], sizes = [8, 16, 4], strides = [1, 1, 1]} : vector<10x18x4xf32> to vector<8x16x4xf32>
    %3 = vector.shape_cast %2 : vector<8x16x4xf32> to vector<128x4xf32>
    %4 = vector.extract_strided_slice %1 {offsets = [0, 1, 0], sizes = [8, 16, 4], strides = [1, 1, 1]} : vector<10x18x4xf32> to vector<8x16x4xf32>
    %5 = vector.shape_cast %4 : vector<8x16x4xf32> to vector<128x4xf32>
    %6 = vector.extract_strided_slice %1 {offsets = [0, 2, 0], sizes = [8, 16, 4], strides = [1, 1, 1]} : vector<10x18x4xf32> to vector<8x16x4xf32>
    %7 = vector.shape_cast %6 : vector<8x16x4xf32> to vector<128x4xf32>
    %8 = vector.extract_strided_slice %1 {offsets = [1, 0, 0], sizes = [8, 16, 4], strides = [1, 1, 1]} : vector<10x18x4xf32> to vector<8x16x4xf32>
    %9 = vector.shape_cast %8 : vector<8x16x4xf32> to vector<128x4xf32>
    %10 = vector.extract_strided_slice %1 {offsets = [1, 1, 0], sizes = [8, 16, 4], strides = [1, 1, 1]} : vector<10x18x4xf32> to vector<8x16x4xf32>
    %11 = vector.shape_cast %10 : vector<8x16x4xf32> to vector<128x4xf32>
    %12 = vector.extract_strided_slice %1 {offsets = [1, 2, 0], sizes = [8, 16, 4], strides = [1, 1, 1]} : vector<10x18x4xf32> to vector<8x16x4xf32>
    %13 = vector.shape_cast %12 : vector<8x16x4xf32> to vector<128x4xf32>
    %14 = vector.extract_strided_slice %1 {offsets = [2, 0, 0], sizes = [8, 16, 4], strides = [1, 1, 1]} : vector<10x18x4xf32> to vector<8x16x4xf32>
    %15 = vector.shape_cast %14 : vector<8x16x4xf32> to vector<128x4xf32>
    %16 = vector.extract_strided_slice %1 {offsets = [2, 1, 0], sizes = [8, 16, 4], strides = [1, 1, 1]} : vector<10x18x4xf32> to vector<8x16x4xf32>
    %17 = vector.shape_cast %16 : vector<8x16x4xf32> to vector<128x4xf32>
    %18 = vector.extract_strided_slice %1 {offsets = [2, 2, 0], sizes = [8, 16, 4], strides = [1, 1, 1]} : vector<10x18x4xf32> to vector<8x16x4xf32>
    %19 = vector.shape_cast %18 : vector<8x16x4xf32> to vector<128x4xf32>
    %20 = tpu.concatenate %3, %5, %7, %9, %11, %13, %15, %17, %19 in 1 : vector<128x4xf32>, vector<128x4xf32>, vector<128x4xf32>, vector<128x4xf32>, vector<128x4xf32>, vector<128x4xf32>, vector<128x4xf32>, vector<128x4xf32>, vector<128x4xf32> -> vector<128x36xf32>
    %c0_3 = arith.constant 0 : index
    %c0_4 = arith.constant 0 : index
    %21 = vector.load %arg4[%c0_3, %c0_4] : memref<3x8xf32, #tpu.memory_space<vmem>>, vector<1x8xf32>
    %c1 = arith.constant 1 : index
    %c0_5 = arith.constant 0 : index
    %22 = vector.load %arg4[%c1, %c0_5] : memref<3x8xf32, #tpu.memory_space<vmem>>, vector<1x8xf32>
    %c2 = arith.constant 2 : index
    %c0_6 = arith.constant 0 : index
    %23 = vector.load %arg4[%c2, %c0_6] : memref<3x8xf32, #tpu.memory_space<vmem>>, vector<1x8xf32>
    %c0_7 = arith.constant 0 : index
    %c0_8 = arith.constant 0 : index
    %c0_9 = arith.constant 0 : index
    %24 = vector.load %arg3[%c0_7, %c0_8, %c0_9] : memref<2x36x16xf32, #tpu.memory_space<vmem>>, vector<1x36x16xf32>
    %25 = vector.shape_cast %24 : vector<1x36x16xf32> to vector<36x16xf32>
    %cst = arith.constant dense<0.000000e+00> : vector<128x16xf32>
    %26 = tpu.matmul %20, %25, %cst {dimension_numbers = #tpu.dot_dimension_numbers<[1], [0], [0], [1], [0, 0, 1, 1], [], []>} : vector<128x36xf32>, vector<36x16xf32>, vector<128x16xf32> -> vector<128x16xf32>
    %27 = vector.extract_strided_slice %26 {offsets = [0, 0], sizes = [128, 8], strides = [1, 1]} : vector<128x16xf32> to vector<128x8xf32>
    %28 = vector.broadcast %21 : vector<1x8xf32> to vector<128x8xf32>
    %29 = arith.addf %27, %28 : vector<128x8xf32>
    %cst_10 = arith.constant dense<0.000000e+00> : vector<128xf32>
    %30 = vector.multi_reduction <add>, %29, %cst_10 [1] : vector<128x8xf32> to vector<128xf32>
    %31 = vector.shape_cast %30 : vector<128xf32> to vector<128x1xf32>
    %32 = arith.mulf %29, %29 : vector<128x8xf32>
    %cst_11 = arith.constant dense<0.000000e+00> : vector<128xf32>
    %33 = vector.multi_reduction <add>, %32, %cst_11 [1] : vector<128x8xf32> to vector<128xf32>
    %34 = vector.shape_cast %33 : vector<128xf32> to vector<128x1xf32>
    %cst_12 = arith.constant 1.250000e-01 : f32
    %35 = vector.broadcast %cst_12 : f32 to vector<128x1xf32>
    %36 = arith.mulf %31, %35 : vector<128x1xf32>
    %cst_13 = arith.constant 1.250000e-01 : f32
    %37 = vector.broadcast %cst_13 : f32 to vector<128x1xf32>
    %38 = arith.mulf %34, %37 : vector<128x1xf32>
    %39 = arith.mulf %36, %36 : vector<128x1xf32>
    %40 = arith.subf %38, %39 : vector<128x1xf32>
    %41 = vector.broadcast %36 : vector<128x1xf32> to vector<128x8xf32>
    %42 = arith.subf %29, %41 : vector<128x8xf32>
    %cst_14 = arith.constant 9.99999997E-7 : f32
    %43 = vector.broadcast %cst_14 : f32 to vector<128x1xf32>
    %44 = arith.addf %40, %43 : vector<128x1xf32>
    %45 = math.rsqrt %44 : vector<128x1xf32>
    %46 = vector.broadcast %45 : vector<128x1xf32> to vector<128x8xf32>
    %47 = arith.mulf %42, %46 : vector<128x8xf32>
    %48 = vector.broadcast %22 : vector<1x8xf32> to vector<128x8xf32>
    %49 = arith.mulf %47, %48 : vector<128x8xf32>
    %50 = vector.broadcast %23 : vector<1x8xf32> to vector<128x8xf32>
    %51 = arith.addf %49, %50 : vector<128x8xf32>
    %cst_15 = arith.constant 5.000000e-01 : f32
    %52 = vector.broadcast %cst_15 : f32 to vector<128x8xf32>
    %53 = arith.mulf %52, %51 : vector<128x8xf32>
    %cst_16 = arith.constant 0.707106769 : f32
    %54 = vector.broadcast %cst_16 : f32 to vector<128x8xf32>
    %55 = arith.mulf %51, %54 : vector<128x8xf32>
    %56 = math.erf %55 : vector<128x8xf32>
    %cst_17 = arith.constant 1.000000e+00 : f32
    %57 = vector.broadcast %cst_17 : f32 to vector<128x8xf32>
    %58 = arith.addf %57, %56 : vector<128x8xf32>
    %59 = arith.mulf %53, %58 : vector<128x8xf32>
    %60 = vector.extract_strided_slice %26 {offsets = [0, 8], sizes = [128, 8], strides = [1, 1]} : vector<128x16xf32> to vector<128x8xf32>
    %61 = vector.broadcast %21 : vector<1x8xf32> to vector<128x8xf32>
    %62 = arith.addf %60, %61 : vector<128x8xf32>
    %cst_18 = arith.constant dense<0.000000e+00> : vector<128xf32>
    %63 = vector.multi_reduction <add>, %62, %cst_18 [1] : vector<128x8xf32> to vector<128xf32>
    %64 = vector.shape_cast %63 : vector<128xf32> to vector<128x1xf32>
    %65 = arith.mulf %62, %62 : vector<128x8xf32>
    %cst_19 = arith.constant dense<0.000000e+00> : vector<128xf32>
    %66 = vector.multi_reduction <add>, %65, %cst_19 [1] : vector<128x8xf32> to vector<128xf32>
    %67 = vector.shape_cast %66 : vector<128xf32> to vector<128x1xf32>
    %cst_20 = arith.constant 1.250000e-01 : f32
    %68 = vector.broadcast %cst_20 : f32 to vector<128x1xf32>
    %69 = arith.mulf %64, %68 : vector<128x1xf32>
    %cst_21 = arith.constant 1.250000e-01 : f32
    %70 = vector.broadcast %cst_21 : f32 to vector<128x1xf32>
    %71 = arith.mulf %67, %70 : vector<128x1xf32>
    %72 = arith.mulf %69, %69 : vector<128x1xf32>
    %73 = arith.subf %71, %72 : vector<128x1xf32>
    %74 = vector.broadcast %69 : vector<128x1xf32> to vector<128x8xf32>
    %75 = arith.subf %62, %74 : vector<128x8xf32>
    %cst_22 = arith.constant 9.99999997E-7 : f32
    %76 = vector.broadcast %cst_22 : f32 to vector<128x1xf32>
    %77 = arith.addf %73, %76 : vector<128x1xf32>
    %78 = math.rsqrt %77 : vector<128x1xf32>
    %79 = vector.broadcast %78 : vector<128x1xf32> to vector<128x8xf32>
    %80 = arith.mulf %75, %79 : vector<128x8xf32>
    %81 = vector.broadcast %22 : vector<1x8xf32> to vector<128x8xf32>
    %82 = arith.mulf %80, %81 : vector<128x8xf32>
    %83 = vector.broadcast %23 : vector<1x8xf32> to vector<128x8xf32>
    %84 = arith.addf %82, %83 : vector<128x8xf32>
    %cst_23 = arith.constant 5.000000e-01 : f32
    %85 = vector.broadcast %cst_23 : f32 to vector<128x8xf32>
    %86 = arith.mulf %85, %84 : vector<128x8xf32>
    %cst_24 = arith.constant 0.707106769 : f32
    %87 = vector.broadcast %cst_24 : f32 to vector<128x8xf32>
    %88 = arith.mulf %84, %87 : vector<128x8xf32>
    %89 = math.erf %88 : vector<128x8xf32>
    %cst_25 = arith.constant 1.000000e+00 : f32
    %90 = vector.broadcast %cst_25 : f32 to vector<128x8xf32>
    %91 = arith.addf %90, %89 : vector<128x8xf32>
    %92 = arith.mulf %86, %91 : vector<128x8xf32>
    %93 = tpu.concatenate %59, %92 in 1 : vector<128x8xf32>, vector<128x8xf32> -> vector<128x16xf32>
    %94 = vector.shape_cast %93 : vector<128x16xf32> to vector<8x16x16xf32>
    %c1_26 = arith.constant 1 : index
    %c0_27 = arith.constant 0 : index
    %c0_28 = arith.constant 0 : index
    %95 = vector.load %arg3[%c1_26, %c0_27, %c0_28] : memref<2x36x16xf32, #tpu.memory_space<vmem>>, vector<1x36x16xf32>
    %96 = vector.shape_cast %95 : vector<1x36x16xf32> to vector<36x16xf32>
    %cst_29 = arith.constant dense<0.000000e+00> : vector<128x16xf32>
    %97 = tpu.matmul %20, %96, %cst_29 {dimension_numbers = #tpu.dot_dimension_numbers<[1], [0], [0], [1], [0, 0, 1, 1], [], []>} : vector<128x36xf32>, vector<36x16xf32>, vector<128x16xf32> -> vector<128x16xf32>
    %98 = vector.extract_strided_slice %97 {offsets = [0, 0], sizes = [128, 8], strides = [1, 1]} : vector<128x16xf32> to vector<128x8xf32>
    %99 = vector.broadcast %21 : vector<1x8xf32> to vector<128x8xf32>
    %100 = arith.addf %98, %99 : vector<128x8xf32>
    %cst_30 = arith.constant dense<0.000000e+00> : vector<128xf32>
    %101 = vector.multi_reduction <add>, %100, %cst_30 [1] : vector<128x8xf32> to vector<128xf32>
    %102 = vector.shape_cast %101 : vector<128xf32> to vector<128x1xf32>
    %103 = arith.mulf %100, %100 : vector<128x8xf32>
    %cst_31 = arith.constant dense<0.000000e+00> : vector<128xf32>
    %104 = vector.multi_reduction <add>, %103, %cst_31 [1] : vector<128x8xf32> to vector<128xf32>
    %105 = vector.shape_cast %104 : vector<128xf32> to vector<128x1xf32>
    %cst_32 = arith.constant 1.250000e-01 : f32
    %106 = vector.broadcast %cst_32 : f32 to vector<128x1xf32>
    %107 = arith.mulf %102, %106 : vector<128x1xf32>
    %cst_33 = arith.constant 1.250000e-01 : f32
    %108 = vector.broadcast %cst_33 : f32 to vector<128x1xf32>
    %109 = arith.mulf %105, %108 : vector<128x1xf32>
    %110 = arith.mulf %107, %107 : vector<128x1xf32>
    %111 = arith.subf %109, %110 : vector<128x1xf32>
    %112 = vector.broadcast %107 : vector<128x1xf32> to vector<128x8xf32>
    %113 = arith.subf %100, %112 : vector<128x8xf32>
    %cst_34 = arith.constant 9.99999997E-7 : f32
    %114 = vector.broadcast %cst_34 : f32 to vector<128x1xf32>
    %115 = arith.addf %111, %114 : vector<128x1xf32>
    %116 = math.rsqrt %115 : vector<128x1xf32>
    %117 = vector.broadcast %116 : vector<128x1xf32> to vector<128x8xf32>
    %118 = arith.mulf %113, %117 : vector<128x8xf32>
    %119 = vector.broadcast %22 : vector<1x8xf32> to vector<128x8xf32>
    %120 = arith.mulf %118, %119 : vector<128x8xf32>
    %121 = vector.broadcast %23 : vector<1x8xf32> to vector<128x8xf32>
    %122 = arith.addf %120, %121 : vector<128x8xf32>
    %cst_35 = arith.constant 5.000000e-01 : f32
    %123 = vector.broadcast %cst_35 : f32 to vector<128x8xf32>
    %124 = arith.mulf %123, %122 : vector<128x8xf32>
    %cst_36 = arith.constant 0.707106769 : f32
    %125 = vector.broadcast %cst_36 : f32 to vector<128x8xf32>
    %126 = arith.mulf %122, %125 : vector<128x8xf32>
    %127 = math.erf %126 : vector<128x8xf32>
    %cst_37 = arith.constant 1.000000e+00 : f32
    %128 = vector.broadcast %cst_37 : f32 to vector<128x8xf32>
    %129 = arith.addf %128, %127 : vector<128x8xf32>
    %130 = arith.mulf %124, %129 : vector<128x8xf32>
    %131 = vector.extract_strided_slice %97 {offsets = [0, 8], sizes = [128, 8], strides = [1, 1]} : vector<128x16xf32> to vector<128x8xf32>
    %132 = vector.broadcast %21 : vector<1x8xf32> to vector<128x8xf32>
    %133 = arith.addf %131, %132 : vector<128x8xf32>
    %cst_38 = arith.constant dense<0.000000e+00> : vector<128xf32>
    %134 = vector.multi_reduction <add>, %133, %cst_38 [1] : vector<128x8xf32> to vector<128xf32>
    %135 = vector.shape_cast %134 : vector<128xf32> to vector<128x1xf32>
    %136 = arith.mulf %133, %133 : vector<128x8xf32>
    %cst_39 = arith.constant dense<0.000000e+00> : vector<128xf32>
    %137 = vector.multi_reduction <add>, %136, %cst_39 [1] : vector<128x8xf32> to vector<128xf32>
    %138 = vector.shape_cast %137 : vector<128xf32> to vector<128x1xf32>
    %cst_40 = arith.constant 1.250000e-01 : f32
    %139 = vector.broadcast %cst_40 : f32 to vector<128x1xf32>
    %140 = arith.mulf %135, %139 : vector<128x1xf32>
    %cst_41 = arith.constant 1.250000e-01 : f32
    %141 = vector.broadcast %cst_41 : f32 to vector<128x1xf32>
    %142 = arith.mulf %138, %141 : vector<128x1xf32>
    %143 = arith.mulf %140, %140 : vector<128x1xf32>
    %144 = arith.subf %142, %143 : vector<128x1xf32>
    %145 = vector.broadcast %140 : vector<128x1xf32> to vector<128x8xf32>
    %146 = arith.subf %133, %145 : vector<128x8xf32>
    %cst_42 = arith.constant 9.99999997E-7 : f32
    %147 = vector.broadcast %cst_42 : f32 to vector<128x1xf32>
    %148 = arith.addf %144, %147 : vector<128x1xf32>
    %149 = math.rsqrt %148 : vector<128x1xf32>
    %150 = vector.broadcast %149 : vector<128x1xf32> to vector<128x8xf32>
    %151 = arith.mulf %146, %150 : vector<128x8xf32>
    %152 = vector.broadcast %22 : vector<1x8xf32> to vector<128x8xf32>
    %153 = arith.mulf %151, %152 : vector<128x8xf32>
    %154 = vector.broadcast %23 : vector<1x8xf32> to vector<128x8xf32>
    %155 = arith.addf %153, %154 : vector<128x8xf32>
    %cst_43 = arith.constant 5.000000e-01 : f32
    %156 = vector.broadcast %cst_43 : f32 to vector<128x8xf32>
    %157 = arith.mulf %156, %155 : vector<128x8xf32>
    %cst_44 = arith.constant 0.707106769 : f32
    %158 = vector.broadcast %cst_44 : f32 to vector<128x8xf32>
    %159 = arith.mulf %155, %158 : vector<128x8xf32>
    %160 = math.erf %159 : vector<128x8xf32>
    %cst_45 = arith.constant 1.000000e+00 : f32
    %161 = vector.broadcast %cst_45 : f32 to vector<128x8xf32>
    %162 = arith.addf %161, %160 : vector<128x8xf32>
    %163 = arith.mulf %157, %162 : vector<128x8xf32>
    %164 = tpu.concatenate %130, %163 in 1 : vector<128x8xf32>, vector<128x8xf32> -> vector<128x16xf32>
    %165 = vector.shape_cast %164 : vector<128x16xf32> to vector<8x16x16xf32>
    %166 = vector.shape_cast %94 : vector<8x16x16xf32> to vector<8x1x16x16xf32>
    %167 = vector.shape_cast %165 : vector<8x16x16xf32> to vector<8x1x16x16xf32>
    %168 = tpu.concatenate %166, %167 in 1 : vector<8x1x16x16xf32>, vector<8x1x16x16xf32> -> vector<8x2x16x16xf32>
    %169 = vector.shape_cast %168 : vector<8x2x16x16xf32> to vector<1x8x2x16x16xf32>
    %c0_46 = arith.constant 0 : index
    %c0_47 = arith.constant 0 : index
    %c0_48 = arith.constant 0 : index
    %c0_49 = arith.constant 0 : index
    %c0_50 = arith.constant 0 : index
    %170 = vector.load %arg5[%c0_46, %c0_47, %c0_48, %c0_49, %c0_50] : memref<1x8x2x16x16xf32, #tpu.memory_space<vmem>>, vector<1x8x2x16x16xf32>
    tpu.vector_store %arg5[%c0_46, %c0_47, %c0_48, %c0_49, %c0_50], %169 {strides = array<i32>} : memref<1x8x2x16x16xf32, #tpu.memory_space<vmem>>, vector<1x8x2x16x16xf32>,
    return
  }
  func.func @transform_0(%arg0: i32, %arg1: i32) -> (i32, i32, i32, i32) {
    %c2_i32 = arith.constant 2 : i32
    %0 = arith.muli %arg0, %c2_i32 : i32
    %1 = arith.addi %0, %arg1 : i32
    %c0_i32 = arith.constant 0 : i32
    %c0_i32_0 = arith.constant 0 : i32
    %c0_i32_1 = arith.constant 0 : i32
    %c0_i32_2 = arith.constant 0 : i32
    return %1, %c0_i32, %c0_i32_0, %c0_i32_1 : i32, i32, i32, i32
  }
  func.func @transform_1(%arg0: i32, %arg1: i32) -> (i32, i32, i32) {
    %c0_i32 = arith.constant 0 : i32
    %c0_i32_0 = arith.constant 0 : i32
    %c0_i32_1 = arith.constant 0 : i32
    %c0_i32_2 = arith.constant 0 : i32
    return %c0_i32, %c0_i32_0, %c0_i32_1 : i32, i32, i32
  }
  func.func @transform_2(%arg0: i32, %arg1: i32) -> (i32, i32) {
    %c0_i32 = arith.constant 0 : i32
    %c0_i32_0 = arith.constant 0 : i32
    %c0_i32_1 = arith.constant 0 : i32
    return %c0_i32, %c0_i32_0 : i32, i32
  }
  func.func @transform_3(%arg0: i32, %arg1: i32) -> (i32, i32, i32, i32, i32) {
    %c0_i32 = arith.constant 0 : i32
    %c0_i32_0 = arith.constant 0 : i32
    %c0_i32_1 = arith.constant 0 : i32
    %c0_i32_2 = arith.constant 0 : i32
    return %arg0, %arg1, %c0_i32, %c0_i32_0, %c0_i32_1 : i32, i32, i32, i32, i32
  }
}

</mosaic_0001>

<llo_original>
// kernel: tpu_custom_call.1
$region0: #{tpu_custom_call.1}
  #allocation0 [shape = 'u32[]', space=smem, size = 0x4, offset = 0x4, fixed_abs, tag = 'smem constant byte address 0x4 - core index']
  #allocation1 [shape = 'u32[72,128]{1,0:T(1,128)}', space=vmem, size = 0x9000, scoped, tag = 'internal scratch']
  %s0 = inlined_call_operand.vmem [shape: f32[4,10,18,4], index: 0, kind: input, shape index: {}]
  %s1 = inlined_call_operand.vmem [shape: f32[2,36,16], index: 1, kind: input, shape index: {}]
  %s2 = inlined_call_operand.vmem [shape: f32[3,8], index: 2, kind: input, shape index: {}]
  %s3 = inlined_call_operand.hbm [shape: f32[2,16,2,16,16], index: 3, kind: output, shape index: {}]
  %s4 = sld [smem:[#allocation0]]
  $region45: #{tpu_custom_call.1} parent=0
    _
  %s6 = ssub.s32 1, %s4
  %s7 = scalar_select 0, %s6, %s4
  $region1: #{tpu_custom_call.1} parent=0
    #allocation2 [shape = 'u8[262144]{0}', space=vmem, size = 0x40000, scoped, tag = 'output window, operand 0']
    #allocation3 [shape = 's32[2]{0}', space=sflag, size = 0x8, scoped, tag = 'scoped memory for tpu_custom_call.1']
    %8 = vsyncpa [#allocation3], 0
    %s9 = scalar_lea.sflag [#allocation3], 1
    %10 = vsyncpa %s9, 0
    loop: start=0, step=1, limit=6
    $region2: #{tpu_custom_call.1} parent=1 // loop_pre_header
      _
    $region3: #{tpu_custom_call.1} parent=1 // loop_header
      %s12 = sphi 0, %s16
      %p13 = scmp.ge.s32.totalorder %s12, 6
      %s19 = sphi 0, %s31
      %s20 = sphi 0, %s27
      %s21 = sphi 0, %s19
      %s22 = sphi 0, %s20
      %s23 = sphi 0, %s21
      %s24 = sphi 0, %s22
      %s38 = sphi 0, %s40
      %s41 = sphi 0, %s38
      %s42 = sphi 0, %s41
      %s58 = sphi 0, %s42
      %s62 = sphi 0, %s62
      %s64 = sphi 0, %s62
      %s65 = sphi 0, %s64
      %s79 = sphi 0, %s65
      %s83 = sphi 0, %s83
      %s85 = sphi 0, %s83
      %s86 = sphi 0, %s85
      %s100 = sphi 0, %s86
      %s108 = sphi 0, %s110
      %s111 = sphi 0, %s108
      %s112 = sphi 0, %s111
      %s128 = sphi 0, %s112
    $region4: #{tpu_custom_call.1} parent=1 // loop_header_branch
      %15 = sbr.rel (%p13) target = $region8
    $region5: #{tpu_custom_call.1} parent=1 // loop_body
      %s17 = ssub.s32 %s12, 1
      %s18 = ssub.s32 %s12, 2
      %s25 = sadd.s32 1, %s20
      %p26 = scmp.ge.s32.totalorder %s25, 2
      %s27 = scalar_select %p26, 0, %s25
      %s28 = sadd.s32 1, %s19
      %s29 = scalar_select %p26, %s28, %s19
      %p30 = scmp.ge.s32.totalorder %s29, 2
      %s31 = scalar_select %p30, 0, %s29
      %s32 = smul.u32 %s19, 2
      %s33 = sadd.s32 %s32, %s20
      %s34 = smul.u32 %s31, 2
      %s35 = sadd.s32 %s34, %s27
      %s36 = ssub.s32 %s33, %s35
      %p37 = scmp.eq.s32.totalorder %s36, 0
      %s39 = sadd.s32 %s38, 1
      %s40 = scalar_select %p37, %s38, %s39
      %p43 = pneg %p37
      %p44 = scmp.eq.s32.totalorder %s12, 3
      %p45 = por %p43, %p44
      %p46 = scmp.ne.s32.totalorder %s38, %s41
      %p47 = scmp.eq.s32.totalorder %s12, 0
      %p48 = por %p46, %p47
      %p49 = scmp.ne.s32.totalorder %s38, %s41
      %p50 = scmp.eq.s32.totalorder %s17, 3
      %p51 = por %p49, %p50
      %p52 = scmp.ne.s32.totalorder %s41, %s42
      %p53 = scmp.eq.s32.totalorder %s17, 0
      %p54 = por %p52, %p53
      %p55 = scmp.ne.s32.totalorder %s41, %s42
      %p56 = scmp.eq.s32.totalorder %s18, 3
      %p57 = por %p55, %p56
      %p59 = scmp.ne.s32.totalorder %s42, %s58
      %p60 = scmp.eq.s32.totalorder %s18, 0
      %p61 = por %p59, %p60
      %s63 = sadd.s32 %s62, 1
      %p66 = scmp.eq.s32.totalorder %s12, 3
      %p67 = scmp.ne.s32.totalorder %s62, %s64
      %p68 = scmp.eq.s32.totalorder %s12, 0
      %p69 = por %p67, %p68
      %p70 = scmp.ne.s32.totalorder %s62, %s64
      %p71 = scmp.eq.s32.totalorder %s17, 3
      %p72 = por %p70, %p71
      %p73 = scmp.ne.s32.totalorder %s64, %s65
      %p74 = scmp.eq.s32.totalorder %s17, 0
      %p75 = por %p73, %p74
      %p76 = scmp.ne.s32.totalorder %s64, %s65
      %p77 = scmp.eq.s32.totalorder %s18, 3
      %p78 = por %p76, %p77
      %p80 = scmp.ne.s32.totalorder %s65, %s79
      %p81 = scmp.eq.s32.totalorder %s18, 0
      %p82 = por %p80, %p81
      %s84 = sadd.s32 %s83, 1
      %p87 = scmp.eq.s32.totalorder %s12, 3
      %p88 = scmp.ne.s32.totalorder %s83, %s85
      %p89 = scmp.eq.s32.totalorder %s12, 0
      %p90 = por %p88, %p89
      %p91 = scmp.ne.s32.totalorder %s83, %s85
      %p92 = scmp.eq.s32.totalorder %s17, 3
      %p93 = por %p91, %p92
      %p94 = scmp.ne.s32.totalorder %s85, %s86
      %p95 = scmp.eq.s32.totalorder %s17, 0
      %p96 = por %p94, %p95
      %p97 = scmp.ne.s32.totalorder %s85, %s86
      %p98 = scmp.eq.s32.totalorder %s18, 3
      %p99 = por %p97, %p98
      %p101 = scmp.ne.s32.totalorder %s86, %s100
      %p102 = scmp.eq.s32.totalorder %s18, 0
      %p103 = por %p101, %p102
      %s104 = ssub.s32 %s19, %s31
      %s105 = ssub.s32 %s20, %s27
      %s106 = sor.u32 %s104, %s105
      %p107 = scmp.eq.s32.totalorder %s106, 0
      %s109 = sadd.s32 %s108, 1
      %s110 = scalar_select %p107, %s108, %s109
      %p113 = pneg %p107
      %p114 = scmp.eq.s32.totalorder %s12, 3
      %p115 = por %p113, %p114
      %p116 = scmp.ne.s32.totalorder %s108, %s111
      %p117 = scmp.eq.s32.totalorder %s12, 0
      %p118 = por %p116, %p117
      %p119 = scmp.ne.s32.totalorder %s108, %s111
      %p120 = scmp.eq.s32.totalorder %s17, 3
      %p121 = por %p119, %p120
      %p122 = scmp.ne.s32.totalorder %s111, %s112
      %p123 = scmp.eq.s32.totalorder %s17, 0
      %p124 = por %p122, %p123
      %p125 = scmp.ne.s32.totalorder %s111, %s112
      %p126 = scmp.eq.s32.totalorder %s18, 3
      %p127 = por %p125, %p126
      %p129 = scmp.ne.s32.totalorder %s112, %s128
      %p130 = scmp.eq.s32.totalorder %s18, 0
      %p131 = por %p129, %p130
      %p132 = scmp.le.s32.totalorder 1, %s12
      %p133 = scmp.lt.s32.totalorder %s12, 5
      %p134 = pnand %p132, %p133
      %p135 = pneg %p134
      // Predicated region
      $region9: #{tpu_custom_call.1} parent=5 // pred_check
        _
      $region10: #{tpu_custom_call.1} parent=5 // pred_check_branch
        %137 = sbr.rel (%p134) target = $region12
      $region11: #{tpu_custom_call.1} parent=5 // pred_region
        %s138 = ssub.s32 %s12, 1
        // Predicated region
        $region13: #{tpu_custom_call.1} parent=11 // pred_check
          %p139 = pneg %p75
        $region14: #{tpu_custom_call.1} parent=11 // pred_check_branch
          %141 = sbr.rel (%p139) target = $region16
        $region15: #{tpu_custom_call.1} parent=11 // pred_region
          _
        $region16: #{tpu_custom_call.1} parent=11 // pred_fallthru
          _
        // Predicated region
        $region17: #{tpu_custom_call.1} parent=11 // pred_check
          %p142 = pneg %p96
        $region18: #{tpu_custom_call.1} parent=11 // pred_check_branch
          %144 = sbr.rel (%p142) target = $region20
        $region19: #{tpu_custom_call.1} parent=11 // pred_region
          _
        $region20: #{tpu_custom_call.1} parent=11 // pred_fallthru
          _
      $region12: #{tpu_custom_call.1} parent=5 // pred_fallthru
        _
      %p145 = scmp.lt.s32.totalorder %s12, 4
      // Predicated region
      $region21: #{tpu_custom_call.1} parent=5 // pred_check
        %p146 = pneg %p145
      $region22: #{tpu_custom_call.1} parent=5 // pred_check_branch
        %148 = sbr.rel (%p146) target = $region24
      $region23: #{tpu_custom_call.1} parent=5 // pred_region
        // Predicated region
        $region25: #{tpu_custom_call.1} parent=23 // pred_check
          %p149 = pneg %p48
        $region26: #{tpu_custom_call.1} parent=23 // pred_check_branch
          %151 = sbr.rel (%p149) target = $region28
        $region27: #{tpu_custom_call.1} parent=23 // pred_region
          %s152 = smul.u32 %s19, 2
          %s153 = sadd.s32 %s152, %s20
          %p154 = scmp.lt.s32.totalorder %s153, 3
          %s155 = scalar_select %p154, %s153, 3
          %s156 = smul.addr %s155, 30
          %s157 = smul.addr %s156, 8
          %s158 = scalar_lea.vmem %s0, %s157
          %s159 = smul.u32 %s19, 2
          %s160 = sadd.s32 %s159, %s20
        $region28: #{tpu_custom_call.1} parent=23 // pred_fallthru
          _
      $region24: #{tpu_custom_call.1} parent=5 // pred_fallthru
        _
      %p161 = scmp.le.s32.totalorder 1, %s12
      %p162 = scmp.lt.s32.totalorder %s12, 5
      %p163 = pnand %p161, %p162
      %p164 = pneg %p163
      // Predicated region
      $region29: #{tpu_custom_call.1} parent=5 // pred_check
        _
      $region30: #{tpu_custom_call.1} parent=5 // pred_check_branch
        %166 = sbr.rel (%p163) target = $region32
      $region31: #{tpu_custom_call.1} parent=5 // pred_region
        %s167 = ssub.s32 %s12, 1
        %s168 = smul.u32 %s21, 2
        %s169 = sadd.s32 %s168, %s22
        %p170 = scmp.lt.s32.totalorder %s169, 3
        %s171 = scalar_select %p170, %s169, 3
        %s172 = smul.addr %s171, 30
        %s173 = smul.addr %s172, 8
        %s174 = scalar_lea.vmem %s0, %s173
        %p175 = pneg %p54
        %p176 = pneg %p51
        %p177 = pneg %p75
        %p178 = pneg %p72
        %p179 = pneg %p96
        %p180 = pneg %p93
        %p181 = pneg %p124
        %p182 = pneg %p121
        %s183 = sand.u32 %s111, 1
        %s184 = scalar_lea.sflag [#allocation3], %s183
        %s185 = sand.u32 %s111, 1
        %s186 = smul.addr %s185, 256
        %s187 = scalar_lea.vmem [#allocation2], %s186
        %s188 = smul.u32 %s21, 2
        %s189 = sadd.s32 %s188, %s22
        %p190 = scmp.lt.s32.totalorder %s189, 3
        %s191 = scalar_select %p190, %s189, 3
        %s192 = smul.addr %s191, 30
        %s193 = smul.addr %s192, 8
        %s194 = scalar_lea.vmem %s0, %s193
        %s195 = smul.u32 %s21, 2
        %s196 = sadd.s32 %s195, %s22
        %s197 = smul.u32 8, %s22
        %v198 = vld [vmem:[%s194] sm:$0xff]
        %v199 = vld [vmem:[%s194 + $0x8] sm:$0xff]
        %v200 = vld [vmem:[%s194 + $0x10] sm:$0x3]
        %v201 = vld [vmem:[%s194 + $0x18] sm:$0xff]
        %v202 = vld [vmem:[%s194 + $0x20] sm:$0xff]
        %v203 = vld [vmem:[%s194 + $0x28] sm:$0x3]
        %v204 = vld [vmem:[%s194 + $0x30] sm:$0xff]
        %v205 = vld [vmem:[%s194 + $0x38] sm:$0xff]
        %v206 = vld [vmem:[%s194 + $0x40] sm:$0x3]
        %v207 = vld [vmem:[%s194 + $0x48] sm:$0xff]
        %v208 = vld [vmem:[%s194 + $0x50] sm:$0xff]
        %v209 = vld [vmem:[%s194 + $0x58] sm:$0x3]
        %v210 = vld [vmem:[%s194 + $0x60] sm:$0xff]
        %v211 = vld [vmem:[%s194 + $0x68] sm:$0xff]
        %v212 = vld [vmem:[%s194 + $0x70] sm:$0x3]
        %v213 = vld [vmem:[%s194 + $0x78] sm:$0xff]
        %v214 = vld [vmem:[%s194 + $0x80] sm:$0xff]
        %v215 = vld [vmem:[%s194 + $0x88] sm:$0x3]
        %v216 = vld [vmem:[%s194 + $0x90] sm:$0xff]
        %v217 = vld [vmem:[%s194 + $0x98] sm:$0xff]
        %v218 = vld [vmem:[%s194 + $0xa0] sm:$0x3]
        %v219 = vld [vmem:[%s194 + $0xa8] sm:$0xff]
        %v220 = vld [vmem:[%s194 + $0xb0] sm:$0xff]
        %v221 = vld [vmem:[%s194 + $0xb8] sm:$0x3]
        %v222 = vld [vmem:[%s194 + $0xc0] sm:$0xff]
        %v223 = vld [vmem:[%s194 + $0xc8] sm:$0xff]
        %v224 = vld [vmem:[%s194 + $0xd0] sm:$0x3]
        %v225 = vld [vmem:[%s194 + $0xd8] sm:$0xff]
        %v226 = vld [vmem:[%s194 + $0xe0] sm:$0xff]
        %v227 = vld [vmem:[%s194 + $0xe8] sm:$0x3]
        %vm252 = vcmask 1046528
        %v253 = vrot.slane %v198, 1
        %v254 = vrot.slane %v199, 1
        %v255 = vsel %vm252, %v253, %v254
        %v256 = vrot.slane %v200, 1
        %v257 = vsel %vm252, %v254, %v256
        %v258 = vrot.slane %v201, 1
        %v259 = vrot.slane %v202, 1
        %v260 = vsel %vm252, %v258, %v259
        %v261 = vrot.slane %v203, 1
        %v262 = vsel %vm252, %v259, %v261
        %v263 = vrot.slane %v204, 1
        %v264 = vrot.slane %v205, 1
        %v265 = vsel %vm252, %v263, %v264
        %v266 = vrot.slane %v206, 1
        %v267 = vsel %vm252, %v264, %v266
        %v268 = vrot.slane %v207, 1
        %v269 = vrot.slane %v208, 1
        %v270 = vsel %vm252, %v268, %v269
        %v271 = vrot.slane %v209, 1
        %v272 = vsel %vm252, %v269, %v271
        %v273 = vrot.slane %v210, 1
        %v274 = vrot.slane %v211, 1
        %v275 = vsel %vm252, %v273, %v274
        %v276 = vrot.slane %v212, 1
        %v277 = vsel %vm252, %v274, %v276
        %v278 = vrot.slane %v213, 1
        %v279 = vrot.slane %v214, 1
        %v280 = vsel %vm252, %v278, %v279
        %v281 = vrot.slane %v215, 1
        %v282 = vsel %vm252, %v279, %v281
        %v283 = vrot.slane %v216, 1
        %v284 = vrot.slane %v217, 1
        %v285 = vsel %vm252, %v283, %v284
        %v286 = vrot.slane %v218, 1
        %v287 = vsel %vm252, %v284, %v286
        %v288 = vrot.slane %v219, 1
        %v289 = vrot.slane %v220, 1
        %v290 = vsel %vm252, %v288, %v289
        %v291 = vrot.slane %v221, 1
        %v292 = vsel %vm252, %v289, %v291
        %vm293 = vcmask 1045504
        %v294 = vrot.slane %v198, 2
        %v295 = vrot.slane %v199, 2
        %v296 = vsel %vm293, %v294, %v295
        %v297 = vrot.slane %v200, 2
        %v298 = vsel %vm293, %v295, %v297
        %v299 = vrot.slane %v201, 2
        %v300 = vrot.slane %v202, 2
        %v301 = vsel %vm293, %v299, %v300
        %v302 = vrot.slane %v203, 2
        %v303 = vsel %vm293, %v300, %v302
        %v304 = vrot.slane %v204, 2
        %v305 = vrot.slane %v205, 2
        %v306 = vsel %vm293, %v304, %v305
        %v307 = vrot.slane %v206, 2
        %v308 = vsel %vm293, %v305, %v307
        %v309 = vrot.slane %v207, 2
        %v310 = vrot.slane %v208, 2
        %v311 = vsel %vm293, %v309, %v310
        %v312 = vrot.slane %v209, 2
        %v313 = vsel %vm293, %v310, %v312
        %v314 = vrot.slane %v210, 2
        %v315 = vrot.slane %v211, 2
        %v316 = vsel %vm293, %v314, %v315
        %v317 = vrot.slane %v212, 2
        %v318 = vsel %vm293, %v315, %v317
        %v319 = vrot.slane %v213, 2
        %v320 = vrot.slane %v214, 2
        %v321 = vsel %vm293, %v319, %v320
        %v322 = vrot.slane %v215, 2
        %v323 = vsel %vm293, %v320, %v322
        %v324 = vrot.slane %v216, 2
        %v325 = vrot.slane %v217, 2
        %v326 = vsel %vm293, %v324, %v325
        %v327 = vrot.slane %v218, 2
        %v328 = vsel %vm293, %v325, %v327
        %v329 = vrot.slane %v219, 2
        %v330 = vrot.slane %v220, 2
        %v331 = vsel %vm293, %v329, %v330
        %v332 = vrot.slane %v221, 2
        %v333 = vsel %vm293, %v330, %v332
        %v337 = vrot.slane %v222, 1
        %v338 = vrot.slane %v223, 1
        %v339 = vsel %vm252, %v337, %v338
        %v340 = vrot.slane %v224, 1
        %v341 = vsel %vm252, %v338, %v340
        %v342 = vrot.slane %v222, 2
        %v343 = vrot.slane %v223, 2
        %v344 = vsel %vm293, %v342, %v343
        %v345 = vrot.slane %v224, 2
        %v346 = vsel %vm293, %v343, %v345
        %v350 = vrot.slane %v225, 1
        %v351 = vrot.slane %v226, 1
        %v352 = vsel %vm252, %v350, %v351
        %v353 = vrot.slane %v227, 1
        %v354 = vsel %vm252, %v351, %v353
        %v355 = vrot.slane %v225, 2
        %v356 = vrot.slane %v226, 2
        %v357 = vsel %vm293, %v355, %v356
        %v358 = vrot.slane %v227, 2
        %v359 = vsel %vm293, %v356, %v358
        %360 = vrot.lane.b32.xlu0 %v255, 4
        %v361 = vpop.permute.xlu0 %360
        %362 = vrot.lane.b32.xlu0 %v257, 4
        %v363 = vpop.permute.xlu0 %362
        %364 = vrot.lane.b32.xlu0 %v260, 4
        %v365 = vpop.permute.xlu0 %364
        %366 = vrot.lane.b32.xlu0 %v262, 4
        %v367 = vpop.permute.xlu0 %366
        %368 = vrot.lane.b32.xlu0 %v265, 4
        %v369 = vpop.permute.xlu0 %368
        %370 = vrot.lane.b32.xlu0 %v267, 4
        %v371 = vpop.permute.xlu0 %370
        %372 = vrot.lane.b32.xlu0 %v270, 4
        %v373 = vpop.permute.xlu0 %372
        %374 = vrot.lane.b32.xlu0 %v272, 4
        %v375 = vpop.permute.xlu0 %374
        %376 = vrot.lane.b32.xlu0 %v275, 4
        %v377 = vpop.permute.xlu0 %376
        %378 = vrot.lane.b32.xlu0 %v277, 4
        %v379 = vpop.permute.xlu0 %378
        %380 = vrot.lane.b32.xlu0 %v280, 4
        %v381 = vpop.permute.xlu0 %380
        %382 = vrot.lane.b32.xlu0 %v282, 4
        %v383 = vpop.permute.xlu0 %382
        %384 = vrot.lane.b32.xlu0 %v285, 4
        %v385 = vpop.permute.xlu0 %384
        %386 = vrot.lane.b32.xlu0 %v287, 4
        %v387 = vpop.permute.xlu0 %386
        %388 = vrot.lane.b32.xlu0 %v290, 4
        %v389 = vpop.permute.xlu0 %388
        %390 = vrot.lane.b32.xlu0 %v292, 4
        %v391 = vpop.permute.xlu0 %390
        %408 = vrot.lane.b32.xlu0 %v296, 8
        %v409 = vpop.permute.xlu0 %408
        %410 = vrot.lane.b32.xlu0 %v298, 8
        %v411 = vpop.permute.xlu0 %410
        %412 = vrot.lane.b32.xlu0 %v301, 8
        %v413 = vpop.permute.xlu0 %412
        %414 = vrot.lane.b32.xlu0 %v303, 8
        %v415 = vpop.permute.xlu0 %414
        %416 = vrot.lane.b32.xlu0 %v306, 8
        %v417 = vpop.permute.xlu0 %416
        %418 = vrot.lane.b32.xlu0 %v308, 8
        %v419 = vpop.permute.xlu0 %418
        %420 = vrot.lane.b32.xlu0 %v311, 8
        %v421 = vpop.permute.xlu0 %420
        %422 = vrot.lane.b32.xlu0 %v313, 8
        %v423 = vpop.permute.xlu0 %422
        %424 = vrot.lane.b32.xlu0 %v316, 8
        %v425 = vpop.permute.xlu0 %424
        %426 = vrot.lane.b32.xlu0 %v318, 8
        %v427 = vpop.permute.xlu0 %426
        %428 = vrot.lane.b32.xlu0 %v321, 8
        %v429 = vpop.permute.xlu0 %428
        %430 = vrot.lane.b32.xlu0 %v323, 8
        %v431 = vpop.permute.xlu0 %430
        %432 = vrot.lane.b32.xlu0 %v326, 8
        %v433 = vpop.permute.xlu0 %432
        %434 = vrot.lane.b32.xlu0 %v328, 8
        %v435 = vpop.permute.xlu0 %434
        %436 = vrot.lane.b32.xlu0 %v331, 8
        %v437 = vpop.permute.xlu0 %436
        %438 = vrot.lane.b32.xlu0 %v333, 8
        %v439 = vpop.permute.xlu0 %438
        %456 = vrot.lane.b32.xlu0 %v201, 12
        %v457 = vpop.permute.xlu0 %456
        %458 = vrot.lane.b32.xlu0 %v202, 12
        %v459 = vpop.permute.xlu0 %458
        %460 = vrot.lane.b32.xlu0 %v204, 12
        %v461 = vpop.permute.xlu0 %460
        %462 = vrot.lane.b32.xlu0 %v205, 12
        %v463 = vpop.permute.xlu0 %462
        %464 = vrot.lane.b32.xlu0 %v207, 12
        %v465 = vpop.permute.xlu0 %464
        %466 = vrot.lane.b32.xlu0 %v208, 12
        %v467 = vpop.permute.xlu0 %466
        %468 = vrot.lane.b32.xlu0 %v210, 12
        %v469 = vpop.permute.xlu0 %468
        %470 = vrot.lane.b32.xlu0 %v211, 12
        %v471 = vpop.permute.xlu0 %470
        %472 = vrot.lane.b32.xlu0 %v213, 12
        %v473 = vpop.permute.xlu0 %472
        %474 = vrot.lane.b32.xlu0 %v214, 12
        %v475 = vpop.permute.xlu0 %474
        %476 = vrot.lane.b32.xlu0 %v216, 12
        %v477 = vpop.permute.xlu0 %476
        %478 = vrot.lane.b32.xlu0 %v217, 12
        %v479 = vpop.permute.xlu0 %478
        %480 = vrot.lane.b32.xlu0 %v219, 12
        %v481 = vpop.permute.xlu0 %480
        %482 = vrot.lane.b32.xlu0 %v220, 12
        %v483 = vpop.permute.xlu0 %482
        %484 = vrot.lane.b32.xlu0 %v222, 12
        %v485 = vpop.permute.xlu0 %484
        %486 = vrot.lane.b32.xlu0 %v223, 12
        %v487 = vpop.permute.xlu0 %486
        %504 = vrot.lane.b32.xlu0 %v260, 16
        %v505 = vpop.permute.xlu0 %504
        %506 = vrot.lane.b32.xlu0 %v262, 16
        %v507 = vpop.permute.xlu0 %506
        %508 = vrot.lane.b32.xlu0 %v265, 16
        %v509 = vpop.permute.xlu0 %508
        %510 = vrot.lane.b32.xlu0 %v267, 16
        %v511 = vpop.permute.xlu0 %510
        %512 = vrot.lane.b32.xlu0 %v270, 16
        %v513 = vpop.permute.xlu0 %512
        %514 = vrot.lane.b32.xlu0 %v272, 16
        %v515 = vpop.permute.xlu0 %514
        %516 = vrot.lane.b32.xlu0 %v275, 16
        %v517 = vpop.permute.xlu0 %516
        %518 = vrot.lane.b32.xlu0 %v277, 16
        %v519 = vpop.permute.xlu0 %518
        %520 = vrot.lane.b32.xlu0 %v280, 16
        %v521 = vpop.permute.xlu0 %520
        %522 = vrot.lane.b32.xlu0 %v282, 16
        %v523 = vpop.permute.xlu0 %522
        %524 = vrot.lane.b32.xlu0 %v285, 16
        %v525 = vpop.permute.xlu0 %524
        %526 = vrot.lane.b32.xlu0 %v287, 16
        %v527 = vpop.permute.xlu0 %526
        %528 = vrot.lane.b32.xlu0 %v290, 16
        %v529 = vpop.permute.xlu0 %528
        %530 = vrot.lane.b32.xlu0 %v292, 16
        %v531 = vpop.permute.xlu0 %530
        %532 = vrot.lane.b32.xlu0 %v339, 16
        %v533 = vpop.permute.xlu0 %532
        %534 = vrot.lane.b32.xlu0 %v341, 16
        %v535 = vpop.permute.xlu0 %534
        %552 = vrot.lane.b32.xlu0 %v301, 20
        %v553 = vpop.permute.xlu0 %552
        %554 = vrot.lane.b32.xlu0 %v303, 20
        %v555 = vpop.permute.xlu0 %554
        %556 = vrot.lane.b32.xlu0 %v306, 20
        %v557 = vpop.permute.xlu0 %556
        %558 = vrot.lane.b32.xlu0 %v308, 20
        %v559 = vpop.permute.xlu0 %558
        %560 = vrot.lane.b32.xlu0 %v311, 20
        %v561 = vpop.permute.xlu0 %560
        %562 = vrot.lane.b32.xlu0 %v313, 20
        %v563 = vpop.permute.xlu0 %562
        %564 = vrot.lane.b32.xlu0 %v316, 20
        %v565 = vpop.permute.xlu0 %564
        %566 = vrot.lane.b32.xlu0 %v318, 20
        %v567 = vpop.permute.xlu0 %566
        %568 = vrot.lane.b32.xlu0 %v321, 20
        %v569 = vpop.permute.xlu0 %568
        %570 = vrot.lane.b32.xlu0 %v323, 20
        %v571 = vpop.permute.xlu0 %570
        %572 = vrot.lane.b32.xlu0 %v326, 20
        %v573 = vpop.permute.xlu0 %572
        %574 = vrot.lane.b32.xlu0 %v328, 20
        %v575 = vpop.permute.xlu0 %574
        %576 = vrot.lane.b32.xlu0 %v331, 20
        %v577 = vpop.permute.xlu0 %576
        %578 = vrot.lane.b32.xlu0 %v333, 20
        %v579 = vpop.permute.xlu0 %578
        %580 = vrot.lane.b32.xlu0 %v344, 20
        %v581 = vpop.permute.xlu0 %580
        %582 = vrot.lane.b32.xlu0 %v346, 20
        %v583 = vpop.permute.xlu0 %582
        %600 = vrot.lane.b32.xlu0 %v204, 24
        %v601 = vpop.permute.xlu0 %600
        %602 = vrot.lane.b32.xlu0 %v205, 24
        %v603 = vpop.permute.xlu0 %602
        %604 = vrot.lane.b32.xlu0 %v207, 24
        %v605 = vpop.permute.xlu0 %604
        %606 = vrot.lane.b32.xlu0 %v208, 24
        %v607 = vpop.permute.xlu0 %606
        %608 = vrot.lane.b32.xlu0 %v210, 24
        %v609 = vpop.permute.xlu0 %608
        %610 = vrot.lane.b32.xlu0 %v211, 24
        %v611 = vpop.permute.xlu0 %610
        %612 = vrot.lane.b32.xlu0 %v213, 24
        %v613 = vpop.permute.xlu0 %612
        %614 = vrot.lane.b32.xlu0 %v214, 24
        %v615 = vpop.permute.xlu0 %614
        %616 = vrot.lane.b32.xlu0 %v216, 24
        %v617 = vpop.permute.xlu0 %616
        %618 = vrot.lane.b32.xlu0 %v217, 24
        %v619 = vpop.permute.xlu0 %618
        %620 = vrot.lane.b32.xlu0 %v219, 24
        %v621 = vpop.permute.xlu0 %620
        %622 = vrot.lane.b32.xlu0 %v220, 24
        %v623 = vpop.permute.xlu0 %622
        %624 = vrot.lane.b32.xlu0 %v222, 24
        %v625 = vpop.permute.xlu0 %624
        %626 = vrot.lane.b32.xlu0 %v223, 24
        %v627 = vpop.permute.xlu0 %626
        %628 = vrot.lane.b32.xlu0 %v225, 24
        %v629 = vpop.permute.xlu0 %628
        %630 = vrot.lane.b32.xlu0 %v226, 24
        %v631 = vpop.permute.xlu0 %630
        %648 = vrot.lane.b32.xlu0 %v265, 28
        %v649 = vpop.permute.xlu0 %648
        %650 = vrot.lane.b32.xlu0 %v267, 28
        %v651 = vpop.permute.xlu0 %650
        %652 = vrot.lane.b32.xlu0 %v270, 28
        %v653 = vpop.permute.xlu0 %652
        %654 = vrot.lane.b32.xlu0 %v272, 28
        %v655 = vpop.permute.xlu0 %654
        %656 = vrot.lane.b32.xlu0 %v275, 28
        %v657 = vpop.permute.xlu0 %656
        %658 = vrot.lane.b32.xlu0 %v277, 28
        %v659 = vpop.permute.xlu0 %658
        %660 = vrot.lane.b32.xlu0 %v280, 28
        %v661 = vpop.permute.xlu0 %660
        %662 = vrot.lane.b32.xlu0 %v282, 28
        %v663 = vpop.permute.xlu0 %662
        %664 = vrot.lane.b32.xlu0 %v285, 28
        %v665 = vpop.permute.xlu0 %664
        %666 = vrot.lane.b32.xlu0 %v287, 28
        %v667 = vpop.permute.xlu0 %666
        %668 = vrot.lane.b32.xlu0 %v290, 28
        %v669 = vpop.permute.xlu0 %668
        %670 = vrot.lane.b32.xlu0 %v292, 28
        %v671 = vpop.permute.xlu0 %670
        %672 = vrot.lane.b32.xlu0 %v339, 28
        %v673 = vpop.permute.xlu0 %672
        %674 = vrot.lane.b32.xlu0 %v341, 28
        %v675 = vpop.permute.xlu0 %674
        %676 = vrot.lane.b32.xlu0 %v352, 28
        %v677 = vpop.permute.xlu0 %676
        %678 = vrot.lane.b32.xlu0 %v354, 28
        %v679 = vpop.permute.xlu0 %678
        %696 = vrot.lane.b32.xlu0 %v306, 32
        %v697 = vpop.permute.xlu0 %696
        %698 = vrot.lane.b32.xlu0 %v308, 32
        %v699 = vpop.permute.xlu0 %698
        %700 = vrot.lane.b32.xlu0 %v311, 32
        %v701 = vpop.permute.xlu0 %700
        %702 = vrot.lane.b32.xlu0 %v313, 32
        %v703 = vpop.permute.xlu0 %702
        %704 = vrot.lane.b32.xlu0 %v316, 32
        %v705 = vpop.permute.xlu0 %704
        %706 = vrot.lane.b32.xlu0 %v318, 32
        %v707 = vpop.permute.xlu0 %706
        %708 = vrot.lane.b32.xlu0 %v321, 32
        %v709 = vpop.permute.xlu0 %708
        %710 = vrot.lane.b32.xlu0 %v323, 32
        %v711 = vpop.permute.xlu0 %710
        %712 = vrot.lane.b32.xlu0 %v326, 32
        %v713 = vpop.permute.xlu0 %712
        %714 = vrot.lane.b32.xlu0 %v328, 32
        %v715 = vpop.permute.xlu0 %714
        %716 = vrot.lane.b32.xlu0 %v331, 32
        %v717 = vpop.permute.xlu0 %716
        %718 = vrot.lane.b32.xlu0 %v333, 32
        %v719 = vpop.permute.xlu0 %718
        %720 = vrot.lane.b32.xlu0 %v344, 32
        %v721 = vpop.permute.xlu0 %720
        %722 = vrot.lane.b32.xlu0 %v346, 32
        %v723 = vpop.permute.xlu0 %722
        %724 = vrot.lane.b32.xlu0 %v357, 32
        %v725 = vpop.permute.xlu0 %724
        %726 = vrot.lane.b32.xlu0 %v359, 32
        %v727 = vpop.permute.xlu0 %726
        %vm744 = vcmask 31744
        %v745 = vsel %vm744, %v198, %v361
        %v746 = vsel %vm744, %v199, %v363
        %v747 = vsel %vm744, %v201, %v365
        %v748 = vsel %vm744, %v202, %v367
        %v749 = vsel %vm744, %v204, %v369
        %v750 = vsel %vm744, %v205, %v371
        %v751 = vsel %vm744, %v207, %v373
        %v752 = vsel %vm744, %v208, %v375
        %v753 = vsel %vm744, %v210, %v377
        %v754 = vsel %vm744, %v211, %v379
        %v755 = vsel %vm744, %v213, %v381
        %v756 = vsel %vm744, %v214, %v383
        %v757 = vsel %vm744, %v216, %v385
        %v758 = vsel %vm744, %v217, %v387
        %v759 = vsel %vm744, %v219, %v389
        %v760 = vsel %vm744, %v220, %v391
        %vm761 = vcmask 64512
        %v762 = vsel %vm761, %v745, %v409
        %v763 = vsel %vm761, %v746, %v411
        %v764 = vsel %vm761, %v747, %v413
        %v765 = vsel %vm761, %v748, %v415
        %v766 = vsel %vm761, %v749, %v417
        %v767 = vsel %vm761, %v750, %v419
        %v768 = vsel %vm761, %v751, %v421
        %v769 = vsel %vm761, %v752, %v423
        %v770 = vsel %vm761, %v753, %v425
        %v771 = vsel %vm761, %v754, %v427
        %v772 = vsel %vm761, %v755, %v429
        %v773 = vsel %vm761, %v756, %v431
        %v774 = vsel %vm761, %v757, %v433
        %v775 = vsel %vm761, %v758, %v435
        %v776 = vsel %vm761, %v759, %v437
        %v777 = vsel %vm761, %v760, %v439
        %vm778 = vcmask 97280
        %v779 = vsel %vm778, %v762, %v457
        %v780 = vsel %vm778, %v763, %v459
        %v781 = vsel %vm778, %v764, %v461
        %v782 = vsel %vm778, %v765, %v463
        %v783 = vsel %vm778, %v766, %v465
        %v784 = vsel %vm778, %v767, %v467
        %v785 = vsel %vm778, %v768, %v469
        %v786 = vsel %vm778, %v769, %v471
        %v787 = vsel %vm778, %v770, %v473
        %v788 = vsel %vm778, %v771, %v475
        %v789 = vsel %vm778, %v772, %v477
        %v790 = vsel %vm778, %v773, %v479
        %v791 = vsel %vm778, %v774, %v481
        %v792 = vsel %vm778, %v775, %v483
        %v793 = vsel %vm778, %v776, %v485
        %v794 = vsel %vm778, %v777, %v487
        %vm795 = vcmask 130048
        %v796 = vsel %vm795, %v779, %v505
        %v797 = vsel %vm795, %v780, %v507
        %v798 = vsel %vm795, %v781, %v509
        %v799 = vsel %vm795, %v782, %v511
        %v800 = vsel %vm795, %v783, %v513
        %v801 = vsel %vm795, %v784, %v515
        %v802 = vsel %vm795, %v785, %v517
        %v803 = vsel %vm795, %v786, %v519
        %v804 = vsel %vm795, %v787, %v521
        %v805 = vsel %vm795, %v788, %v523
        %v806 = vsel %vm795, %v789, %v525
        %v807 = vsel %vm795, %v790, %v527
        %v808 = vsel %vm795, %v791, %v529
        %v809 = vsel %vm795, %v792, %v531
        %v810 = vsel %vm795, %v793, %v533
        %v811 = vsel %vm795, %v794, %v535
        %vm812 = vcmask 162816
        %v813 = vsel %vm812, %v796, %v553
        %v814 = vsel %vm812, %v797, %v555
        %v815 = vsel %vm812, %v798, %v557
        %v816 = vsel %vm812, %v799, %v559
        %v817 = vsel %vm812, %v800, %v561
        %v818 = vsel %vm812, %v801, %v563
        %v819 = vsel %vm812, %v802, %v565
        %v820 = vsel %vm812, %v803, %v567
        %v821 = vsel %vm812, %v804, %v569
        %v822 = vsel %vm812, %v805, %v571
        %v823 = vsel %vm812, %v806, %v573
        %v824 = vsel %vm812, %v807, %v575
        %v825 = vsel %vm812, %v808, %v577
        %v826 = vsel %vm812, %v809, %v579
        %v827 = vsel %vm812, %v810, %v581
        %v828 = vsel %vm812, %v811, %v583
        %vm829 = vcmask 195584
        %v830 = vsel %vm829, %v813, %v601
        %v831 = vsel %vm829, %v814, %v603
        %v832 = vsel %vm829, %v815, %v605
        %v833 = vsel %vm829, %v816, %v607
        %v834 = vsel %vm829, %v817, %v609
        %v835 = vsel %vm829, %v818, %v611
        %v836 = vsel %vm829, %v819, %v613
        %v837 = vsel %vm829, %v820, %v615
        %v838 = vsel %vm829, %v821, %v617
        %v839 = vsel %vm829, %v822, %v619
        %v840 = vsel %vm829, %v823, %v621
        %v841 = vsel %vm829, %v824, %v623
        %v842 = vsel %vm829, %v825, %v625
        %v843 = vsel %vm829, %v826, %v627
        %v844 = vsel %vm829, %v827, %v629
        %v845 = vsel %vm829, %v828, %v631
        %vm846 = vcmask 228352
        %v847 = vsel %vm846, %v830, %v649
        %v848 = vsel %vm846, %v831, %v651
        %v849 = vsel %vm846, %v832, %v653
        %v850 = vsel %vm846, %v833, %v655
        %v851 = vsel %vm846, %v834, %v657
        %v852 = vsel %vm846, %v835, %v659
        %v853 = vsel %vm846, %v836, %v661
        %v854 = vsel %vm846, %v837, %v663
        %v855 = vsel %vm846, %v838, %v665
        %v856 = vsel %vm846, %v839, %v667
        %v857 = vsel %vm846, %v840, %v669
        %v858 = vsel %vm846, %v841, %v671
        %v859 = vsel %vm846, %v842, %v673
        %v860 = vsel %vm846, %v843, %v675
        %v861 = vsel %vm846, %v844, %v677
        %v862 = vsel %vm846, %v845, %v679
        %vm863 = vcmask 261120
        %v864 = vsel %vm863, %v847, %v697
        %v865 = vsel %vm863, %v848, %v699
        %v866 = vsel %vm863, %v849, %v701
        %v867 = vsel %vm863, %v850, %v703
        %v868 = vsel %vm863, %v851, %v705
        %v869 = vsel %vm863, %v852, %v707
        %v870 = vsel %vm863, %v853, %v709
        %v871 = vsel %vm863, %v854, %v711
        %v872 = vsel %vm863, %v855, %v713
        %v873 = vsel %vm863, %v856, %v715
        %v874 = vsel %vm863, %v857, %v717
        %v875 = vsel %vm863, %v858, %v719
        %v876 = vsel %vm863, %v859, %v721
        %v877 = vsel %vm863, %v860, %v723
        %v878 = vsel %vm863, %v861, %v725
        %v879 = vsel %vm863, %v862, %v727
        %v880 = vld [vmem:[%s2] sm:$0x1]
        %v881 = vld [vmem:[%s2 + $0x1] sm:$0x1]
        %v882 = vld [vmem:[%s2 + $0x2] sm:$0x1]
        %v883 = vld [vmem:[%s1] sm:$0xff]
        %v884 = vld [vmem:[%s1 + $0x8] sm:$0xff]
        %v885 = vld [vmem:[%s1 + $0x10] sm:$0xff]
        %v886 = vld [vmem:[%s1 + $0x18] sm:$0xff]
        %v887 = vld [vmem:[%s1 + $0x20] sm:$0xf]
        %vm888 = vcmask 293888
        %v890 = vsel %vm888, %v864, 0
        %v893 = vsel %vm888, %v865, 0
        %v896 = vsel %vm888, %v866, 0
        %v899 = vsel %vm888, %v867, 0
        %v902 = vsel %vm888, %v868, 0
        %v905 = vsel %vm888, %v869, 0
        %v908 = vsel %vm888, %v870, 0
        %v911 = vsel %vm888, %v871, 0
        %v914 = vsel %vm888, %v872, 0
        %v917 = vsel %vm888, %v873, 0
        %v920 = vsel %vm888, %v874, 0
        %v923 = vsel %vm888, %v875, 0
        %v926 = vsel %vm888, %v876, 0
        %v929 = vsel %vm888, %v877, 0
        %v932 = vsel %vm888, %v878, 0
        %v935 = vsel %vm888, %v879, 0
        %vm937 = vcmask 1043456
        %v939 = vsel %vm937, %v887, 0
        %941 = vmatpush.msra.mxu0 0.0
        %942 = vmatpush.msra.mxu0 0.0
        %943 = vmatpush.msra.mxu0 0.0
        %944 = vmatpush.msra.mxu0 0.0
        %945 = vmatpush.msra.mxu0 0.0
        %946 = vmatpush.msra.mxu0 0.0
        %947 = vmatpush.msra.mxu0 0.0
        %948 = vmatpush.msra.mxu0 0.0
        %949 = vmatpush.msra.mxu0 0.0
        %950 = vmatpush.msra.mxu0 0.0
        %951 = vmatpush.msra.mxu0 0.0
        %952 = vmatpush.msra.mxu0 %v939
        %953 = vmatpush.msra.mxu0 %v886
        %954 = vmatpush.msra.mxu0 %v885
        %955 = vmatpush.msra.mxu0 %v884
        %956 = vmatpush.msra.mxu0 %v883
        %957 = vmatmul.f32.gmra.mxu0 %v890
        %v958 = vpop.f32.mrf.mxu0
        %v959 = vadd.f32 0.0, %v958
        %960 = vmatmul.f32.gmra.mxu0 %v893
        %v961 = vpop.f32.mrf.mxu0
        %v962 = vadd.f32 0.0, %v961
        %963 = vmatmul.f32.gmra.mxu0 %v896
        %v964 = vpop.f32.mrf.mxu0
        %v965 = vadd.f32 0.0, %v964
        %966 = vmatmul.f32.gmra.mxu0 %v899
        %v967 = vpop.f32.mrf.mxu0
        %v968 = vadd.f32 0.0, %v967
        %969 = vmatmul.f32.gmra.mxu0 %v902
        %v970 = vpop.f32.mrf.mxu0
        %v971 = vadd.f32 0.0, %v970
        %972 = vmatmul.f32.gmra.mxu0 %v905
        %v973 = vpop.f32.mrf.mxu0
        %v974 = vadd.f32 0.0, %v973
        %975 = vmatmul.f32.gmra.mxu0 %v908
        %v976 = vpop.f32.mrf.mxu0
        %v977 = vadd.f32 0.0, %v976
        %978 = vmatmul.f32.gmra.mxu0 %v911
        %v979 = vpop.f32.mrf.mxu0
        %v980 = vadd.f32 0.0, %v979
        %981 = vmatmul.f32.gmra.mxu0 %v914
        %v982 = vpop.f32.mrf.mxu0
        %v983 = vadd.f32 0.0, %v982
        %984 = vmatmul.f32.gmra.mxu0 %v917
        %v985 = vpop.f32.mrf.mxu0
        %v986 = vadd.f32 0.0, %v985
        %987 = vmatmul.f32.gmra.mxu0 %v920
        %v988 = vpop.f32.mrf.mxu0
        %v989 = vadd.f32 0.0, %v988
        %990 = vmatmul.f32.gmra.mxu0 %v923
        %v991 = vpop.f32.mrf.mxu0
        %v992 = vadd.f32 0.0, %v991
        %993 = vmatmul.f32.gmra.mxu0 %v926
        %v994 = vpop.f32.mrf.mxu0
        %v995 = vadd.f32 0.0, %v994
        %996 = vmatmul.f32.gmra.mxu0 %v929
        %v997 = vpop.f32.mrf.mxu0
        %v998 = vadd.f32 0.0, %v997
        %999 = vmatmul.f32.gmra.mxu0 %v932
        %v1000 = vpop.f32.mrf.mxu0
        %v1001 = vadd.f32 0.0, %v1000
        %1002 = vmatmul.f32.gmra.mxu0 %v935
        %v1003 = vpop.f32.mrf.mxu0
        %v1004 = vadd.f32 0.0, %v1003
        %1005 = vdwg.mxu0
        %v1006 = vperm.slane %v880, 0
        %v1007 = vadd.f32 %v959, %v1006
        %v1008 = vadd.f32 %v962, %v1006
        %v1009 = vadd.f32 %v965, %v1006
        %v1010 = vadd.f32 %v968, %v1006
        %v1011 = vadd.f32 %v971, %v1006
        %v1012 = vadd.f32 %v974, %v1006
        %v1013 = vadd.f32 %v977, %v1006
        %v1014 = vadd.f32 %v980, %v1006
        %v1015 = vadd.f32 %v983, %v1006
        %v1016 = vadd.f32 %v986, %v1006
        %v1017 = vadd.f32 %v989, %v1006
        %v1018 = vadd.f32 %v992, %v1006
        %v1019 = vadd.f32 %v995, %v1006
        %v1020 = vadd.f32 %v998, %v1006
        %v1021 = vadd.f32 %v1001, %v1006
        %v1022 = vadd.f32 %v1004, %v1006
        %v1023 = vsel %vm761, %v1007, 0.0
        %1024 = vadd.xlane.f32.xlu0 %v1023
        %v1025 = vpop.xlane.xlu0 %1024
        %v1026 = vsel %vm761, %v1008, 0.0
        %1027 = vadd.xlane.f32.xlu0 %v1026
        %v1028 = vpop.xlane.xlu0 %1027
        %v1029 = vsel %vm761, %v1009, 0.0
        %1030 = vadd.xlane.f32.xlu0 %v1029
        %v1031 = vpop.xlane.xlu0 %1030
        %v1032 = vsel %vm761, %v1010, 0.0
        %1033 = vadd.xlane.f32.xlu0 %v1032
        %v1034 = vpop.xlane.xlu0 %1033
        %v1035 = vsel %vm761, %v1011, 0.0
        %1036 = vadd.xlane.f32.xlu0 %v1035
        %v1037 = vpop.xlane.xlu0 %1036
        %v1038 = vsel %vm761, %v1012, 0.0
        %1039 = vadd.xlane.f32.xlu0 %v1038
        %v1040 = vpop.xlane.xlu0 %1039
        %v1041 = vsel %vm761, %v1013, 0.0
        %1042 = vadd.xlane.f32.xlu0 %v1041
        %v1043 = vpop.xlane.xlu0 %1042
        %v1044 = vsel %vm761, %v1014, 0.0
        %1045 = vadd.xlane.f32.xlu0 %v1044
        %v1046 = vpop.xlane.xlu0 %1045
        %v1047 = vsel %vm761, %v1015, 0.0
        %1048 = vadd.xlane.f32.xlu0 %v1047
        %v1049 = vpop.xlane.xlu0 %1048
        %v1050 = vsel %vm761, %v1016, 0.0
        %1051 = vadd.xlane.f32.xlu0 %v1050
        %v1052 = vpop.xlane.xlu0 %1051
        %v1053 = vsel %vm761, %v1017, 0.0
        %1054 = vadd.xlane.f32.xlu0 %v1053
        %v1055 = vpop.xlane.xlu0 %1054
        %v1056 = vsel %vm761, %v1018, 0.0
        %1057 = vadd.xlane.f32.xlu0 %v1056
        %v1058 = vpop.xlane.xlu0 %1057
        %v1059 = vsel %vm761, %v1019, 0.0
        %1060 = vadd.xlane.f32.xlu0 %v1059
        %v1061 = vpop.xlane.xlu0 %1060
        %v1062 = vsel %vm761, %v1020, 0.0
        %1063 = vadd.xlane.f32.xlu0 %v1062
        %v1064 = vpop.xlane.xlu0 %1063
        %v1065 = vsel %vm761, %v1021, 0.0
        %1066 = vadd.xlane.f32.xlu0 %v1065
        %v1067 = vpop.xlane.xlu0 %1066
        %v1068 = vsel %vm761, %v1022, 0.0
        %1069 = vadd.xlane.f32.xlu0 %v1068
        %v1070 = vpop.xlane.xlu0 %1069
        %v1071 = vmul.f32 %v1007, %v1007
        %v1072 = vmul.f32 %v1008, %v1008
        %v1073 = vmul.f32 %v1009, %v1009
        %v1074 = vmul.f32 %v1010, %v1010
        %v1075 = vmul.f32 %v1011, %v1011
        %v1076 = vmul.f32 %v1012, %v1012
        %v1077 = vmul.f32 %v1013, %v1013
        %v1078 = vmul.f32 %v1014, %v1014
        %v1079 = vmul.f32 %v1015, %v1015
        %v1080 = vmul.f32 %v1016, %v1016
        %v1081 = vmul.f32 %v1017, %v1017
        %v1082 = vmul.f32 %v1018, %v1018
        %v1083 = vmul.f32 %v1019, %v1019
        %v1084 = vmul.f32 %v1020, %v1020
        %v1085 = vmul.f32 %v1021, %v1021
        %v1086 = vmul.f32 %v1022, %v1022
        %v1087 = vsel %vm761, %v1071, 0.0
        %1088 = vadd.xlane.f32.xlu0 %v1087
        %v1089 = vpop.xlane.xlu0 %1088
        %v1090 = vsel %vm761, %v1072, 0.0
        %1091 = vadd.xlane.f32.xlu0 %v1090
        %v1092 = vpop.xlane.xlu0 %1091
        %v1093 = vsel %vm761, %v1073, 0.0
        %1094 = vadd.xlane.f32.xlu0 %v1093
        %v1095 = vpop.xlane.xlu0 %1094
        %v1096 = vsel %vm761, %v1074, 0.0
        %1097 = vadd.xlane.f32.xlu0 %v1096
        %v1098 = vpop.xlane.xlu0 %1097
        %v1099 = vsel %vm761, %v1075, 0.0
        %1100 = vadd.xlane.f32.xlu0 %v1099
        %v1101 = vpop.xlane.xlu0 %1100
        %v1102 = vsel %vm761, %v1076, 0.0
        %1103 = vadd.xlane.f32.xlu0 %v1102
        %v1104 = vpop.xlane.xlu0 %1103
        %v1105 = vsel %vm761, %v1077, 0.0
        %1106 = vadd.xlane.f32.xlu0 %v1105
        %v1107 = vpop.xlane.xlu0 %1106
        %v1108 = vsel %vm761, %v1078, 0.0
        %1109 = vadd.xlane.f32.xlu0 %v1108
        %v1110 = vpop.xlane.xlu0 %1109
        %v1111 = vsel %vm761, %v1079, 0.0
        %1112 = vadd.xlane.f32.xlu0 %v1111
        %v1113 = vpop.xlane.xlu0 %1112
        %v1114 = vsel %vm761, %v1080, 0.0
        %1115 = vadd.xlane.f32.xlu0 %v1114
        %v1116 = vpop.xlane.xlu0 %1115
        %v1117 = vsel %vm761, %v1081, 0.0
        %1118 = vadd.xlane.f32.xlu0 %v1117
        %v1119 = vpop.xlane.xlu0 %1118
        %v1120 = vsel %vm761, %v1082, 0.0
        %1121 = vadd.xlane.f32.xlu0 %v1120
        %v1122 = vpop.xlane.xlu0 %1121
        %v1123 = vsel %vm761, %v1083, 0.0
        %1124 = vadd.xlane.f32.xlu0 %v1123
        %v1125 = vpop.xlane.xlu0 %1124
        %v1126 = vsel %vm761, %v1084, 0.0
        %1127 = vadd.xlane.f32.xlu0 %v1126
        %v1128 = vpop.xlane.xlu0 %1127
        %v1129 = vsel %vm761, %v1085, 0.0
        %1130 = vadd.xlane.f32.xlu0 %v1129
        %v1131 = vpop.xlane.xlu0 %1130
        %v1132 = vsel %vm761, %v1086, 0.0
        %1133 = vadd.xlane.f32.xlu0 %v1132
        %v1134 = vpop.xlane.xlu0 %1133
        %v1135 = vmul.f32 %v1025, 0.125
        %v1136 = vmul.f32 %v1028, 0.125
        %v1137 = vmul.f32 %v1031, 0.125
        %v1138 = vmul.f32 %v1034, 0.125
        %v1139 = vmul.f32 %v1037, 0.125
        %v1140 = vmul.f32 %v1040, 0.125
        %v1141 = vmul.f32 %v1043, 0.125
        %v1142 = vmul.f32 %v1046, 0.125
        %v1143 = vmul.f32 %v1049, 0.125
        %v1144 = vmul.f32 %v1052, 0.125
        %v1145 = vmul.f32 %v1055, 0.125
        %v1146 = vmul.f32 %v1058, 0.125
        %v1147 = vmul.f32 %v1061, 0.125
        %v1148 = vmul.f32 %v1064, 0.125
        %v1149 = vmul.f32 %v1067, 0.125
        %v1150 = vmul.f32 %v1070, 0.125
        %v1151 = vmul.f32 %v1089, 0.125
        %v1152 = vmul.f32 %v1092, 0.125
        %v1153 = vmul.f32 %v1095, 0.125
        %v1154 = vmul.f32 %v1098, 0.125
        %v1155 = vmul.f32 %v1101, 0.125
        %v1156 = vmul.f32 %v1104, 0.125
        %v1157 = vmul.f32 %v1107, 0.125
        %v1158 = vmul.f32 %v1110, 0.125
        %v1159 = vmul.f32 %v1113, 0.125
        %v1160 = vmul.f32 %v1116, 0.125
        %v1161 = vmul.f32 %v1119, 0.125
        %v1162 = vmul.f32 %v1122, 0.125
        %v1163 = vmul.f32 %v1125, 0.125
        %v1164 = vmul.f32 %v1128, 0.125
        %v1165 = vmul.f32 %v1131, 0.125
        %v1166 = vmul.f32 %v1134, 0.125
        %v1167 = vmul.f32 %v1135, %v1135
        %v1168 = vmul.f32 %v1136, %v1136
        %v1169 = vmul.f32 %v1137, %v1137
        %v1170 = vmul.f32 %v1138, %v1138
        %v1171 = vmul.f32 %v1139, %v1139
        %v1172 = vmul.f32 %v1140, %v1140
        %v1173 = vmul.f32 %v1141, %v1141
        %v1174 = vmul.f32 %v1142, %v1142
        %v1175 = vmul.f32 %v1143, %v1143
        %v1176 = vmul.f32 %v1144, %v1144
        %v1177 = vmul.f32 %v1145, %v1145
        %v1178 = vmul.f32 %v1146, %v1146
        %v1179 = vmul.f32 %v1147, %v1147
        %v1180 = vmul.f32 %v1148, %v1148
        %v1181 = vmul.f32 %v1149, %v1149
        %v1182 = vmul.f32 %v1150, %v1150
        %v1183 = vsub.f32 %v1151, %v1167
        %v1184 = vsub.f32 %v1152, %v1168
        %v1185 = vsub.f32 %v1153, %v1169
        %v1186 = vsub.f32 %v1154, %v1170
        %v1187 = vsub.f32 %v1155, %v1171
        %v1188 = vsub.f32 %v1156, %v1172
        %v1189 = vsub.f32 %v1157, %v1173
        %v1190 = vsub.f32 %v1158, %v1174
        %v1191 = vsub.f32 %v1159, %v1175
        %v1192 = vsub.f32 %v1160, %v1176
        %v1193 = vsub.f32 %v1161, %v1177
        %v1194 = vsub.f32 %v1162, %v1178
        %v1195 = vsub.f32 %v1163, %v1179
        %v1196 = vsub.f32 %v1164, %v1180
        %v1197 = vsub.f32 %v1165, %v1181
        %v1198 = vsub.f32 %v1166, %v1182
        %v1199 = vsub.f32 %v1007, %v1135
        %v1200 = vsub.f32 %v1008, %v1136
        %v1201 = vsub.f32 %v1009, %v1137
        %v1202 = vsub.f32 %v1010, %v1138
        %v1203 = vsub.f32 %v1011, %v1139
        %v1204 = vsub.f32 %v1012, %v1140
        %v1205 = vsub.f32 %v1013, %v1141
        %v1206 = vsub.f32 %v1014, %v1142
        %v1207 = vsub.f32 %v1015, %v1143
        %v1208 = vsub.f32 %v1016, %v1144
        %v1209 = vsub.f32 %v1017, %v1145
        %v1210 = vsub.f32 %v1018, %v1146
        %v1211 = vsub.f32 %v1019, %v1147
        %v1212 = vsub.f32 %v1020, %v1148
        %v1213 = vsub.f32 %v1021, %v1149
        %v1214 = vsub.f32 %v1022, %v1150
        %v1215 = vadd.f32 %v1183, 1e-06
        %v1216 = vadd.f32 %v1184, 1e-06
        %v1217 = vadd.f32 %v1185, 1e-06
        %v1218 = vadd.f32 %v1186, 1e-06
        %v1219 = vadd.f32 %v1187, 1e-06
        %v1220 = vadd.f32 %v1188, 1e-06
        %v1221 = vadd.f32 %v1189, 1e-06
        %v1222 = vadd.f32 %v1190, 1e-06
        %v1223 = vadd.f32 %v1191, 1e-06
        %v1224 = vadd.f32 %v1192, 1e-06
        %v1225 = vadd.f32 %v1193, 1e-06
        %v1226 = vadd.f32 %v1194, 1e-06
        %v1227 = vadd.f32 %v1195, 1e-06
        %v1228 = vadd.f32 %v1196, 1e-06
        %v1229 = vadd.f32 %v1197, 1e-06
        %v1230 = vadd.f32 %v1198, 1e-06
        %v1231 = vrsqrt.pop %v1215
        %v1232 = vmul.f32 %v1231, %v1215
        %v1233 = vmul.f32 %v1232, %v1231
        %v1234 = vmul.f32 0.5, %v1233
        %v1235 = vsub.f32 1.5, %v1234
        %v1236 = vmul.f32 %v1231, %v1235
        %vm1237 = vweird.f32 %v1215
        %vm1238 = vweird.f32 %v1231
        %vm1239 = vmor %vm1237, %vm1238
        %v1240 = vsel %vm1239, %v1231, %v1236
        %v1241 = vrsqrt.pop %v1216
        %v1242 = vmul.f32 %v1241, %v1216
        %v1243 = vmul.f32 %v1242, %v1241
        %v1244 = vmul.f32 0.5, %v1243
        %v1245 = vsub.f32 1.5, %v1244
        %v1246 = vmul.f32 %v1241, %v1245
        %vm1247 = vweird.f32 %v1216
        %vm1248 = vweird.f32 %v1241
        %vm1249 = vmor %vm1247, %vm1248
        %v1250 = vsel %vm1249, %v1241, %v1246
        %v1251 = vrsqrt.pop %v1217
        %v1252 = vmul.f32 %v1251, %v1217
        %v1253 = vmul.f32 %v1252, %v1251
        %v1254 = vmul.f32 0.5, %v1253
        %v1255 = vsub.f32 1.5, %v1254
        %v1256 = vmul.f32 %v1251, %v1255
        %vm1257 = vweird.f32 %v1217
        %vm1258 = vweird.f32 %v1251
        %vm1259 = vmor %vm1257, %vm1258
        %v1260 = vsel %vm1259, %v1251, %v1256
        %v1261 = vrsqrt.pop %v1218
        %v1262 = vmul.f32 %v1261, %v1218
        %v1263 = vmul.f32 %v1262, %v1261
        %v1264 = vmul.f32 0.5, %v1263
        %v1265 = vsub.f32 1.5, %v1264
        %v1266 = vmul.f32 %v1261, %v1265
        %vm1267 = vweird.f32 %v1218
        %vm1268 = vweird.f32 %v1261
        %vm1269 = vmor %vm1267, %vm1268
        %v1270 = vsel %vm1269, %v1261, %v1266
        %v1271 = vrsqrt.pop %v1219
        %v1272 = vmul.f32 %v1271, %v1219
        %v1273 = vmul.f32 %v1272, %v1271
        %v1274 = vmul.f32 0.5, %v1273
        %v1275 = vsub.f32 1.5, %v1274
        %v1276 = vmul.f32 %v1271, %v1275
        %vm1277 = vweird.f32 %v1219
        %vm1278 = vweird.f32 %v1271
        %vm1279 = vmor %vm1277, %vm1278
        %v1280 = vsel %vm1279, %v1271, %v1276
        %v1281 = vrsqrt.pop %v1220
        %v1282 = vmul.f32 %v1281, %v1220
        %v1283 = vmul.f32 %v1282, %v1281
        %v1284 = vmul.f32 0.5, %v1283
        %v1285 = vsub.f32 1.5, %v1284
        %v1286 = vmul.f32 %v1281, %v1285
        %vm1287 = vweird.f32 %v1220
        %vm1288 = vweird.f32 %v1281
        %vm1289 = vmor %vm1287, %vm1288
        %v1290 = vsel %vm1289, %v1281, %v1286
        %v1291 = vrsqrt.pop %v1221
        %v1292 = vmul.f32 %v1291, %v1221
        %v1293 = vmul.f32 %v1292, %v1291
        %v1294 = vmul.f32 0.5, %v1293
        %v1295 = vsub.f32 1.5, %v1294
        %v1296 = vmul.f32 %v1291, %v1295
        %vm1297 = vweird.f32 %v1221
        %vm1298 = vweird.f32 %v1291
        %vm1299 = vmor %vm1297, %vm1298
        %v1300 = vsel %vm1299, %v1291, %v1296
        %v1301 = vrsqrt.pop %v1222
        %v1302 = vmul.f32 %v1301, %v1222
        %v1303 = vmul.f32 %v1302, %v1301
        %v1304 = vmul.f32 0.5, %v1303
        %v1305 = vsub.f32 1.5, %v1304
        %v1306 = vmul.f32 %v1301, %v1305
        %vm1307 = vweird.f32 %v1222
        %vm1308 = vweird.f32 %v1301
        %vm1309 = vmor %vm1307, %vm1308
        %v1310 = vsel %vm1309, %v1301, %v1306
        %v1311 = vrsqrt.pop %v1223
        %v1312 = vmul.f32 %v1311, %v1223
        %v1313 = vmul.f32 %v1312, %v1311
        %v1314 = vmul.f32 0.5, %v1313
        %v1315 = vsub.f32 1.5, %v1314
        %v1316 = vmul.f32 %v1311, %v1315
        %vm1317 = vweird.f32 %v1223
        %vm1318 = vweird.f32 %v1311
        %vm1319 = vmor %vm1317, %vm1318
        %v1320 = vsel %vm1319, %v1311, %v1316
        %v1321 = vrsqrt.pop %v1224
        %v1322 = vmul.f32 %v1321, %v1224
        %v1323 = vmul.f32 %v1322, %v1321
        %v1324 = vmul.f32 0.5, %v1323
        %v1325 = vsub.f32 1.5, %v1324
        %v1326 = vmul.f32 %v1321, %v1325
        %vm1327 = vweird.f32 %v1224
        %vm1328 = vweird.f32 %v1321
        %vm1329 = vmor %vm1327, %vm1328
        %v1330 = vsel %vm1329, %v1321, %v1326
        %v1331 = vrsqrt.pop %v1225
        %v1332 = vmul.f32 %v1331, %v1225
        %v1333 = vmul.f32 %v1332, %v1331
        %v1334 = vmul.f32 0.5, %v1333
        %v1335 = vsub.f32 1.5, %v1334
        %v1336 = vmul.f32 %v1331, %v1335
        %vm1337 = vweird.f32 %v1225
        %vm1338 = vweird.f32 %v1331
        %vm1339 = vmor %vm1337, %vm1338
        %v1340 = vsel %vm1339, %v1331, %v1336
        %v1341 = vrsqrt.pop %v1226
        %v1342 = vmul.f32 %v1341, %v1226
        %v1343 = vmul.f32 %v1342, %v1341
        %v1344 = vmul.f32 0.5, %v1343
        %v1345 = vsub.f32 1.5, %v1344
        %v1346 = vmul.f32 %v1341, %v1345
        %vm1347 = vweird.f32 %v1226
        %vm1348 = vweird.f32 %v1341
        %vm1349 = vmor %vm1347, %vm1348
        %v1350 = vsel %vm1349, %v1341, %v1346
        %v1351 = vrsqrt.pop %v1227
        %v1352 = vmul.f32 %v1351, %v1227
        %v1353 = vmul.f32 %v1352, %v1351
        %v1354 = vmul.f32 0.5, %v1353
        %v1355 = vsub.f32 1.5, %v1354
        %v1356 = vmul.f32 %v1351, %v1355
        %vm1357 = vweird.f32 %v1227
        %vm1358 = vweird.f32 %v1351
        %vm1359 = vmor %vm1357, %vm1358
        %v1360 = vsel %vm1359, %v1351, %v1356
        %v1361 = vrsqrt.pop %v1228
        %v1362 = vmul.f32 %v1361, %v1228
        %v1363 = vmul.f32 %v1362, %v1361
        %v1364 = vmul.f32 0.5, %v1363
        %v1365 = vsub.f32 1.5, %v1364
        %v1366 = vmul.f32 %v1361, %v1365
        %vm1367 = vweird.f32 %v1228
        %vm1368 = vweird.f32 %v1361
        %vm1369 = vmor %vm1367, %vm1368
        %v1370 = vsel %vm1369, %v1361, %v1366
        %v1371 = vrsqrt.pop %v1229
        %v1372 = vmul.f32 %v1371, %v1229
        %v1373 = vmul.f32 %v1372, %v1371
        %v1374 = vmul.f32 0.5, %v1373
        %v1375 = vsub.f32 1.5, %v1374
        %v1376 = vmul.f32 %v1371, %v1375
        %vm1377 = vweird.f32 %v1229
        %vm1378 = vweird.f32 %v1371
        %vm1379 = vmor %vm1377, %vm1378
        %v1380 = vsel %vm1379, %v1371, %v1376
        %v1381 = vrsqrt.pop %v1230
        %v1382 = vmul.f32 %v1381, %v1230
        %v1383 = vmul.f32 %v1382, %v1381
        %v1384 = vmul.f32 0.5, %v1383
        %v1385 = vsub.f32 1.5, %v1384
        %v1386 = vmul.f32 %v1381, %v1385
        %vm1387 = vweird.f32 %v1230
        %vm1388 = vweird.f32 %v1381
        %vm1389 = vmor %vm1387, %vm1388
        %v1390 = vsel %vm1389, %v1381, %v1386
        %v1391 = vmul.f32 %v1199, %v1240
        %v1392 = vmul.f32 %v1200, %v1250
        %v1393 = vmul.f32 %v1201, %v1260
        %v1394 = vmul.f32 %v1202, %v1270
        %v1395 = vmul.f32 %v1203, %v1280
        %v1396 = vmul.f32 %v1204, %v1290
        %v1397 = vmul.f32 %v1205, %v1300
        %v1398 = vmul.f32 %v1206, %v1310
        %v1399 = vmul.f32 %v1207, %v1320
        %v1400 = vmul.f32 %v1208, %v1330
        %v1401 = vmul.f32 %v1209, %v1340
        %v1402 = vmul.f32 %v1210, %v1350
        %v1403 = vmul.f32 %v1211, %v1360
        %v1404 = vmul.f32 %v1212, %v1370
        %v1405 = vmul.f32 %v1213, %v1380
        %v1406 = vmul.f32 %v1214, %v1390
        %v1407 = vperm.slane %v881, 0
        %v1408 = vmul.f32 %v1391, %v1407
        %v1409 = vmul.f32 %v1392, %v1407
        %v1410 = vmul.f32 %v1393, %v1407
        %v1411 = vmul.f32 %v1394, %v1407
        %v1412 = vmul.f32 %v1395, %v1407
        %v1413 = vmul.f32 %v1396, %v1407
        %v1414 = vmul.f32 %v1397, %v1407
        %v1415 = vmul.f32 %v1398, %v1407
        %v1416 = vmul.f32 %v1399, %v1407
        %v1417 = vmul.f32 %v1400, %v1407
        %v1418 = vmul.f32 %v1401, %v1407
        %v1419 = vmul.f32 %v1402, %v1407
        %v1420 = vmul.f32 %v1403, %v1407
        %v1421 = vmul.f32 %v1404, %v1407
        %v1422 = vmul.f32 %v1405, %v1407
        %v1423 = vmul.f32 %v1406, %v1407
        %v1424 = vperm.slane %v882, 0
        %v1425 = vadd.f32 %v1408, %v1424
        %v1426 = vadd.f32 %v1409, %v1424
        %v1427 = vadd.f32 %v1410, %v1424
        %v1428 = vadd.f32 %v1411, %v1424
        %v1429 = vadd.f32 %v1412, %v1424
        %v1430 = vadd.f32 %v1413, %v1424
        %v1431 = vadd.f32 %v1414, %v1424
        %v1432 = vadd.f32 %v1415, %v1424
        %v1433 = vadd.f32 %v1416, %v1424
        %v1434 = vadd.f32 %v1417, %v1424
        %v1435 = vadd.f32 %v1418, %v1424
        %v1436 = vadd.f32 %v1419, %v1424
        %v1437 = vadd.f32 %v1420, %v1424
        %v1438 = vadd.f32 %v1421, %v1424
        %v1439 = vadd.f32 %v1422, %v1424
        %v1440 = vadd.f32 %v1423, %v1424
        %v1441 = vmul.f32 %v1425, 0.5
        %v1442 = vmul.f32 %v1426, 0.5
        %v1443 = vmul.f32 %v1427, 0.5
        %v1444 = vmul.f32 %v1428, 0.5
        %v1445 = vmul.f32 %v1429, 0.5
        %v1446 = vmul.f32 %v1430, 0.5
        %v1447 = vmul.f32 %v1431, 0.5
        %v1448 = vmul.f32 %v1432, 0.5
        %v1449 = vmul.f32 %v1433, 0.5
        %v1450 = vmul.f32 %v1434, 0.5
        %v1451 = vmul.f32 %v1435, 0.5
        %v1452 = vmul.f32 %v1436, 0.5
        %v1453 = vmul.f32 %v1437, 0.5
        %v1454 = vmul.f32 %v1438, 0.5
        %v1455 = vmul.f32 %v1439, 0.5
        %v1456 = vmul.f32 %v1440, 0.5
        %v1457 = vmul.f32 %v1425, 0.70710677
        %v1458 = vmul.f32 %v1426, 0.70710677
        %v1459 = vmul.f32 %v1427, 0.70710677
        %v1460 = vmul.f32 %v1428, 0.70710677
        %v1461 = vmul.f32 %v1429, 0.70710677
        %v1462 = vmul.f32 %v1430, 0.70710677
        %v1463 = vmul.f32 %v1431, 0.70710677
        %v1464 = vmul.f32 %v1432, 0.70710677
        %v1465 = vmul.f32 %v1433, 0.70710677
        %v1466 = vmul.f32 %v1434, 0.70710677
        %v1467 = vmul.f32 %v1435, 0.70710677
        %v1468 = vmul.f32 %v1436, 0.70710677
        %v1469 = vmul.f32 %v1437, 0.70710677
        %v1470 = vmul.f32 %v1438, 0.70710677
        %v1471 = vmul.f32 %v1439, 0.70710677
        %v1472 = vmul.f32 %v1440, 0.70710677
        %v1473 = vmul.f32 %v1457, %v1457
        %v1474 = vmin.f32 16.0, %v1473
        %v1475 = vmul.f32 %v1474, 2.1237322e-06
        %v1476 = vadd.f32 %v1475, 0.00028619796
        %v1477 = vmul.f32 %v1474, %v1476
        %v1478 = vadd.f32 %v1477, 0.0036580483
        %v1479 = vmul.f32 %v1474, %v1478
        %v1480 = vadd.f32 %v1479, 0.05243302
        %v1481 = vmul.f32 %v1474, %v1480
        %v1482 = vadd.f32 %v1481, 0.18741608
        %v1483 = vmul.f32 %v1474, %v1482
        %v1484 = vadd.f32 %v1483, 1.1283791
        %v1485 = vmul.f32 %v1457, %v1484
        %v1486 = vmul.f32 %v1474, 3.8918573e-05
        %v1487 = vadd.f32 %v1486, 0.001143296
        %v1488 = vmul.f32 %v1474, %v1487
        %v1489 = vadd.f32 %v1488, 0.014752088
        %v1490 = vmul.f32 %v1474, %v1489
        %v1491 = vadd.f32 %v1490, 0.112945676
        %v1492 = vmul.f32 %v1474, %v1491
        %v1493 = vadd.f32 %v1492, 0.4994258
        %v1494 = vmul.f32 %v1474, %v1493
        %v1495 = vadd.f32 %v1494, 1.0
        %v1496 = vrcp.pop %v1495
        %v1497 = vmul.f32 %v1495, %v1496
        %v1498 = vsub.f32 1.0, %v1497
        %v1499 = vmul.f32 %v1496, %v1498
        %v1500 = vadd.f32 %v1496, %v1499
        %vm1501 = vweird.f32 %v1495
        %vm1502 = vweird.f32 %v1496
        %vm1503 = vmor %vm1501, %vm1502
        %v1504 = vsel %vm1503, %v1496, %v1500
        %v1505 = vand.u32 2147483647, %v1495
        %vm1506 = vcmp.eq.f32.partialorder %v1505, 8.507059e+37
        %v1507 = vand.u32 %v1495, 2147483648
        %v1508 = vor.u32 1.1754944e-38, %v1507
        %v1509 = vsel %vm1506, %v1508, %v1504
        %v1510 = vmul.f32 %v1485, %v1509
        %v1511 = vmin.f32 %v1510, 1.0
        %v1512 = vmax.f32 %v1511, -1.0
        %v1513 = vmul.f32 %v1458, %v1458
        %v1514 = vmin.f32 16.0, %v1513
        %v1515 = vmul.f32 %v1514, 2.1237322e-06
        %v1516 = vadd.f32 %v1515, 0.00028619796
        %v1517 = vmul.f32 %v1514, %v1516
        %v1518 = vadd.f32 %v1517, 0.0036580483
        %v1519 = vmul.f32 %v1514, %v1518
        %v1520 = vadd.f32 %v1519, 0.05243302
        %v1521 = vmul.f32 %v1514, %v1520
        %v1522 = vadd.f32 %v1521, 0.18741608
        %v1523 = vmul.f32 %v1514, %v1522
        %v1524 = vadd.f32 %v1523, 1.1283791
        %v1525 = vmul.f32 %v1458, %v1524
        %v1526 = vmul.f32 %v1514, 3.8918573e-05
        %v1527 = vadd.f32 %v1526, 0.001143296
        %v1528 = vmul.f32 %v1514, %v1527
        %v1529 = vadd.f32 %v1528, 0.014752088
        %v1530 = vmul.f32 %v1514, %v1529
        %v1531 = vadd.f32 %v1530, 0.112945676
        %v1532 = vmul.f32 %v1514, %v1531
        %v1533 = vadd.f32 %v1532, 0.4994258
        %v1534 = vmul.f32 %v1514, %v1533
        %v1535 = vadd.f32 %v1534, 1.0
        %v1536 = vrcp.pop %v1535
        %v1537 = vmul.f32 %v1535, %v1536
        %v1538 = vsub.f32 1.0, %v1537
        %v1539 = vmul.f32 %v1536, %v1538
        %v1540 = vadd.f32 %v1536, %v1539
        %vm1541 = vweird.f32 %v1535
        %vm1542 = vweird.f32 %v1536
        %vm1543 = vmor %vm1541, %vm1542
        %v1544 = vsel %vm1543, %v1536, %v1540
        %v1545 = vand.u32 2147483647, %v1535
        %vm1546 = vcmp.eq.f32.partialorder %v1545, 8.507059e+37
        %v1547 = vand.u32 %v1535, 2147483648
        %v1548 = vor.u32 1.1754944e-38, %v1547
        %v1549 = vsel %vm1546, %v1548, %v1544
        %v1550 = vmul.f32 %v1525, %v1549
        %v1551 = vmin.f32 %v1550, 1.0
        %v1552 = vmax.f32 %v1551, -1.0
        %v1553 = vmul.f32 %v1459, %v1459
        %v1554 = vmin.f32 16.0, %v1553
        %v1555 = vmul.f32 %v1554, 2.1237322e-06
        %v1556 = vadd.f32 %v1555, 0.00028619796
        %v1557 = vmul.f32 %v1554, %v1556
        %v1558 = vadd.f32 %v1557, 0.0036580483
        %v1559 = vmul.f32 %v1554, %v1558
        %v1560 = vadd.f32 %v1559, 0.05243302
        %v1561 = vmul.f32 %v1554, %v1560
        %v1562 = vadd.f32 %v1561, 0.18741608
        %v1563 = vmul.f32 %v1554, %v1562
        %v1564 = vadd.f32 %v1563, 1.1283791
        %v1565 = vmul.f32 %v1459, %v1564
        %v1566 = vmul.f32 %v1554, 3.8918573e-05
        %v1567 = vadd.f32 %v1566, 0.001143296
        %v1568 = vmul.f32 %v1554, %v1567
        %v1569 = vadd.f32 %v1568, 0.014752088
        %v1570 = vmul.f32 %v1554, %v1569
        %v1571 = vadd.f32 %v1570, 0.112945676
        %v1572 = vmul.f32 %v1554, %v1571
        %v1573 = vadd.f32 %v1572, 0.4994258
        %v1574 = vmul.f32 %v1554, %v1573
        %v1575 = vadd.f32 %v1574, 1.0
        %v1576 = vrcp.pop %v1575
        %v1577 = vmul.f32 %v1575, %v1576
        %v1578 = vsub.f32 1.0, %v1577
        %v1579 = vmul.f32 %v1576, %v1578
        %v1580 = vadd.f32 %v1576, %v1579
        %vm1581 = vweird.f32 %v1575
        %vm1582 = vweird.f32 %v1576
        %vm1583 = vmor %vm1581, %vm1582
        %v1584 = vsel %vm1583, %v1576, %v1580
        %v1585 = vand.u32 2147483647, %v1575
        %vm1586 = vcmp.eq.f32.partialorder %v1585, 8.507059e+37
        %v1587 = vand.u32 %v1575, 2147483648
        %v1588 = vor.u32 1.1754944e-38, %v1587
        %v1589 = vsel %vm1586, %v1588, %v1584
        %v1590 = vmul.f32 %v1565, %v1589
        %v1591 = vmin.f32 %v1590, 1.0
        %v1592 = vmax.f32 %v1591, -1.0
        %v1593 = vmul.f32 %v1460, %v1460
        %v1594 = vmin.f32 16.0, %v1593
        %v1595 = vmul.f32 %v1594, 2.1237322e-06
        %v1596 = vadd.f32 %v1595, 0.00028619796
        %v1597 = vmul.f32 %v1594, %v1596
        %v1598 = vadd.f32 %v1597, 0.0036580483
        %v1599 = vmul.f32 %v1594, %v1598
        %v1600 = vadd.f32 %v1599, 0.05243302
        %v1601 = vmul.f32 %v1594, %v1600
        %v1602 = vadd.f32 %v1601, 0.18741608
        %v1603 = vmul.f32 %v1594, %v1602
        %v1604 = vadd.f32 %v1603, 1.1283791
        %v1605 = vmul.f32 %v1460, %v1604
        %v1606 = vmul.f32 %v1594, 3.8918573e-05
        %v1607 = vadd.f32 %v1606, 0.001143296
        %v1608 = vmul.f32 %v1594, %v1607
        %v1609 = vadd.f32 %v1608, 0.014752088
        %v1610 = vmul.f32 %v1594, %v1609
        %v1611 = vadd.f32 %v1610, 0.112945676
        %v1612 = vmul.f32 %v1594, %v1611
        %v1613 = vadd.f32 %v1612, 0.4994258
        %v1614 = vmul.f32 %v1594, %v1613
        %v1615 = vadd.f32 %v1614, 1.0
        %v1616 = vrcp.pop %v1615
        %v1617 = vmul.f32 %v1615, %v1616
        %v1618 = vsub.f32 1.0, %v1617
        %v1619 = vmul.f32 %v1616, %v1618
        %v1620 = vadd.f32 %v1616, %v1619
        %vm1621 = vweird.f32 %v1615
        %vm1622 = vweird.f32 %v1616
        %vm1623 = vmor %vm1621, %vm1622
        %v1624 = vsel %vm1623, %v1616, %v1620
        %v1625 = vand.u32 2147483647, %v1615
        %vm1626 = vcmp.eq.f32.partialorder %v1625, 8.507059e+37
        %v1627 = vand.u32 %v1615, 2147483648
        %v1628 = vor.u32 1.1754944e-38, %v1627
        %v1629 = vsel %vm1626, %v1628, %v1624
        %v1630 = vmul.f32 %v1605, %v1629
        %v1631 = vmin.f32 %v1630, 1.0
        %v1632 = vmax.f32 %v1631, -1.0
        %v1633 = vmul.f32 %v1461, %v1461
        %v1634 = vmin.f32 16.0, %v1633
        %v1635 = vmul.f32 %v1634, 2.1237322e-06
        %v1636 = vadd.f32 %v1635, 0.00028619796
        %v1637 = vmul.f32 %v1634, %v1636
        %v1638 = vadd.f32 %v1637, 0.0036580483
        %v1639 = vmul.f32 %v1634, %v1638
        %v1640 = vadd.f32 %v1639, 0.05243302
        %v1641 = vmul.f32 %v1634, %v1640
        %v1642 = vadd.f32 %v1641, 0.18741608
        %v1643 = vmul.f32 %v1634, %v1642
        %v1644 = vadd.f32 %v1643, 1.1283791
        %v1645 = vmul.f32 %v1461, %v1644
        %v1646 = vmul.f32 %v1634, 3.8918573e-05
        %v1647 = vadd.f32 %v1646, 0.001143296
        %v1648 = vmul.f32 %v1634, %v1647
        %v1649 = vadd.f32 %v1648, 0.014752088
        %v1650 = vmul.f32 %v1634, %v1649
        %v1651 = vadd.f32 %v1650, 0.112945676
        %v1652 = vmul.f32 %v1634, %v1651
        %v1653 = vadd.f32 %v1652, 0.4994258
        %v1654 = vmul.f32 %v1634, %v1653
        %v1655 = vadd.f32 %v1654, 1.0
        %v1656 = vrcp.pop %v1655
        %v1657 = vmul.f32 %v1655, %v1656
        %v1658 = vsub.f32 1.0, %v1657
        %v1659 = vmul.f32 %v1656, %v1658
        %v1660 = vadd.f32 %v1656, %v1659
        %vm1661 = vweird.f32 %v1655
        %vm1662 = vweird.f32 %v1656
        %vm1663 = vmor %vm1661, %vm1662
        %v1664 = vsel %vm1663, %v1656, %v1660
        %v1665 = vand.u32 2147483647, %v1655
        %vm1666 = vcmp.eq.f32.partialorder %v1665, 8.507059e+37
        %v1667 = vand.u32 %v1655, 2147483648
        %v1668 = vor.u32 1.1754944e-38, %v1667
        %v1669 = vsel %vm1666, %v1668, %v1664
        %v1670 = vmul.f32 %v1645, %v1669
        %v1671 = vmin.f32 %v1670, 1.0
        %v1672 = vmax.f32 %v1671, -1.0
        %v1673 = vmul.f32 %v1462, %v1462
        %v1674 = vmin.f32 16.0, %v1673
        %v1675 = vmul.f32 %v1674, 2.1237322e-06
        %v1676 = vadd.f32 %v1675, 0.00028619796
        %v1677 = vmul.f32 %v1674, %v1676
        %v1678 = vadd.f32 %v1677, 0.0036580483
        %v1679 = vmul.f32 %v1674, %v1678
        %v1680 = vadd.f32 %v1679, 0.05243302
        %v1681 = vmul.f32 %v1674, %v1680
        %v1682 = vadd.f32 %v1681, 0.18741608
        %v1683 = vmul.f32 %v1674, %v1682
        %v1684 = vadd.f32 %v1683, 1.1283791
        %v1685 = vmul.f32 %v1462, %v1684
        %v1686 = vmul.f32 %v1674, 3.8918573e-05
        %v1687 = vadd.f32 %v1686, 0.001143296
        %v1688 = vmul.f32 %v1674, %v1687
        %v1689 = vadd.f32 %v1688, 0.014752088
        %v1690 = vmul.f32 %v1674, %v1689
        %v1691 = vadd.f32 %v1690, 0.112945676
        %v1692 = vmul.f32 %v1674, %v1691
        %v1693 = vadd.f32 %v1692, 0.4994258
        %v1694 = vmul.f32 %v1674, %v1693
        %v1695 = vadd.f32 %v1694, 1.0
        %v1696 = vrcp.pop %v1695
        %v1697 = vmul.f32 %v1695, %v1696
        %v1698 = vsub.f32 1.0, %v1697
        %v1699 = vmul.f32 %v1696, %v1698
        %v1700 = vadd.f32 %v1696, %v1699
        %vm1701 = vweird.f32 %v1695
        %vm1702 = vweird.f32 %v1696
        %vm1703 = vmor %vm1701, %vm1702
        %v1704 = vsel %vm1703, %v1696, %v1700
        %v1705 = vand.u32 2147483647, %v1695
        %vm1706 = vcmp.eq.f32.partialorder %v1705, 8.507059e+37
        %v1707 = vand.u32 %v1695, 2147483648
        %v1708 = vor.u32 1.1754944e-38, %v1707
        %v1709 = vsel %vm1706, %v1708, %v1704
        %v1710 = vmul.f32 %v1685, %v1709
        %v1711 = vmin.f32 %v1710, 1.0
        %v1712 = vmax.f32 %v1711, -1.0
        %v1713 = vmul.f32 %v1463, %v1463
        %v1714 = vmin.f32 16.0, %v1713
        %v1715 = vmul.f32 %v1714, 2.1237322e-06
        %v1716 = vadd.f32 %v1715, 0.00028619796
        %v1717 = vmul.f32 %v1714, %v1716
        %v1718 = vadd.f32 %v1717, 0.0036580483
        %v1719 = vmul.f32 %v1714, %v1718
        %v1720 = vadd.f32 %v1719, 0.05243302
        %v1721 = vmul.f32 %v1714, %v1720
        %v1722 = vadd.f32 %v1721, 0.18741608
        %v1723 = vmul.f32 %v1714, %v1722
        %v1724 = vadd.f32 %v1723, 1.1283791
        %v1725 = vmul.f32 %v1463, %v1724
        %v1726 = vmul.f32 %v1714, 3.8918573e-05
        %v1727 = vadd.f32 %v1726, 0.001143296
        %v1728 = vmul.f32 %v1714, %v1727
        %v1729 = vadd.f32 %v1728, 0.014752088
        %v1730 = vmul.f32 %v1714, %v1729
        %v1731 = vadd.f32 %v1730, 0.112945676
        %v1732 = vmul.f32 %v1714, %v1731
        %v1733 = vadd.f32 %v1732, 0.4994258
        %v1734 = vmul.f32 %v1714, %v1733
        %v1735 = vadd.f32 %v1734, 1.0
        %v1736 = vrcp.pop %v1735
        %v1737 = vmul.f32 %v1735, %v1736
        %v1738 = vsub.f32 1.0, %v1737
        %v1739 = vmul.f32 %v1736, %v1738
        %v1740 = vadd.f32 %v1736, %v1739
        %vm1741 = vweird.f32 %v1735
        %vm1742 = vweird.f32 %v1736
        %vm1743 = vmor %vm1741, %vm1742
        %v1744 = vsel %vm1743, %v1736, %v1740
        %v1745 = vand.u32 2147483647, %v1735
        %vm1746 = vcmp.eq.f32.partialorder %v1745, 8.507059e+37
        %v1747 = vand.u32 %v1735, 2147483648
        %v1748 = vor.u32 1.1754944e-38, %v1747
        %v1749 = vsel %vm1746, %v1748, %v1744
        %v1750 = vmul.f32 %v1725, %v1749
        %v1751 = vmin.f32 %v1750, 1.0
        %v1752 = vmax.f32 %v1751, -1.0
        %v1753 = vmul.f32 %v1464, %v1464
        %v1754 = vmin.f32 16.0, %v1753
        %v1755 = vmul.f32 %v1754, 2.1237322e-06
        %v1756 = vadd.f32 %v1755, 0.00028619796
        %v1757 = vmul.f32 %v1754, %v1756
        %v1758 = vadd.f32 %v1757, 0.0036580483
        %v1759 = vmul.f32 %v1754, %v1758
        %v1760 = vadd.f32 %v1759, 0.05243302
        %v1761 = vmul.f32 %v1754, %v1760
        %v1762 = vadd.f32 %v1761, 0.18741608
        %v1763 = vmul.f32 %v1754, %v1762
        %v1764 = vadd.f32 %v1763, 1.1283791
        %v1765 = vmul.f32 %v1464, %v1764
        %v1766 = vmul.f32 %v1754, 3.8918573e-05
        %v1767 = vadd.f32 %v1766, 0.001143296
        %v1768 = vmul.f32 %v1754, %v1767
        %v1769 = vadd.f32 %v1768, 0.014752088
        %v1770 = vmul.f32 %v1754, %v1769
        %v1771 = vadd.f32 %v1770, 0.112945676
        %v1772 = vmul.f32 %v1754, %v1771
        %v1773 = vadd.f32 %v1772, 0.4994258
        %v1774 = vmul.f32 %v1754, %v1773
        %v1775 = vadd.f32 %v1774, 1.0
        %v1776 = vrcp.pop %v1775
        %v1777 = vmul.f32 %v1775, %v1776
        %v1778 = vsub.f32 1.0, %v1777
        %v1779 = vmul.f32 %v1776, %v1778
        %v1780 = vadd.f32 %v1776, %v1779
        %vm1781 = vweird.f32 %v1775
        %vm1782 = vweird.f32 %v1776
        %vm1783 = vmor %vm1781, %vm1782
        %v1784 = vsel %vm1783, %v1776, %v1780
        %v1785 = vand.u32 2147483647, %v1775
        %vm1786 = vcmp.eq.f32.partialorder %v1785, 8.507059e+37
        %v1787 = vand.u32 %v1775, 2147483648
        %v1788 = vor.u32 1.1754944e-38, %v1787
        %v1789 = vsel %vm1786, %v1788, %v1784
        %v1790 = vmul.f32 %v1765, %v1789
        %v1791 = vmin.f32 %v1790, 1.0
        %v1792 = vmax.f32 %v1791, -1.0
        %v1793 = vmul.f32 %v1465, %v1465
        %v1794 = vmin.f32 16.0, %v1793
        %v1795 = vmul.f32 %v1794, 2.1237322e-06
        %v1796 = vadd.f32 %v1795, 0.00028619796
        %v1797 = vmul.f32 %v1794, %v1796
        %v1798 = vadd.f32 %v1797, 0.0036580483
        %v1799 = vmul.f32 %v1794, %v1798
        %v1800 = vadd.f32 %v1799, 0.05243302
        %v1801 = vmul.f32 %v1794, %v1800
        %v1802 = vadd.f32 %v1801, 0.18741608
        %v1803 = vmul.f32 %v1794, %v1802
        %v1804 = vadd.f32 %v1803, 1.1283791
        %v1805 = vmul.f32 %v1465, %v1804
        %v1806 = vmul.f32 %v1794, 3.8918573e-05
        %v1807 = vadd.f32 %v1806, 0.001143296
        %v1808 = vmul.f32 %v1794, %v1807
        %v1809 = vadd.f32 %v1808, 0.014752088
        %v1810 = vmul.f32 %v1794, %v1809
        %v1811 = vadd.f32 %v1810, 0.112945676
        %v1812 = vmul.f32 %v1794, %v1811
        %v1813 = vadd.f32 %v1812, 0.4994258
        %v1814 = vmul.f32 %v1794, %v1813
        %v1815 = vadd.f32 %v1814, 1.0
        %v1816 = vrcp.pop %v1815
        %v1817 = vmul.f32 %v1815, %v1816
        %v1818 = vsub.f32 1.0, %v1817
        %v1819 = vmul.f32 %v1816, %v1818
        %v1820 = vadd.f32 %v1816, %v1819
        %vm1821 = vweird.f32 %v1815
        %vm1822 = vweird.f32 %v1816
        %vm1823 = vmor %vm1821, %vm1822
        %v1824 = vsel %vm1823, %v1816, %v1820
        %v1825 = vand.u32 2147483647, %v1815
        %vm1826 = vcmp.eq.f32.partialorder %v1825, 8.507059e+37
        %v1827 = vand.u32 %v1815, 2147483648
        %v1828 = vor.u32 1.1754944e-38, %v1827
        %v1829 = vsel %vm1826, %v1828, %v1824
        %v1830 = vmul.f32 %v1805, %v1829
        %v1831 = vmin.f32 %v1830, 1.0
        %v1832 = vmax.f32 %v1831, -1.0
        %v1833 = vmul.f32 %v1466, %v1466
        %v1834 = vmin.f32 16.0, %v1833
        %v1835 = vmul.f32 %v1834, 2.1237322e-06
        %v1836 = vadd.f32 %v1835, 0.00028619796
        %v1837 = vmul.f32 %v1834, %v1836
        %v1838 = vadd.f32 %v1837, 0.0036580483
        %v1839 = vmul.f32 %v1834, %v1838
        %v1840 = vadd.f32 %v1839, 0.05243302
        %v1841 = vmul.f32 %v1834, %v1840
        %v1842 = vadd.f32 %v1841, 0.18741608
        %v1843 = vmul.f32 %v1834, %v1842
        %v1844 = vadd.f32 %v1843, 1.1283791
        %v1845 = vmul.f32 %v1466, %v1844
        %v1846 = vmul.f32 %v1834, 3.8918573e-05
        %v1847 = vadd.f32 %v1846, 0.001143296
        %v1848 = vmul.f32 %v1834, %v1847
        %v1849 = vadd.f32 %v1848, 0.014752088
        %v1850 = vmul.f32 %v1834, %v1849
        %v1851 = vadd.f32 %v1850, 0.112945676
        %v1852 = vmul.f32 %v1834, %v1851
        %v1853 = vadd.f32 %v1852, 0.4994258
        %v1854 = vmul.f32 %v1834, %v1853
        %v1855 = vadd.f32 %v1854, 1.0
        %v1856 = vrcp.pop %v1855
        %v1857 = vmul.f32 %v1855, %v1856
        %v1858 = vsub.f32 1.0, %v1857
        %v1859 = vmul.f32 %v1856, %v1858
        %v1860 = vadd.f32 %v1856, %v1859
        %vm1861 = vweird.f32 %v1855
        %vm1862 = vweird.f32 %v1856
        %vm1863 = vmor %vm1861, %vm1862
        %v1864 = vsel %vm1863, %v1856, %v1860
        %v1865 = vand.u32 2147483647, %v1855
        %vm1866 = vcmp.eq.f32.partialorder %v1865, 8.507059e+37
        %v1867 = vand.u32 %v1855, 2147483648
        %v1868 = vor.u32 1.1754944e-38, %v1867
        %v1869 = vsel %vm1866, %v1868, %v1864
        %v1870 = vmul.f32 %v1845, %v1869
        %v1871 = vmin.f32 %v1870, 1.0
        %v1872 = vmax.f32 %v1871, -1.0
        %v1873 = vmul.f32 %v1467, %v1467
        %v1874 = vmin.f32 16.0, %v1873
        %v1875 = vmul.f32 %v1874, 2.1237322e-06
        %v1876 = vadd.f32 %v1875, 0.00028619796
        %v1877 = vmul.f32 %v1874, %v1876
        %v1878 = vadd.f32 %v1877, 0.0036580483
        %v1879 = vmul.f32 %v1874, %v1878
        %v1880 = vadd.f32 %v1879, 0.05243302
        %v1881 = vmul.f32 %v1874, %v1880
        %v1882 = vadd.f32 %v1881, 0.18741608
        %v1883 = vmul.f32 %v1874, %v1882
        %v1884 = vadd.f32 %v1883, 1.1283791
        %v1885 = vmul.f32 %v1467, %v1884
        %v1886 = vmul.f32 %v1874, 3.8918573e-05
        %v1887 = vadd.f32 %v1886, 0.001143296
        %v1888 = vmul.f32 %v1874, %v1887
        %v1889 = vadd.f32 %v1888, 0.014752088
        %v1890 = vmul.f32 %v1874, %v1889
        %v1891 = vadd.f32 %v1890, 0.112945676
        %v1892 = vmul.f32 %v1874, %v1891
        %v1893 = vadd.f32 %v1892, 0.4994258
        %v1894 = vmul.f32 %v1874, %v1893
        %v1895 = vadd.f32 %v1894, 1.0
        %v1896 = vrcp.pop %v1895
        %v1897 = vmul.f32 %v1895, %v1896
        %v1898 = vsub.f32 1.0, %v1897
        %v1899 = vmul.f32 %v1896, %v1898
        %v1900 = vadd.f32 %v1896, %v1899
        %vm1901 = vweird.f32 %v1895
        %vm1902 = vweird.f32 %v1896
        %vm1903 = vmor %vm1901, %vm1902
        %v1904 = vsel %vm1903, %v1896, %v1900
        %v1905 = vand.u32 2147483647, %v1895
        %vm1906 = vcmp.eq.f32.partialorder %v1905, 8.507059e+37
        %v1907 = vand.u32 %v1895, 2147483648
        %v1908 = vor.u32 1.1754944e-38, %v1907
        %v1909 = vsel %vm1906, %v1908, %v1904
        %v1910 = vmul.f32 %v1885, %v1909
        %v1911 = vmin.f32 %v1910, 1.0
        %v1912 = vmax.f32 %v1911, -1.0
        %v1913 = vmul.f32 %v1468, %v1468
        %v1914 = vmin.f32 16.0, %v1913
        %v1915 = vmul.f32 %v1914, 2.1237322e-06
        %v1916 = vadd.f32 %v1915, 0.00028619796
        %v1917 = vmul.f32 %v1914, %v1916
        %v1918 = vadd.f32 %v1917, 0.0036580483
        %v1919 = vmul.f32 %v1914, %v1918
        %v1920 = vadd.f32 %v1919, 0.05243302
        %v1921 = vmul.f32 %v1914, %v1920
        %v1922 = vadd.f32 %v1921, 0.18741608
        %v1923 = vmul.f32 %v1914, %v1922
        %v1924 = vadd.f32 %v1923, 1.1283791
        %v1925 = vmul.f32 %v1468, %v1924
        %v1926 = vmul.f32 %v1914, 3.8918573e-05
        %v1927 = vadd.f32 %v1926, 0.001143296
        %v1928 = vmul.f32 %v1914, %v1927
        %v1929 = vadd.f32 %v1928, 0.014752088
        %v1930 = vmul.f32 %v1914, %v1929
        %v1931 = vadd.f32 %v1930, 0.112945676
        %v1932 = vmul.f32 %v1914, %v1931
        %v1933 = vadd.f32 %v1932, 0.4994258
        %v1934 = vmul.f32 %v1914, %v1933
        %v1935 = vadd.f32 %v1934, 1.0
        %v1936 = vrcp.pop %v1935
        %v1937 = vmul.f32 %v1935, %v1936
        %v1938 = vsub.f32 1.0, %v1937
        %v1939 = vmul.f32 %v1936, %v1938
        %v1940 = vadd.f32 %v1936, %v1939
        %vm1941 = vweird.f32 %v1935
        %vm1942 = vweird.f32 %v1936
        %vm1943 = vmor %vm1941, %vm1942
        %v1944 = vsel %vm1943, %v1936, %v1940
        %v1945 = vand.u32 2147483647, %v1935
        %vm1946 = vcmp.eq.f32.partialorder %v1945, 8.507059e+37
        %v1947 = vand.u32 %v1935, 2147483648
        %v1948 = vor.u32 1.1754944e-38, %v1947
        %v1949 = vsel %vm1946, %v1948, %v1944
        %v1950 = vmul.f32 %v1925, %v1949
        %v1951 = vmin.f32 %v1950, 1.0
        %v1952 = vmax.f32 %v1951, -1.0
        %v1953 = vmul.f32 %v1469, %v1469
        %v1954 = vmin.f32 16.0, %v1953
        %v1955 = vmul.f32 %v1954, 2.1237322e-06
        %v1956 = vadd.f32 %v1955, 0.00028619796
        %v1957 = vmul.f32 %v1954, %v1956
        %v1958 = vadd.f32 %v1957, 0.0036580483
        %v1959 = vmul.f32 %v1954, %v1958
        %v1960 = vadd.f32 %v1959, 0.05243302
        %v1961 = vmul.f32 %v1954, %v1960
        %v1962 = vadd.f32 %v1961, 0.18741608
        %v1963 = vmul.f32 %v1954, %v1962
        %v1964 = vadd.f32 %v1963, 1.1283791
        %v1965 = vmul.f32 %v1469, %v1964
        %v1966 = vmul.f32 %v1954, 3.8918573e-05
        %v1967 = vadd.f32 %v1966, 0.001143296
        %v1968 = vmul.f32 %v1954, %v1967
        %v1969 = vadd.f32 %v1968, 0.014752088
        %v1970 = vmul.f32 %v1954, %v1969
        %v1971 = vadd.f32 %v1970, 0.112945676
        %v1972 = vmul.f32 %v1954, %v1971
        %v1973 = vadd.f32 %v1972, 0.4994258
        %v1974 = vmul.f32 %v1954, %v1973
        %v1975 = vadd.f32 %v1974, 1.0
        %v1976 = vrcp.pop %v1975
        %v1977 = vmul.f32 %v1975, %v1976
        %v1978 = vsub.f32 1.0, %v1977
        %v1979 = vmul.f32 %v1976, %v1978
        %v1980 = vadd.f32 %v1976, %v1979
        %vm1981 = vweird.f32 %v1975
        %vm1982 = vweird.f32 %v1976
        %vm1983 = vmor %vm1981, %vm1982
        %v1984 = vsel %vm1983, %v1976, %v1980
        %v1985 = vand.u32 2147483647, %v1975
        %vm1986 = vcmp.eq.f32.partialorder %v1985, 8.507059e+37
        %v1987 = vand.u32 %v1975, 2147483648
        %v1988 = vor.u32 1.1754944e-38, %v1987
        %v1989 = vsel %vm1986, %v1988, %v1984
        %v1990 = vmul.f32 %v1965, %v1989
        %v1991 = vmin.f32 %v1990, 1.0
        %v1992 = vmax.f32 %v1991, -1.0
        %v1993 = vmul.f32 %v1470, %v1470
        %v1994 = vmin.f32 16.0, %v1993
        %v1995 = vmul.f32 %v1994, 2.1237322e-06
        %v1996 = vadd.f32 %v1995, 0.00028619796
        %v1997 = vmul.f32 %v1994, %v1996
        %v1998 = vadd.f32 %v1997, 0.0036580483
        %v1999 = vmul.f32 %v1994, %v1998
        %v2000 = vadd.f32 %v1999, 0.05243302
        %v2001 = vmul.f32 %v1994, %v2000
        %v2002 = vadd.f32 %v2001, 0.18741608
        %v2003 = vmul.f32 %v1994, %v2002
        %v2004 = vadd.f32 %v2003, 1.1283791
        %v2005 = vmul.f32 %v1470, %v2004
        %v2006 = vmul.f32 %v1994, 3.8918573e-05
        %v2007 = vadd.f32 %v2006, 0.001143296
        %v2008 = vmul.f32 %v1994, %v2007
        %v2009 = vadd.f32 %v2008, 0.014752088
        %v2010 = vmul.f32 %v1994, %v2009
        %v2011 = vadd.f32 %v2010, 0.112945676
        %v2012 = vmul.f32 %v1994, %v2011
        %v2013 = vadd.f32 %v2012, 0.4994258
        %v2014 = vmul.f32 %v1994, %v2013
        %v2015 = vadd.f32 %v2014, 1.0
        %v2016 = vrcp.pop %v2015
        %v2017 = vmul.f32 %v2015, %v2016
        %v2018 = vsub.f32 1.0, %v2017
        %v2019 = vmul.f32 %v2016, %v2018
        %v2020 = vadd.f32 %v2016, %v2019
        %vm2021 = vweird.f32 %v2015
        %vm2022 = vweird.f32 %v2016
        %vm2023 = vmor %vm2021, %vm2022
        %v2024 = vsel %vm2023, %v2016, %v2020
        %v2025 = vand.u32 2147483647, %v2015
        %vm2026 = vcmp.eq.f32.partialorder %v2025, 8.507059e+37
        %v2027 = vand.u32 %v2015, 2147483648
        %v2028 = vor.u32 1.1754944e-38, %v2027
        %v2029 = vsel %vm2026, %v2028, %v2024
        %v2030 = vmul.f32 %v2005, %v2029
        %v2031 = vmin.f32 %v2030, 1.0
        %v2032 = vmax.f32 %v2031, -1.0
        %v2033 = vmul.f32 %v1471, %v1471
        %v2034 = vmin.f32 16.0, %v2033
        %v2035 = vmul.f32 %v2034, 2.1237322e-06
        %v2036 = vadd.f32 %v2035, 0.00028619796
        %v2037 = vmul.f32 %v2034, %v2036
        %v2038 = vadd.f32 %v2037, 0.0036580483
        %v2039 = vmul.f32 %v2034, %v2038
        %v2040 = vadd.f32 %v2039, 0.05243302
        %v2041 = vmul.f32 %v2034, %v2040
        %v2042 = vadd.f32 %v2041, 0.18741608
        %v2043 = vmul.f32 %v2034, %v2042
        %v2044 = vadd.f32 %v2043, 1.1283791
        %v2045 = vmul.f32 %v1471, %v2044
        %v2046 = vmul.f32 %v2034, 3.8918573e-05
        %v2047 = vadd.f32 %v2046, 0.001143296
        %v2048 = vmul.f32 %v2034, %v2047
        %v2049 = vadd.f32 %v2048, 0.014752088
        %v2050 = vmul.f32 %v2034, %v2049
        %v2051 = vadd.f32 %v2050, 0.112945676
        %v2052 = vmul.f32 %v2034, %v2051
        %v2053 = vadd.f32 %v2052, 0.4994258
        %v2054 = vmul.f32 %v2034, %v2053
        %v2055 = vadd.f32 %v2054, 1.0
        %v2056 = vrcp.pop %v2055
        %v2057 = vmul.f32 %v2055, %v2056
        %v2058 = vsub.f32 1.0, %v2057
        %v2059 = vmul.f32 %v2056, %v2058
        %v2060 = vadd.f32 %v2056, %v2059
        %vm2061 = vweird.f32 %v2055
        %vm2062 = vweird.f32 %v2056
        %vm2063 = vmor %vm2061, %vm2062
        %v2064 = vsel %vm2063, %v2056, %v2060
        %v2065 = vand.u32 2147483647, %v2055
        %vm2066 = vcmp.eq.f32.partialorder %v2065, 8.507059e+37
        %v2067 = vand.u32 %v2055, 2147483648
        %v2068 = vor.u32 1.1754944e-38, %v2067
        %v2069 = vsel %vm2066, %v2068, %v2064
        %v2070 = vmul.f32 %v2045, %v2069
        %v2071 = vmin.f32 %v2070, 1.0
        %v2072 = vmax.f32 %v2071, -1.0
        %v2073 = vmul.f32 %v1472, %v1472
        %v2074 = vmin.f32 16.0, %v2073
        %v2075 = vmul.f32 %v2074, 2.1237322e-06
        %v2076 = vadd.f32 %v2075, 0.00028619796
        %v2077 = vmul.f32 %v2074, %v2076
        %v2078 = vadd.f32 %v2077, 0.0036580483
        %v2079 = vmul.f32 %v2074, %v2078
        %v2080 = vadd.f32 %v2079, 0.05243302
        %v2081 = vmul.f32 %v2074, %v2080
        %v2082 = vadd.f32 %v2081, 0.18741608
        %v2083 = vmul.f32 %v2074, %v2082
        %v2084 = vadd.f32 %v2083, 1.1283791
        %v2085 = vmul.f32 %v1472, %v2084
        %v2086 = vmul.f32 %v2074, 3.8918573e-05
        %v2087 = vadd.f32 %v2086, 0.001143296
        %v2088 = vmul.f32 %v2074, %v2087
        %v2089 = vadd.f32 %v2088, 0.014752088
        %v2090 = vmul.f32 %v2074, %v2089
        %v2091 = vadd.f32 %v2090, 0.112945676
        %v2092 = vmul.f32 %v2074, %v2091
        %v2093 = vadd.f32 %v2092, 0.4994258
        %v2094 = vmul.f32 %v2074, %v2093
        %v2095 = vadd.f32 %v2094, 1.0
        %v2096 = vrcp.pop %v2095
        %v2097 = vmul.f32 %v2095, %v2096
        %v2098 = vsub.f32 1.0, %v2097
        %v2099 = vmul.f32 %v2096, %v2098
        %v2100 = vadd.f32 %v2096, %v2099
        %vm2101 = vweird.f32 %v2095
        %vm2102 = vweird.f32 %v2096
        %vm2103 = vmor %vm2101, %vm2102
        %v2104 = vsel %vm2103, %v2096, %v2100
        %v2105 = vand.u32 2147483647, %v2095
        %vm2106 = vcmp.eq.f32.partialorder %v2105, 8.507059e+37
        %v2107 = vand.u32 %v2095, 2147483648
        %v2108 = vor.u32 1.1754944e-38, %v2107
        %v2109 = vsel %vm2106, %v2108, %v2104
        %v2110 = vmul.f32 %v2085, %v2109
        %v2111 = vmin.f32 %v2110, 1.0
        %v2112 = vmax.f32 %v2111, -1.0
        %v2113 = vadd.f32 %v1512, 1.0
        %v2114 = vadd.f32 %v1552, 1.0
        %v2115 = vadd.f32 %v1592, 1.0
        %v2116 = vadd.f32 %v1632, 1.0
        %v2117 = vadd.f32 %v1672, 1.0
        %v2118 = vadd.f32 %v1712, 1.0
        %v2119 = vadd.f32 %v1752, 1.0
        %v2120 = vadd.f32 %v1792, 1.0
        %v2121 = vadd.f32 %v1832, 1.0
        %v2122 = vadd.f32 %v1872, 1.0
        %v2123 = vadd.f32 %v1912, 1.0
        %v2124 = vadd.f32 %v1952, 1.0
        %v2125 = vadd.f32 %v1992, 1.0
        %v2126 = vadd.f32 %v2032, 1.0
        %v2127 = vadd.f32 %v2072, 1.0
        %v2128 = vadd.f32 %v2112, 1.0
        %v2129 = vmul.f32 %v1441, %v2113
        %v2130 = vmul.f32 %v1442, %v2114
        %v2131 = vmul.f32 %v1443, %v2115
        %v2132 = vmul.f32 %v1444, %v2116
        %v2133 = vmul.f32 %v1445, %v2117
        %v2134 = vmul.f32 %v1446, %v2118
        %v2135 = vmul.f32 %v1447, %v2119
        %v2136 = vmul.f32 %v1448, %v2120
        %v2137 = vmul.f32 %v1449, %v2121
        %v2138 = vmul.f32 %v1450, %v2122
        %v2139 = vmul.f32 %v1451, %v2123
        %v2140 = vmul.f32 %v1452, %v2124
        %v2141 = vmul.f32 %v1453, %v2125
        %v2142 = vmul.f32 %v1454, %v2126
        %v2143 = vmul.f32 %v1455, %v2127
        %v2144 = vmul.f32 %v1456, %v2128
        %2146 = vrot.lane.b32.xlu0 %v1006, 8
        %v2147 = vpop.permute.xlu0 %2146
        %v2149 = vadd.f32 %v959, %v2147
        %v2150 = vadd.f32 %v962, %v2147
        %v2151 = vadd.f32 %v965, %v2147
        %v2152 = vadd.f32 %v968, %v2147
        %v2153 = vadd.f32 %v971, %v2147
        %v2154 = vadd.f32 %v974, %v2147
        %v2155 = vadd.f32 %v977, %v2147
        %v2156 = vadd.f32 %v980, %v2147
        %v2157 = vadd.f32 %v983, %v2147
        %v2158 = vadd.f32 %v986, %v2147
        %v2159 = vadd.f32 %v989, %v2147
        %v2160 = vadd.f32 %v992, %v2147
        %v2161 = vadd.f32 %v995, %v2147
        %v2162 = vadd.f32 %v998, %v2147
        %v2163 = vadd.f32 %v1001, %v2147
        %v2164 = vadd.f32 %v1004, %v2147
        %2181 = vrot.lane.b32.xlu0 %v2149, 120
        %v2182 = vpop.permute.xlu0 %2181
        %2183 = vrot.lane.b32.xlu0 %v2150, 120
        %v2184 = vpop.permute.xlu0 %2183
        %2185 = vrot.lane.b32.xlu0 %v2151, 120
        %v2186 = vpop.permute.xlu0 %2185
        %2187 = vrot.lane.b32.xlu0 %v2152, 120
        %v2188 = vpop.permute.xlu0 %2187
        %2189 = vrot.lane.b32.xlu0 %v2153, 120
        %v2190 = vpop.permute.xlu0 %2189
        %2191 = vrot.lane.b32.xlu0 %v2154, 120
        %v2192 = vpop.permute.xlu0 %2191
        %2193 = vrot.lane.b32.xlu0 %v2155, 120
        %v2194 = vpop.permute.xlu0 %2193
        %2195 = vrot.lane.b32.xlu0 %v2156, 120
        %v2196 = vpop.permute.xlu0 %2195
        %2197 = vrot.lane.b32.xlu0 %v2157, 120
        %v2198 = vpop.permute.xlu0 %2197
        %2199 = vrot.lane.b32.xlu0 %v2158, 120
        %v2200 = vpop.permute.xlu0 %2199
        %2201 = vrot.lane.b32.xlu0 %v2159, 120
        %v2202 = vpop.permute.xlu0 %2201
        %2203 = vrot.lane.b32.xlu0 %v2160, 120
        %v2204 = vpop.permute.xlu0 %2203
        %2205 = vrot.lane.b32.xlu0 %v2161, 120
        %v2206 = vpop.permute.xlu0 %2205
        %2207 = vrot.lane.b32.xlu0 %v2162, 120
        %v2208 = vpop.permute.xlu0 %2207
        %2209 = vrot.lane.b32.xlu0 %v2163, 120
        %v2210 = vpop.permute.xlu0 %2209
        %2211 = vrot.lane.b32.xlu0 %v2164, 120
        %v2212 = vpop.permute.xlu0 %2211
        %v2229 = vsel %vm761, %v2182, 0.0
        %2230 = vadd.xlane.f32.xlu0 %v2229
        %v2231 = vpop.xlane.xlu0 %2230
        %v2232 = vsel %vm761, %v2184, 0.0
        %2233 = vadd.xlane.f32.xlu0 %v2232
        %v2234 = vpop.xlane.xlu0 %2233
        %v2235 = vsel %vm761, %v2186, 0.0
        %2236 = vadd.xlane.f32.xlu0 %v2235
        %v2237 = vpop.xlane.xlu0 %2236
        %v2238 = vsel %vm761, %v2188, 0.0
        %2239 = vadd.xlane.f32.xlu0 %v2238
        %v2240 = vpop.xlane.xlu0 %2239
        %v2241 = vsel %vm761, %v2190, 0.0
        %2242 = vadd.xlane.f32.xlu0 %v2241
        %v2243 = vpop.xlane.xlu0 %2242
        %v2244 = vsel %vm761, %v2192, 0.0
        %2245 = vadd.xlane.f32.xlu0 %v2244
        %v2246 = vpop.xlane.xlu0 %2245
        %v2247 = vsel %vm761, %v2194, 0.0
        %2248 = vadd.xlane.f32.xlu0 %v2247
        %v2249 = vpop.xlane.xlu0 %2248
        %v2250 = vsel %vm761, %v2196, 0.0
        %2251 = vadd.xlane.f32.xlu0 %v2250
        %v2252 = vpop.xlane.xlu0 %2251
        %v2253 = vsel %vm761, %v2198, 0.0
        %2254 = vadd.xlane.f32.xlu0 %v2253
        %v2255 = vpop.xlane.xlu0 %2254
        %v2256 = vsel %vm761, %v2200, 0.0
        %2257 = vadd.xlane.f32.xlu0 %v2256
        %v2258 = vpop.xlane.xlu0 %2257
        %v2259 = vsel %vm761, %v2202, 0.0
        %2260 = vadd.xlane.f32.xlu0 %v2259
        %v2261 = vpop.xlane.xlu0 %2260
        %v2262 = vsel %vm761, %v2204, 0.0
        %2263 = vadd.xlane.f32.xlu0 %v2262
        %v2264 = vpop.xlane.xlu0 %2263
        %v2265 = vsel %vm761, %v2206, 0.0
        %2266 = vadd.xlane.f32.xlu0 %v2265
        %v2267 = vpop.xlane.xlu0 %2266
        %v2268 = vsel %vm761, %v2208, 0.0
        %2269 = vadd.xlane.f32.xlu0 %v2268
        %v2270 = vpop.xlane.xlu0 %2269
        %v2271 = vsel %vm761, %v2210, 0.0
        %2272 = vadd.xlane.f32.xlu0 %v2271
        %v2273 = vpop.xlane.xlu0 %2272
        %v2274 = vsel %vm761, %v2212, 0.0
        %2275 = vadd.xlane.f32.xlu0 %v2274
        %v2276 = vpop.xlane.xlu0 %2275
        %v2277 = vmul.f32 %v2149, %v2149
        %v2278 = vmul.f32 %v2150, %v2150
        %v2279 = vmul.f32 %v2151, %v2151
        %v2280 = vmul.f32 %v2152, %v2152
        %v2281 = vmul.f32 %v2153, %v2153
        %v2282 = vmul.f32 %v2154, %v2154
        %v2283 = vmul.f32 %v2155, %v2155
        %v2284 = vmul.f32 %v2156, %v2156
        %v2285 = vmul.f32 %v2157, %v2157
        %v2286 = vmul.f32 %v2158, %v2158
        %v2287 = vmul.f32 %v2159, %v2159
        %v2288 = vmul.f32 %v2160, %v2160
        %v2289 = vmul.f32 %v2161, %v2161
        %v2290 = vmul.f32 %v2162, %v2162
        %v2291 = vmul.f32 %v2163, %v2163
        %v2292 = vmul.f32 %v2164, %v2164
        %2309 = vrot.lane.b32.xlu0 %v2277, 120
        %v2310 = vpop.permute.xlu0 %2309
        %2311 = vrot.lane.b32.xlu0 %v2278, 120
        %v2312 = vpop.permute.xlu0 %2311
        %2313 = vrot.lane.b32.xlu0 %v2279, 120
        %v2314 = vpop.permute.xlu0 %2313
        %2315 = vrot.lane.b32.xlu0 %v2280, 120
        %v2316 = vpop.permute.xlu0 %2315
        %2317 = vrot.lane.b32.xlu0 %v2281, 120
        %v2318 = vpop.permute.xlu0 %2317
        %2319 = vrot.lane.b32.xlu0 %v2282, 120
        %v2320 = vpop.permute.xlu0 %2319
        %2321 = vrot.lane.b32.xlu0 %v2283, 120
        %v2322 = vpop.permute.xlu0 %2321
        %2323 = vrot.lane.b32.xlu0 %v2284, 120
        %v2324 = vpop.permute.xlu0 %2323
        %2325 = vrot.lane.b32.xlu0 %v2285, 120
        %v2326 = vpop.permute.xlu0 %2325
        %2327 = vrot.lane.b32.xlu0 %v2286, 120
        %v2328 = vpop.permute.xlu0 %2327
        %2329 = vrot.lane.b32.xlu0 %v2287, 120
        %v2330 = vpop.permute.xlu0 %2329
        %2331 = vrot.lane.b32.xlu0 %v2288, 120
        %v2332 = vpop.permute.xlu0 %2331
        %2333 = vrot.lane.b32.xlu0 %v2289, 120
        %v2334 = vpop.permute.xlu0 %2333
        %2335 = vrot.lane.b32.xlu0 %v2290, 120
        %v2336 = vpop.permute.xlu0 %2335
        %2337 = vrot.lane.b32.xlu0 %v2291, 120
        %v2338 = vpop.permute.xlu0 %2337
        %2339 = vrot.lane.b32.xlu0 %v2292, 120
        %v2340 = vpop.permute.xlu0 %2339
        %v2357 = vsel %vm761, %v2310, 0.0
        %2358 = vadd.xlane.f32.xlu0 %v2357
        %v2359 = vpop.xlane.xlu0 %2358
        %v2360 = vsel %vm761, %v2312, 0.0
        %2361 = vadd.xlane.f32.xlu0 %v2360
        %v2362 = vpop.xlane.xlu0 %2361
        %v2363 = vsel %vm761, %v2314, 0.0
        %2364 = vadd.xlane.f32.xlu0 %v2363
        %v2365 = vpop.xlane.xlu0 %2364
        %v2366 = vsel %vm761, %v2316, 0.0
        %2367 = vadd.xlane.f32.xlu0 %v2366
        %v2368 = vpop.xlane.xlu0 %2367
        %v2369 = vsel %vm761, %v2318, 0.0
        %2370 = vadd.xlane.f32.xlu0 %v2369
        %v2371 = vpop.xlane.xlu0 %2370
        %v2372 = vsel %vm761, %v2320, 0.0
        %2373 = vadd.xlane.f32.xlu0 %v2372
        %v2374 = vpop.xlane.xlu0 %2373
        %v2375 = vsel %vm761, %v2322, 0.0
        %2376 = vadd.xlane.f32.xlu0 %v2375
        %v2377 = vpop.xlane.xlu0 %2376
        %v2378 = vsel %vm761, %v2324, 0.0
        %2379 = vadd.xlane.f32.xlu0 %v2378
        %v2380 = vpop.xlane.xlu0 %2379
        %v2381 = vsel %vm761, %v2326, 0.0
        %2382 = vadd.xlane.f32.xlu0 %v2381
        %v2383 = vpop.xlane.xlu0 %2382
        %v2384 = vsel %vm761, %v2328, 0.0
        %2385 = vadd.xlane.f32.xlu0 %v2384
        %v2386 = vpop.xlane.xlu0 %2385
        %v2387 = vsel %vm761, %v2330, 0.0
        %2388 = vadd.xlane.f32.xlu0 %v2387
        %v2389 = vpop.xlane.xlu0 %2388
        %v2390 = vsel %vm761, %v2332, 0.0
        %2391 = vadd.xlane.f32.xlu0 %v2390
        %v2392 = vpop.xlane.xlu0 %2391
        %v2393 = vsel %vm761, %v2334, 0.0
        %2394 = vadd.xlane.f32.xlu0 %v2393
        %v2395 = vpop.xlane.xlu0 %2394
        %v2396 = vsel %vm761, %v2336, 0.0
        %2397 = vadd.xlane.f32.xlu0 %v2396
        %v2398 = vpop.xlane.xlu0 %2397
        %v2399 = vsel %vm761, %v2338, 0.0
        %2400 = vadd.xlane.f32.xlu0 %v2399
        %v2401 = vpop.xlane.xlu0 %2400
        %v2402 = vsel %vm761, %v2340, 0.0
        %2403 = vadd.xlane.f32.xlu0 %v2402
        %v2404 = vpop.xlane.xlu0 %2403
        %v2405 = vmul.f32 %v2231, 0.125
        %v2406 = vmul.f32 %v2234, 0.125
        %v2407 = vmul.f32 %v2237, 0.125
        %v2408 = vmul.f32 %v2240, 0.125
        %v2409 = vmul.f32 %v2243, 0.125
        %v2410 = vmul.f32 %v2246, 0.125
        %v2411 = vmul.f32 %v2249, 0.125
        %v2412 = vmul.f32 %v2252, 0.125
        %v2413 = vmul.f32 %v2255, 0.125
        %v2414 = vmul.f32 %v2258, 0.125
        %v2415 = vmul.f32 %v2261, 0.125
        %v2416 = vmul.f32 %v2264, 0.125
        %v2417 = vmul.f32 %v2267, 0.125
        %v2418 = vmul.f32 %v2270, 0.125
        %v2419 = vmul.f32 %v2273, 0.125
        %v2420 = vmul.f32 %v2276, 0.125
        %v2421 = vmul.f32 %v2359, 0.125
        %v2422 = vmul.f32 %v2362, 0.125
        %v2423 = vmul.f32 %v2365, 0.125
        %v2424 = vmul.f32 %v2368, 0.125
        %v2425 = vmul.f32 %v2371, 0.125
        %v2426 = vmul.f32 %v2374, 0.125
        %v2427 = vmul.f32 %v2377, 0.125
        %v2428 = vmul.f32 %v2380, 0.125
        %v2429 = vmul.f32 %v2383, 0.125
        %v2430 = vmul.f32 %v2386, 0.125
        %v2431 = vmul.f32 %v2389, 0.125
        %v2432 = vmul.f32 %v2392, 0.125
        %v2433 = vmul.f32 %v2395, 0.125
        %v2434 = vmul.f32 %v2398, 0.125
        %v2435 = vmul.f32 %v2401, 0.125
        %v2436 = vmul.f32 %v2404, 0.125
        %v2437 = vmul.f32 %v2405, %v2405
        %v2438 = vmul.f32 %v2406, %v2406
        %v2439 = vmul.f32 %v2407, %v2407
        %v2440 = vmul.f32 %v2408, %v2408
        %v2441 = vmul.f32 %v2409, %v2409
        %v2442 = vmul.f32 %v2410, %v2410
        %v2443 = vmul.f32 %v2411, %v2411
        %v2444 = vmul.f32 %v2412, %v2412
        %v2445 = vmul.f32 %v2413, %v2413
        %v2446 = vmul.f32 %v2414, %v2414
        %v2447 = vmul.f32 %v2415, %v2415
        %v2448 = vmul.f32 %v2416, %v2416
        %v2449 = vmul.f32 %v2417, %v2417
        %v2450 = vmul.f32 %v2418, %v2418
        %v2451 = vmul.f32 %v2419, %v2419
        %v2452 = vmul.f32 %v2420, %v2420
        %v2453 = vsub.f32 %v2421, %v2437
        %v2454 = vsub.f32 %v2422, %v2438
        %v2455 = vsub.f32 %v2423, %v2439
        %v2456 = vsub.f32 %v2424, %v2440
        %v2457 = vsub.f32 %v2425, %v2441
        %v2458 = vsub.f32 %v2426, %v2442
        %v2459 = vsub.f32 %v2427, %v2443
        %v2460 = vsub.f32 %v2428, %v2444
        %v2461 = vsub.f32 %v2429, %v2445
        %v2462 = vsub.f32 %v2430, %v2446
        %v2463 = vsub.f32 %v2431, %v2447
        %v2464 = vsub.f32 %v2432, %v2448
        %v2465 = vsub.f32 %v2433, %v2449
        %v2466 = vsub.f32 %v2434, %v2450
        %v2467 = vsub.f32 %v2435, %v2451
        %v2468 = vsub.f32 %v2436, %v2452
        %v2469 = vsub.f32 %v2149, %v2405
        %v2470 = vsub.f32 %v2150, %v2406
        %v2471 = vsub.f32 %v2151, %v2407
        %v2472 = vsub.f32 %v2152, %v2408
        %v2473 = vsub.f32 %v2153, %v2409
        %v2474 = vsub.f32 %v2154, %v2410
        %v2475 = vsub.f32 %v2155, %v2411
        %v2476 = vsub.f32 %v2156, %v2412
        %v2477 = vsub.f32 %v2157, %v2413
        %v2478 = vsub.f32 %v2158, %v2414
        %v2479 = vsub.f32 %v2159, %v2415
        %v2480 = vsub.f32 %v2160, %v2416
        %v2481 = vsub.f32 %v2161, %v2417
        %v2482 = vsub.f32 %v2162, %v2418
        %v2483 = vsub.f32 %v2163, %v2419
        %v2484 = vsub.f32 %v2164, %v2420
        %v2485 = vadd.f32 %v2453, 1e-06
        %v2486 = vadd.f32 %v2454, 1e-06
        %v2487 = vadd.f32 %v2455, 1e-06
        %v2488 = vadd.f32 %v2456, 1e-06
        %v2489 = vadd.f32 %v2457, 1e-06
        %v2490 = vadd.f32 %v2458, 1e-06
        %v2491 = vadd.f32 %v2459, 1e-06
        %v2492 = vadd.f32 %v2460, 1e-06
        %v2493 = vadd.f32 %v2461, 1e-06
        %v2494 = vadd.f32 %v2462, 1e-06
        %v2495 = vadd.f32 %v2463, 1e-06
        %v2496 = vadd.f32 %v2464, 1e-06
        %v2497 = vadd.f32 %v2465, 1e-06
        %v2498 = vadd.f32 %v2466, 1e-06
        %v2499 = vadd.f32 %v2467, 1e-06
        %v2500 = vadd.f32 %v2468, 1e-06
        %v2501 = vrsqrt.pop %v2485
        %v2502 = vmul.f32 %v2501, %v2485
        %v2503 = vmul.f32 %v2502, %v2501
        %v2504 = vmul.f32 0.5, %v2503
        %v2505 = vsub.f32 1.5, %v2504
        %v2506 = vmul.f32 %v2501, %v2505
        %vm2507 = vweird.f32 %v2485
        %vm2508 = vweird.f32 %v2501
        %vm2509 = vmor %vm2507, %vm2508
        %v2510 = vsel %vm2509, %v2501, %v2506
        %v2511 = vrsqrt.pop %v2486
        %v2512 = vmul.f32 %v2511, %v2486
        %v2513 = vmul.f32 %v2512, %v2511
        %v2514 = vmul.f32 0.5, %v2513
        %v2515 = vsub.f32 1.5, %v2514
        %v2516 = vmul.f32 %v2511, %v2515
        %vm2517 = vweird.f32 %v2486
        %vm2518 = vweird.f32 %v2511
        %vm2519 = vmor %vm2517, %vm2518
        %v2520 = vsel %vm2519, %v2511, %v2516
        %v2521 = vrsqrt.pop %v2487
        %v2522 = vmul.f32 %v2521, %v2487
        %v2523 = vmul.f32 %v2522, %v2521
        %v2524 = vmul.f32 0.5, %v2523
        %v2525 = vsub.f32 1.5, %v2524
        %v2526 = vmul.f32 %v2521, %v2525
        %vm2527 = vweird.f32 %v2487
        %vm2528 = vweird.f32 %v2521
        %vm2529 = vmor %vm2527, %vm2528
        %v2530 = vsel %vm2529, %v2521, %v2526
        %v2531 = vrsqrt.pop %v2488
        %v2532 = vmul.f32 %v2531, %v2488
        %v2533 = vmul.f32 %v2532, %v2531
        %v2534 = vmul.f32 0.5, %v2533
        %v2535 = vsub.f32 1.5, %v2534
        %v2536 = vmul.f32 %v2531, %v2535
        %vm2537 = vweird.f32 %v2488
        %vm2538 = vweird.f32 %v2531
        %vm2539 = vmor %vm2537, %vm2538
        %v2540 = vsel %vm2539, %v2531, %v2536
        %v2541 = vrsqrt.pop %v2489
        %v2542 = vmul.f32 %v2541, %v2489
        %v2543 = vmul.f32 %v2542, %v2541
        %v2544 = vmul.f32 0.5, %v2543
        %v2545 = vsub.f32 1.5, %v2544
        %v2546 = vmul.f32 %v2541, %v2545
        %vm2547 = vweird.f32 %v2489
        %vm2548 = vweird.f32 %v2541
        %vm2549 = vmor %vm2547, %vm2548
        %v2550 = vsel %vm2549, %v2541, %v2546
        %v2551 = vrsqrt.pop %v2490
        %v2552 = vmul.f32 %v2551, %v2490
        %v2553 = vmul.f32 %v2552, %v2551
        %v2554 = vmul.f32 0.5, %v2553
        %v2555 = vsub.f32 1.5, %v2554
        %v2556 = vmul.f32 %v2551, %v2555
        %vm2557 = vweird.f32 %v2490
        %vm2558 = vweird.f32 %v2551
        %vm2559 = vmor %vm2557, %vm2558
        %v2560 = vsel %vm2559, %v2551, %v2556
        %v2561 = vrsqrt.pop %v2491
        %v2562 = vmul.f32 %v2561, %v2491
        %v2563 = vmul.f32 %v2562, %v2561
        %v2564 = vmul.f32 0.5, %v2563
        %v2565 = vsub.f32 1.5, %v2564
        %v2566 = vmul.f32 %v2561, %v2565
        %vm2567 = vweird.f32 %v2491
        %vm2568 = vweird.f32 %v2561
        %vm2569 = vmor %vm2567, %vm2568
        %v2570 = vsel %vm2569, %v2561, %v2566
        %v2571 = vrsqrt.pop %v2492
        %v2572 = vmul.f32 %v2571, %v2492
        %v2573 = vmul.f32 %v2572, %v2571
        %v2574 = vmul.f32 0.5, %v2573
        %v2575 = vsub.f32 1.5, %v2574
        %v2576 = vmul.f32 %v2571, %v2575
        %vm2577 = vweird.f32 %v2492
        %vm2578 = vweird.f32 %v2571
        %vm2579 = vmor %vm2577, %vm2578
        %v2580 = vsel %vm2579, %v2571, %v2576
        %v2581 = vrsqrt.pop %v2493
        %v2582 = vmul.f32 %v2581, %v2493
        %v2583 = vmul.f32 %v2582, %v2581
        %v2584 = vmul.f32 0.5, %v2583
        %v2585 = vsub.f32 1.5, %v2584
        %v2586 = vmul.f32 %v2581, %v2585
        %vm2587 = vweird.f32 %v2493
        %vm2588 = vweird.f32 %v2581
        %vm2589 = vmor %vm2587, %vm2588
        %v2590 = vsel %vm2589, %v2581, %v2586
        %v2591 = vrsqrt.pop %v2494
        %v2592 = vmul.f32 %v2591, %v2494
        %v2593 = vmul.f32 %v2592, %v2591
        %v2594 = vmul.f32 0.5, %v2593
        %v2595 = vsub.f32 1.5, %v2594
        %v2596 = vmul.f32 %v2591, %v2595
        %vm2597 = vweird.f32 %v2494
        %vm2598 = vweird.f32 %v2591
        %vm2599 = vmor %vm2597, %vm2598
        %v2600 = vsel %vm2599, %v2591, %v2596
        %v2601 = vrsqrt.pop %v2495
        %v2602 = vmul.f32 %v2601, %v2495
        %v2603 = vmul.f32 %v2602, %v2601
        %v2604 = vmul.f32 0.5, %v2603
        %v2605 = vsub.f32 1.5, %v2604
        %v2606 = vmul.f32 %v2601, %v2605
        %vm2607 = vweird.f32 %v2495
        %vm2608 = vweird.f32 %v2601
        %vm2609 = vmor %vm2607, %vm2608
        %v2610 = vsel %vm2609, %v2601, %v2606
        %v2611 = vrsqrt.pop %v2496
        %v2612 = vmul.f32 %v2611, %v2496
        %v2613 = vmul.f32 %v2612, %v2611
        %v2614 = vmul.f32 0.5, %v2613
        %v2615 = vsub.f32 1.5, %v2614
        %v2616 = vmul.f32 %v2611, %v2615
        %vm2617 = vweird.f32 %v2496
        %vm2618 = vweird.f32 %v2611
        %vm2619 = vmor %vm2617, %vm2618
        %v2620 = vsel %vm2619, %v2611, %v2616
        %v2621 = vrsqrt.pop %v2497
        %v2622 = vmul.f32 %v2621, %v2497
        %v2623 = vmul.f32 %v2622, %v2621
        %v2624 = vmul.f32 0.5, %v2623
        %v2625 = vsub.f32 1.5, %v2624
        %v2626 = vmul.f32 %v2621, %v2625
        %vm2627 = vweird.f32 %v2497
        %vm2628 = vweird.f32 %v2621
        %vm2629 = vmor %vm2627, %vm2628
        %v2630 = vsel %vm2629, %v2621, %v2626
        %v2631 = vrsqrt.pop %v2498
        %v2632 = vmul.f32 %v2631, %v2498
        %v2633 = vmul.f32 %v2632, %v2631
        %v2634 = vmul.f32 0.5, %v2633
        %v2635 = vsub.f32 1.5, %v2634
        %v2636 = vmul.f32 %v2631, %v2635
        %vm2637 = vweird.f32 %v2498
        %vm2638 = vweird.f32 %v2631
        %vm2639 = vmor %vm2637, %vm2638
        %v2640 = vsel %vm2639, %v2631, %v2636
        %v2641 = vrsqrt.pop %v2499
        %v2642 = vmul.f32 %v2641, %v2499
        %v2643 = vmul.f32 %v2642, %v2641
        %v2644 = vmul.f32 0.5, %v2643
        %v2645 = vsub.f32 1.5, %v2644
        %v2646 = vmul.f32 %v2641, %v2645
        %vm2647 = vweird.f32 %v2499
        %vm2648 = vweird.f32 %v2641
        %vm2649 = vmor %vm2647, %vm2648
        %v2650 = vsel %vm2649, %v2641, %v2646
        %v2651 = vrsqrt.pop %v2500
        %v2652 = vmul.f32 %v2651, %v2500
        %v2653 = vmul.f32 %v2652, %v2651
        %v2654 = vmul.f32 0.5, %v2653
        %v2655 = vsub.f32 1.5, %v2654
        %v2656 = vmul.f32 %v2651, %v2655
        %vm2657 = vweird.f32 %v2500
        %vm2658 = vweird.f32 %v2651
        %vm2659 = vmor %vm2657, %vm2658
        %v2660 = vsel %vm2659, %v2651, %v2656
        %v2661 = vmul.f32 %v2469, %v2510
        %v2662 = vmul.f32 %v2470, %v2520
        %v2663 = vmul.f32 %v2471, %v2530
        %v2664 = vmul.f32 %v2472, %v2540
        %v2665 = vmul.f32 %v2473, %v2550
        %v2666 = vmul.f32 %v2474, %v2560
        %v2667 = vmul.f32 %v2475, %v2570
        %v2668 = vmul.f32 %v2476, %v2580
        %v2669 = vmul.f32 %v2477, %v2590
        %v2670 = vmul.f32 %v2478, %v2600
        %v2671 = vmul.f32 %v2479, %v2610
        %v2672 = vmul.f32 %v2480, %v2620
        %v2673 = vmul.f32 %v2481, %v2630
        %v2674 = vmul.f32 %v2482, %v2640
        %v2675 = vmul.f32 %v2483, %v2650
        %v2676 = vmul.f32 %v2484, %v2660
        %2678 = vrot.lane.b32.xlu0 %v1407, 8
        %v2679 = vpop.permute.xlu0 %2678
        %v2681 = vmul.f32 %v2661, %v2679
        %v2682 = vmul.f32 %v2662, %v2679
        %v2683 = vmul.f32 %v2663, %v2679
        %v2684 = vmul.f32 %v2664, %v2679
        %v2685 = vmul.f32 %v2665, %v2679
        %v2686 = vmul.f32 %v2666, %v2679
        %v2687 = vmul.f32 %v2667, %v2679
        %v2688 = vmul.f32 %v2668, %v2679
        %v2689 = vmul.f32 %v2669, %v2679
        %v2690 = vmul.f32 %v2670, %v2679
        %v2691 = vmul.f32 %v2671, %v2679
        %v2692 = vmul.f32 %v2672, %v2679
        %v2693 = vmul.f32 %v2673, %v2679
        %v2694 = vmul.f32 %v2674, %v2679
        %v2695 = vmul.f32 %v2675, %v2679
        %v2696 = vmul.f32 %v2676, %v2679
        %2698 = vrot.lane.b32.xlu0 %v1424, 8
        %v2699 = vpop.permute.xlu0 %2698
        %v2701 = vadd.f32 %v2681, %v2699
        %v2702 = vadd.f32 %v2682, %v2699
        %v2703 = vadd.f32 %v2683, %v2699
        %v2704 = vadd.f32 %v2684, %v2699
        %v2705 = vadd.f32 %v2685, %v2699
        %v2706 = vadd.f32 %v2686, %v2699
        %v2707 = vadd.f32 %v2687, %v2699
        %v2708 = vadd.f32 %v2688, %v2699
        %v2709 = vadd.f32 %v2689, %v2699
        %v2710 = vadd.f32 %v2690, %v2699
        %v2711 = vadd.f32 %v2691, %v2699
        %v2712 = vadd.f32 %v2692, %v2699
        %v2713 = vadd.f32 %v2693, %v2699
        %v2714 = vadd.f32 %v2694, %v2699
        %v2715 = vadd.f32 %v2695, %v2699
        %v2716 = vadd.f32 %v2696, %v2699
        %v2717 = vmul.f32 %v2701, 0.5
        %v2718 = vmul.f32 %v2702, 0.5
        %v2719 = vmul.f32 %v2703, 0.5
        %v2720 = vmul.f32 %v2704, 0.5
        %v2721 = vmul.f32 %v2705, 0.5
        %v2722 = vmul.f32 %v2706, 0.5
        %v2723 = vmul.f32 %v2707, 0.5
        %v2724 = vmul.f32 %v2708, 0.5
        %v2725 = vmul.f32 %v2709, 0.5
        %v2726 = vmul.f32 %v2710, 0.5
        %v2727 = vmul.f32 %v2711, 0.5
        %v2728 = vmul.f32 %v2712, 0.5
        %v2729 = vmul.f32 %v2713, 0.5
        %v2730 = vmul.f32 %v2714, 0.5
        %v2731 = vmul.f32 %v2715, 0.5
        %v2732 = vmul.f32 %v2716, 0.5
        %v2733 = vmul.f32 %v2701, 0.70710677
        %v2734 = vmul.f32 %v2702, 0.70710677
        %v2735 = vmul.f32 %v2703, 0.70710677
        %v2736 = vmul.f32 %v2704, 0.70710677
        %v2737 = vmul.f32 %v2705, 0.70710677
        %v2738 = vmul.f32 %v2706, 0.70710677
        %v2739 = vmul.f32 %v2707, 0.70710677
        %v2740 = vmul.f32 %v2708, 0.70710677
        %v2741 = vmul.f32 %v2709, 0.70710677
        %v2742 = vmul.f32 %v2710, 0.70710677
        %v2743 = vmul.f32 %v2711, 0.70710677
        %v2744 = vmul.f32 %v2712, 0.70710677
        %v2745 = vmul.f32 %v2713, 0.70710677
        %v2746 = vmul.f32 %v2714, 0.70710677
        %v2747 = vmul.f32 %v2715, 0.70710677
        %v2748 = vmul.f32 %v2716, 0.70710677
        %v2749 = vmul.f32 %v2733, %v2733
        %v2750 = vmin.f32 16.0, %v2749
        %v2751 = vmul.f32 %v2750, 2.1237322e-06
        %v2752 = vadd.f32 %v2751, 0.00028619796
        %v2753 = vmul.f32 %v2750, %v2752
        %v2754 = vadd.f32 %v2753, 0.0036580483
        %v2755 = vmul.f32 %v2750, %v2754
        %v2756 = vadd.f32 %v2755, 0.05243302
        %v2757 = vmul.f32 %v2750, %v2756
        %v2758 = vadd.f32 %v2757, 0.18741608
        %v2759 = vmul.f32 %v2750, %v2758
        %v2760 = vadd.f32 %v2759, 1.1283791
        %v2761 = vmul.f32 %v2733, %v2760
        %v2762 = vmul.f32 %v2750, 3.8918573e-05
        %v2763 = vadd.f32 %v2762, 0.001143296
        %v2764 = vmul.f32 %v2750, %v2763
        %v2765 = vadd.f32 %v2764, 0.014752088
        %v2766 = vmul.f32 %v2750, %v2765
        %v2767 = vadd.f32 %v2766, 0.112945676
        %v2768 = vmul.f32 %v2750, %v2767
        %v2769 = vadd.f32 %v2768, 0.4994258
        %v2770 = vmul.f32 %v2750, %v2769
        %v2771 = vadd.f32 %v2770, 1.0
        %v2772 = vrcp.pop %v2771
        %v2773 = vmul.f32 %v2771, %v2772
        %v2774 = vsub.f32 1.0, %v2773
        %v2775 = vmul.f32 %v2772, %v2774
        %v2776 = vadd.f32 %v2772, %v2775
        %vm2777 = vweird.f32 %v2771
        %vm2778 = vweird.f32 %v2772
        %vm2779 = vmor %vm2777, %vm2778
        %v2780 = vsel %vm2779, %v2772, %v2776
        %v2781 = vand.u32 2147483647, %v2771
        %vm2782 = vcmp.eq.f32.partialorder %v2781, 8.507059e+37
        %v2783 = vand.u32 %v2771, 2147483648
        %v2784 = vor.u32 1.1754944e-38, %v2783
        %v2785 = vsel %vm2782, %v2784, %v2780
        %v2786 = vmul.f32 %v2761, %v2785
        %v2787 = vmin.f32 %v2786, 1.0
        %v2788 = vmax.f32 %v2787, -1.0
        %v2789 = vmul.f32 %v2734, %v2734
        %v2790 = vmin.f32 16.0, %v2789
        %v2791 = vmul.f32 %v2790, 2.1237322e-06
        %v2792 = vadd.f32 %v2791, 0.00028619796
        %v2793 = vmul.f32 %v2790, %v2792
        %v2794 = vadd.f32 %v2793, 0.0036580483
        %v2795 = vmul.f32 %v2790, %v2794
        %v2796 = vadd.f32 %v2795, 0.05243302
        %v2797 = vmul.f32 %v2790, %v2796
        %v2798 = vadd.f32 %v2797, 0.18741608
        %v2799 = vmul.f32 %v2790, %v2798
        %v2800 = vadd.f32 %v2799, 1.1283791
        %v2801 = vmul.f32 %v2734, %v2800
        %v2802 = vmul.f32 %v2790, 3.8918573e-05
        %v2803 = vadd.f32 %v2802, 0.001143296
        %v2804 = vmul.f32 %v2790, %v2803
        %v2805 = vadd.f32 %v2804, 0.014752088
        %v2806 = vmul.f32 %v2790, %v2805
        %v2807 = vadd.f32 %v2806, 0.112945676
        %v2808 = vmul.f32 %v2790, %v2807
        %v2809 = vadd.f32 %v2808, 0.4994258
        %v2810 = vmul.f32 %v2790, %v2809
        %v2811 = vadd.f32 %v2810, 1.0
        %v2812 = vrcp.pop %v2811
        %v2813 = vmul.f32 %v2811, %v2812
        %v2814 = vsub.f32 1.0, %v2813
        %v2815 = vmul.f32 %v2812, %v2814
        %v2816 = vadd.f32 %v2812, %v2815
        %vm2817 = vweird.f32 %v2811
        %vm2818 = vweird.f32 %v2812
        %vm2819 = vmor %vm2817, %vm2818
        %v2820 = vsel %vm2819, %v2812, %v2816
        %v2821 = vand.u32 2147483647, %v2811
        %vm2822 = vcmp.eq.f32.partialorder %v2821, 8.507059e+37
        %v2823 = vand.u32 %v2811, 2147483648
        %v2824 = vor.u32 1.1754944e-38, %v2823
        %v2825 = vsel %vm2822, %v2824, %v2820
        %v2826 = vmul.f32 %v2801, %v2825
        %v2827 = vmin.f32 %v2826, 1.0
        %v2828 = vmax.f32 %v2827, -1.0
        %v2829 = vmul.f32 %v2735, %v2735
        %v2830 = vmin.f32 16.0, %v2829
        %v2831 = vmul.f32 %v2830, 2.1237322e-06
        %v2832 = vadd.f32 %v2831, 0.00028619796
        %v2833 = vmul.f32 %v2830, %v2832
        %v2834 = vadd.f32 %v2833, 0.0036580483
        %v2835 = vmul.f32 %v2830, %v2834
        %v2836 = vadd.f32 %v2835, 0.05243302
        %v2837 = vmul.f32 %v2830, %v2836
        %v2838 = vadd.f32 %v2837, 0.18741608
        %v2839 = vmul.f32 %v2830, %v2838
        %v2840 = vadd.f32 %v2839, 1.1283791
        %v2841 = vmul.f32 %v2735, %v2840
        %v2842 = vmul.f32 %v2830, 3.8918573e-05
        %v2843 = vadd.f32 %v2842, 0.001143296
        %v2844 = vmul.f32 %v2830, %v2843
        %v2845 = vadd.f32 %v2844, 0.014752088
        %v2846 = vmul.f32 %v2830, %v2845
        %v2847 = vadd.f32 %v2846, 0.112945676
        %v2848 = vmul.f32 %v2830, %v2847
        %v2849 = vadd.f32 %v2848, 0.4994258
        %v2850 = vmul.f32 %v2830, %v2849
        %v2851 = vadd.f32 %v2850, 1.0
        %v2852 = vrcp.pop %v2851
        %v2853 = vmul.f32 %v2851, %v2852
        %v2854 = vsub.f32 1.0, %v2853
        %v2855 = vmul.f32 %v2852, %v2854
        %v2856 = vadd.f32 %v2852, %v2855
        %vm2857 = vweird.f32 %v2851
        %vm2858 = vweird.f32 %v2852
        %vm2859 = vmor %vm2857, %vm2858
        %v2860 = vsel %vm2859, %v2852, %v2856
        %v2861 = vand.u32 2147483647, %v2851
        %vm2862 = vcmp.eq.f32.partialorder %v2861, 8.507059e+37
        %v2863 = vand.u32 %v2851, 2147483648
        %v2864 = vor.u32 1.1754944e-38, %v2863
        %v2865 = vsel %vm2862, %v2864, %v2860
        %v2866 = vmul.f32 %v2841, %v2865
        %v2867 = vmin.f32 %v2866, 1.0
        %v2868 = vmax.f32 %v2867, -1.0
        %v2869 = vmul.f32 %v2736, %v2736
        %v2870 = vmin.f32 16.0, %v2869
        %v2871 = vmul.f32 %v2870, 2.1237322e-06
        %v2872 = vadd.f32 %v2871, 0.00028619796
        %v2873 = vmul.f32 %v2870, %v2872
        %v2874 = vadd.f32 %v2873, 0.0036580483
        %v2875 = vmul.f32 %v2870, %v2874
        %v2876 = vadd.f32 %v2875, 0.05243302
        %v2877 = vmul.f32 %v2870, %v2876
        %v2878 = vadd.f32 %v2877, 0.18741608
        %v2879 = vmul.f32 %v2870, %v2878
        %v2880 = vadd.f32 %v2879, 1.1283791
        %v2881 = vmul.f32 %v2736, %v2880
        %v2882 = vmul.f32 %v2870, 3.8918573e-05
        %v2883 = vadd.f32 %v2882, 0.001143296
        %v2884 = vmul.f32 %v2870, %v2883
        %v2885 = vadd.f32 %v2884, 0.014752088
        %v2886 = vmul.f32 %v2870, %v2885
        %v2887 = vadd.f32 %v2886, 0.112945676
        %v2888 = vmul.f32 %v2870, %v2887
        %v2889 = vadd.f32 %v2888, 0.4994258
        %v2890 = vmul.f32 %v2870, %v2889
        %v2891 = vadd.f32 %v2890, 1.0
        %v2892 = vrcp.pop %v2891
        %v2893 = vmul.f32 %v2891, %v2892
        %v2894 = vsub.f32 1.0, %v2893
        %v2895 = vmul.f32 %v2892, %v2894
        %v2896 = vadd.f32 %v2892, %v2895
        %vm2897 = vweird.f32 %v2891
        %vm2898 = vweird.f32 %v2892
        %vm2899 = vmor %vm2897, %vm2898
        %v2900 = vsel %vm2899, %v2892, %v2896
        %v2901 = vand.u32 2147483647, %v2891
        %vm2902 = vcmp.eq.f32.partialorder %v2901, 8.507059e+37
        %v2903 = vand.u32 %v2891, 2147483648
        %v2904 = vor.u32 1.1754944e-38, %v2903
        %v2905 = vsel %vm2902, %v2904, %v2900
        %v2906 = vmul.f32 %v2881, %v2905
        %v2907 = vmin.f32 %v2906, 1.0
        %v2908 = vmax.f32 %v2907, -1.0
        %v2909 = vmul.f32 %v2737, %v2737
        %v2910 = vmin.f32 16.0, %v2909
        %v2911 = vmul.f32 %v2910, 2.1237322e-06
        %v2912 = vadd.f32 %v2911, 0.00028619796
        %v2913 = vmul.f32 %v2910, %v2912
        %v2914 = vadd.f32 %v2913, 0.0036580483
        %v2915 = vmul.f32 %v2910, %v2914
        %v2916 = vadd.f32 %v2915, 0.05243302
        %v2917 = vmul.f32 %v2910, %v2916
        %v2918 = vadd.f32 %v2917, 0.18741608
        %v2919 = vmul.f32 %v2910, %v2918
        %v2920 = vadd.f32 %v2919, 1.1283791
        %v2921 = vmul.f32 %v2737, %v2920
        %v2922 = vmul.f32 %v2910, 3.8918573e-05
        %v2923 = vadd.f32 %v2922, 0.001143296
        %v2924 = vmul.f32 %v2910, %v2923
        %v2925 = vadd.f32 %v2924, 0.014752088
        %v2926 = vmul.f32 %v2910, %v2925
        %v2927 = vadd.f32 %v2926, 0.112945676
        %v2928 = vmul.f32 %v2910, %v2927
        %v2929 = vadd.f32 %v2928, 0.4994258
        %v2930 = vmul.f32 %v2910, %v2929
        %v2931 = vadd.f32 %v2930, 1.0
        %v2932 = vrcp.pop %v2931
        %v2933 = vmul.f32 %v2931, %v2932
        %v2934 = vsub.f32 1.0, %v2933
        %v2935 = vmul.f32 %v2932, %v2934
        %v2936 = vadd.f32 %v2932, %v2935
        %vm2937 = vweird.f32 %v2931
        %vm2938 = vweird.f32 %v2932
        %vm2939 = vmor %vm2937, %vm2938
        %v2940 = vsel %vm2939, %v2932, %v2936
        %v2941 = vand.u32 2147483647, %v2931
        %vm2942 = vcmp.eq.f32.partialorder %v2941, 8.507059e+37
        %v2943 = vand.u32 %v2931, 2147483648
        %v2944 = vor.u32 1.1754944e-38, %v2943
        %v2945 = vsel %vm2942, %v2944, %v2940
        %v2946 = vmul.f32 %v2921, %v2945
        %v2947 = vmin.f32 %v2946, 1.0
        %v2948 = vmax.f32 %v2947, -1.0
        %v2949 = vmul.f32 %v2738, %v2738
        %v2950 = vmin.f32 16.0, %v2949
        %v2951 = vmul.f32 %v2950, 2.1237322e-06
        %v2952 = vadd.f32 %v2951, 0.00028619796
        %v2953 = vmul.f32 %v2950, %v2952
        %v2954 = vadd.f32 %v2953, 0.0036580483
        %v2955 = vmul.f32 %v2950, %v2954
        %v2956 = vadd.f32 %v2955, 0.05243302
        %v2957 = vmul.f32 %v2950, %v2956
        %v2958 = vadd.f32 %v2957, 0.18741608
        %v2959 = vmul.f32 %v2950, %v2958
        %v2960 = vadd.f32 %v2959, 1.1283791
        %v2961 = vmul.f32 %v2738, %v2960
        %v2962 = vmul.f32 %v2950, 3.8918573e-05
        %v2963 = vadd.f32 %v2962, 0.001143296
        %v2964 = vmul.f32 %v2950, %v2963
        %v2965 = vadd.f32 %v2964, 0.014752088
        %v2966 = vmul.f32 %v2950, %v2965
        %v2967 = vadd.f32 %v2966, 0.112945676
        %v2968 = vmul.f32 %v2950, %v2967
        %v2969 = vadd.f32 %v2968, 0.4994258
        %v2970 = vmul.f32 %v2950, %v2969
        %v2971 = vadd.f32 %v2970, 1.0
        %v2972 = vrcp.pop %v2971
        %v2973 = vmul.f32 %v2971, %v2972
        %v2974 = vsub.f32 1.0, %v2973
        %v2975 = vmul.f32 %v2972, %v2974
        %v2976 = vadd.f32 %v2972, %v2975
        %vm2977 = vweird.f32 %v2971
        %vm2978 = vweird.f32 %v2972
        %vm2979 = vmor %vm2977, %vm2978
        %v2980 = vsel %vm2979, %v2972, %v2976
        %v2981 = vand.u32 2147483647, %v2971
        %vm2982 = vcmp.eq.f32.partialorder %v2981, 8.507059e+37
        %v2983 = vand.u32 %v2971, 2147483648
        %v2984 = vor.u32 1.1754944e-38, %v2983
        %v2985 = vsel %vm2982, %v2984, %v2980
        %v2986 = vmul.f32 %v2961, %v2985
        %v2987 = vmin.f32 %v2986, 1.0
        %v2988 = vmax.f32 %v2987, -1.0
        %v2989 = vmul.f32 %v2739, %v2739
        %v2990 = vmin.f32 16.0, %v2989
        %v2991 = vmul.f32 %v2990, 2.1237322e-06
        %v2992 = vadd.f32 %v2991, 0.00028619796
        %v2993 = vmul.f32 %v2990, %v2992
        %v2994 = vadd.f32 %v2993, 0.0036580483
        %v2995 = vmul.f32 %v2990, %v2994
        %v2996 = vadd.f32 %v2995, 0.05243302
        %v2997 = vmul.f32 %v2990, %v2996
        %v2998 = vadd.f32 %v2997, 0.18741608
        %v2999 = vmul.f32 %v2990, %v2998
        %v3000 = vadd.f32 %v2999, 1.1283791
        %v3001 = vmul.f32 %v2739, %v3000
        %v3002 = vmul.f32 %v2990, 3.8918573e-05
        %v3003 = vadd.f32 %v3002, 0.001143296
        %v3004 = vmul.f32 %v2990, %v3003
        %v3005 = vadd.f32 %v3004, 0.014752088
        %v3006 = vmul.f32 %v2990, %v3005
        %v3007 = vadd.f32 %v3006, 0.112945676
        %v3008 = vmul.f32 %v2990, %v3007
        %v3009 = vadd.f32 %v3008, 0.4994258
        %v3010 = vmul.f32 %v2990, %v3009
        %v3011 = vadd.f32 %v3010, 1.0
        %v3012 = vrcp.pop %v3011
        %v3013 = vmul.f32 %v3011, %v3012
        %v3014 = vsub.f32 1.0, %v3013
        %v3015 = vmul.f32 %v3012, %v3014
        %v3016 = vadd.f32 %v3012, %v3015
        %vm3017 = vweird.f32 %v3011
        %vm3018 = vweird.f32 %v3012
        %vm3019 = vmor %vm3017, %vm3018
        %v3020 = vsel %vm3019, %v3012, %v3016
        %v3021 = vand.u32 2147483647, %v3011
        %vm3022 = vcmp.eq.f32.partialorder %v3021, 8.507059e+37
        %v3023 = vand.u32 %v3011, 2147483648
        %v3024 = vor.u32 1.1754944e-38, %v3023
        %v3025 = vsel %vm3022, %v3024, %v3020
        %v3026 = vmul.f32 %v3001, %v3025
        %v3027 = vmin.f32 %v3026, 1.0
        %v3028 = vmax.f32 %v3027, -1.0
        %v3029 = vmul.f32 %v2740, %v2740
        %v3030 = vmin.f32 16.0, %v3029
        %v3031 = vmul.f32 %v3030, 2.1237322e-06
        %v3032 = vadd.f32 %v3031, 0.00028619796
        %v3033 = vmul.f32 %v3030, %v3032
        %v3034 = vadd.f32 %v3033, 0.0036580483
        %v3035 = vmul.f32 %v3030, %v3034
        %v3036 = vadd.f32 %v3035, 0.05243302
        %v3037 = vmul.f32 %v3030, %v3036
        %v3038 = vadd.f32 %v3037, 0.18741608
        %v3039 = vmul.f32 %v3030, %v3038
        %v3040 = vadd.f32 %v3039, 1.1283791
        %v3041 = vmul.f32 %v2740, %v3040
        %v3042 = vmul.f32 %v3030, 3.8918573e-05
        %v3043 = vadd.f32 %v3042, 0.001143296
        %v3044 = vmul.f32 %v3030, %v3043
        %v3045 = vadd.f32 %v3044, 0.014752088
        %v3046 = vmul.f32 %v3030, %v3045
        %v3047 = vadd.f32 %v3046, 0.112945676
        %v3048 = vmul.f32 %v3030, %v3047
        %v3049 = vadd.f32 %v3048, 0.4994258
        %v3050 = vmul.f32 %v3030, %v3049
        %v3051 = vadd.f32 %v3050, 1.0
        %v3052 = vrcp.pop %v3051
        %v3053 = vmul.f32 %v3051, %v3052
        %v3054 = vsub.f32 1.0, %v3053
        %v3055 = vmul.f32 %v3052, %v3054
        %v3056 = vadd.f32 %v3052, %v3055
        %vm3057 = vweird.f32 %v3051
        %vm3058 = vweird.f32 %v3052
        %vm3059 = vmor %vm3057, %vm3058
        %v3060 = vsel %vm3059, %v3052, %v3056
        %v3061 = vand.u32 2147483647, %v3051
        %vm3062 = vcmp.eq.f32.partialorder %v3061, 8.507059e+37
        %v3063 = vand.u32 %v3051, 2147483648
        %v3064 = vor.u32 1.1754944e-38, %v3063
        %v3065 = vsel %vm3062, %v3064, %v3060
        %v3066 = vmul.f32 %v3041, %v3065
        %v3067 = vmin.f32 %v3066, 1.0
        %v3068 = vmax.f32 %v3067, -1.0
        %v3069 = vmul.f32 %v2741, %v2741
        %v3070 = vmin.f32 16.0, %v3069
        %v3071 = vmul.f32 %v3070, 2.1237322e-06
        %v3072 = vadd.f32 %v3071, 0.00028619796
        %v3073 = vmul.f32 %v3070, %v3072
        %v3074 = vadd.f32 %v3073, 0.0036580483
        %v3075 = vmul.f32 %v3070, %v3074
        %v3076 = vadd.f32 %v3075, 0.05243302
        %v3077 = vmul.f32 %v3070, %v3076
        %v3078 = vadd.f32 %v3077, 0.18741608
        %v3079 = vmul.f32 %v3070, %v3078
        %v3080 = vadd.f32 %v3079, 1.1283791
        %v3081 = vmul.f32 %v2741, %v3080
        %v3082 = vmul.f32 %v3070, 3.8918573e-05
        %v3083 = vadd.f32 %v3082, 0.001143296
        %v3084 = vmul.f32 %v3070, %v3083
        %v3085 = vadd.f32 %v3084, 0.014752088
        %v3086 = vmul.f32 %v3070, %v3085
        %v3087 = vadd.f32 %v3086, 0.112945676
        %v3088 = vmul.f32 %v3070, %v3087
        %v3089 = vadd.f32 %v3088, 0.4994258
        %v3090 = vmul.f32 %v3070, %v3089
        %v3091 = vadd.f32 %v3090, 1.0
        %v3092 = vrcp.pop %v3091
        %v3093 = vmul.f32 %v3091, %v3092
        %v3094 = vsub.f32 1.0, %v3093
        %v3095 = vmul.f32 %v3092, %v3094
        %v3096 = vadd.f32 %v3092, %v3095
        %vm3097 = vweird.f32 %v3091
        %vm3098 = vweird.f32 %v3092
        %vm3099 = vmor %vm3097, %vm3098
        %v3100 = vsel %vm3099, %v3092, %v3096
        %v3101 = vand.u32 2147483647, %v3091
        %vm3102 = vcmp.eq.f32.partialorder %v3101, 8.507059e+37
        %v3103 = vand.u32 %v3091, 2147483648
        %v3104 = vor.u32 1.1754944e-38, %v3103
        %v3105 = vsel %vm3102, %v3104, %v3100
        %v3106 = vmul.f32 %v3081, %v3105
        %v3107 = vmin.f32 %v3106, 1.0
        %v3108 = vmax.f32 %v3107, -1.0
        %v3109 = vmul.f32 %v2742, %v2742
        %v3110 = vmin.f32 16.0, %v3109
        %v3111 = vmul.f32 %v3110, 2.1237322e-06
        %v3112 = vadd.f32 %v3111, 0.00028619796
        %v3113 = vmul.f32 %v3110, %v3112
        %v3114 = vadd.f32 %v3113, 0.0036580483
        %v3115 = vmul.f32 %v3110, %v3114
        %v3116 = vadd.f32 %v3115, 0.05243302
        %v3117 = vmul.f32 %v3110, %v3116
        %v3118 = vadd.f32 %v3117, 0.18741608
        %v3119 = vmul.f32 %v3110, %v3118
        %v3120 = vadd.f32 %v3119, 1.1283791
        %v3121 = vmul.f32 %v2742, %v3120
        %v3122 = vmul.f32 %v3110, 3.8918573e-05
        %v3123 = vadd.f32 %v3122, 0.001143296
        %v3124 = vmul.f32 %v3110, %v3123
        %v3125 = vadd.f32 %v3124, 0.014752088
        %v3126 = vmul.f32 %v3110, %v3125
        %v3127 = vadd.f32 %v3126, 0.112945676
        %v3128 = vmul.f32 %v3110, %v3127
        %v3129 = vadd.f32 %v3128, 0.4994258
        %v3130 = vmul.f32 %v3110, %v3129
        %v3131 = vadd.f32 %v3130, 1.0
        %v3132 = vrcp.pop %v3131
        %v3133 = vmul.f32 %v3131, %v3132
        %v3134 = vsub.f32 1.0, %v3133
        %v3135 = vmul.f32 %v3132, %v3134
        %v3136 = vadd.f32 %v3132, %v3135
        %vm3137 = vweird.f32 %v3131
        %vm3138 = vweird.f32 %v3132
        %vm3139 = vmor %vm3137, %vm3138
        %v3140 = vsel %vm3139, %v3132, %v3136
        %v3141 = vand.u32 2147483647, %v3131
        %vm3142 = vcmp.eq.f32.partialorder %v3141, 8.507059e+37
        %v3143 = vand.u32 %v3131, 2147483648
        %v3144 = vor.u32 1.1754944e-38, %v3143
        %v3145 = vsel %vm3142, %v3144, %v3140
        %v3146 = vmul.f32 %v3121, %v3145
        %v3147 = vmin.f32 %v3146, 1.0
        %v3148 = vmax.f32 %v3147, -1.0
        %v3149 = vmul.f32 %v2743, %v2743
        %v3150 = vmin.f32 16.0, %v3149
        %v3151 = vmul.f32 %v3150, 2.1237322e-06
        %v3152 = vadd.f32 %v3151, 0.00028619796
        %v3153 = vmul.f32 %v3150, %v3152
        %v3154 = vadd.f32 %v3153, 0.0036580483
        %v3155 = vmul.f32 %v3150, %v3154
        %v3156 = vadd.f32 %v3155, 0.05243302
        %v3157 = vmul.f32 %v3150, %v3156
        %v3158 = vadd.f32 %v3157, 0.18741608
        %v3159 = vmul.f32 %v3150, %v3158
        %v3160 = vadd.f32 %v3159, 1.1283791
        %v3161 = vmul.f32 %v2743, %v3160
        %v3162 = vmul.f32 %v3150, 3.8918573e-05
        %v3163 = vadd.f32 %v3162, 0.001143296
        %v3164 = vmul.f32 %v3150, %v3163
        %v3165 = vadd.f32 %v3164, 0.014752088
        %v3166 = vmul.f32 %v3150, %v3165
        %v3167 = vadd.f32 %v3166, 0.112945676
        %v3168 = vmul.f32 %v3150, %v3167
        %v3169 = vadd.f32 %v3168, 0.4994258
        %v3170 = vmul.f32 %v3150, %v3169
        %v3171 = vadd.f32 %v3170, 1.0
        %v3172 = vrcp.pop %v3171
        %v3173 = vmul.f32 %v3171, %v3172
        %v3174 = vsub.f32 1.0, %v3173
        %v3175 = vmul.f32 %v3172, %v3174
        %v3176 = vadd.f32 %v3172, %v3175
        %vm3177 = vweird.f32 %v3171
        %vm3178 = vweird.f32 %v3172
        %vm3179 = vmor %vm3177, %vm3178
        %v3180 = vsel %vm3179, %v3172, %v3176
        %v3181 = vand.u32 2147483647, %v3171
        %vm3182 = vcmp.eq.f32.partialorder %v3181, 8.507059e+37
        %v3183 = vand.u32 %v3171, 2147483648
        %v3184 = vor.u32 1.1754944e-38, %v3183
        %v3185 = vsel %vm3182, %v3184, %v3180
        %v3186 = vmul.f32 %v3161, %v3185
        %v3187 = vmin.f32 %v3186, 1.0
        %v3188 = vmax.f32 %v3187, -1.0
        %v3189 = vmul.f32 %v2744, %v2744
        %v3190 = vmin.f32 16.0, %v3189
        %v3191 = vmul.f32 %v3190, 2.1237322e-06
        %v3192 = vadd.f32 %v3191, 0.00028619796
        %v3193 = vmul.f32 %v3190, %v3192
        %v3194 = vadd.f32 %v3193, 0.0036580483
        %v3195 = vmul.f32 %v3190, %v3194
        %v3196 = vadd.f32 %v3195, 0.05243302
        %v3197 = vmul.f32 %v3190, %v3196
        %v3198 = vadd.f32 %v3197, 0.18741608
        %v3199 = vmul.f32 %v3190, %v3198
        %v3200 = vadd.f32 %v3199, 1.1283791
        %v3201 = vmul.f32 %v2744, %v3200
        %v3202 = vmul.f32 %v3190, 3.8918573e-05
        %v3203 = vadd.f32 %v3202, 0.001143296
        %v3204 = vmul.f32 %v3190, %v3203
        %v3205 = vadd.f32 %v3204, 0.014752088
        %v3206 = vmul.f32 %v3190, %v3205
        %v3207 = vadd.f32 %v3206, 0.112945676
        %v3208 = vmul.f32 %v3190, %v3207
        %v3209 = vadd.f32 %v3208, 0.4994258
        %v3210 = vmul.f32 %v3190, %v3209
        %v3211 = vadd.f32 %v3210, 1.0
        %v3212 = vrcp.pop %v3211
        %v3213 = vmul.f32 %v3211, %v3212
        %v3214 = vsub.f32 1.0, %v3213
        %v3215 = vmul.f32 %v3212, %v3214
        %v3216 = vadd.f32 %v3212, %v3215
        %vm3217 = vweird.f32 %v3211
        %vm3218 = vweird.f32 %v3212
        %vm3219 = vmor %vm3217, %vm3218
        %v3220 = vsel %vm3219, %v3212, %v3216
        %v3221 = vand.u32 2147483647, %v3211
        %vm3222 = vcmp.eq.f32.partialorder %v3221, 8.507059e+37
        %v3223 = vand.u32 %v3211, 2147483648
        %v3224 = vor.u32 1.1754944e-38, %v3223
        %v3225 = vsel %vm3222, %v3224, %v3220
        %v3226 = vmul.f32 %v3201, %v3225
        %v3227 = vmin.f32 %v3226, 1.0
        %v3228 = vmax.f32 %v3227, -1.0
        %v3229 = vmul.f32 %v2745, %v2745
        %v3230 = vmin.f32 16.0, %v3229
        %v3231 = vmul.f32 %v3230, 2.1237322e-06
        %v3232 = vadd.f32 %v3231, 0.00028619796
        %v3233 = vmul.f32 %v3230, %v3232
        %v3234 = vadd.f32 %v3233, 0.0036580483
        %v3235 = vmul.f32 %v3230, %v3234
        %v3236 = vadd.f32 %v3235, 0.05243302
        %v3237 = vmul.f32 %v3230, %v3236
        %v3238 = vadd.f32 %v3237, 0.18741608
        %v3239 = vmul.f32 %v3230, %v3238
        %v3240 = vadd.f32 %v3239, 1.1283791
        %v3241 = vmul.f32 %v2745, %v3240
        %v3242 = vmul.f32 %v3230, 3.8918573e-05
        %v3243 = vadd.f32 %v3242, 0.001143296
        %v3244 = vmul.f32 %v3230, %v3243
        %v3245 = vadd.f32 %v3244, 0.014752088
        %v3246 = vmul.f32 %v3230, %v3245
        %v3247 = vadd.f32 %v3246, 0.112945676
        %v3248 = vmul.f32 %v3230, %v3247
        %v3249 = vadd.f32 %v3248, 0.4994258
        %v3250 = vmul.f32 %v3230, %v3249
        %v3251 = vadd.f32 %v3250, 1.0
        %v3252 = vrcp.pop %v3251
        %v3253 = vmul.f32 %v3251, %v3252
        %v3254 = vsub.f32 1.0, %v3253
        %v3255 = vmul.f32 %v3252, %v3254
        %v3256 = vadd.f32 %v3252, %v3255
        %vm3257 = vweird.f32 %v3251
        %vm3258 = vweird.f32 %v3252
        %vm3259 = vmor %vm3257, %vm3258
        %v3260 = vsel %vm3259, %v3252, %v3256
        %v3261 = vand.u32 2147483647, %v3251
        %vm3262 = vcmp.eq.f32.partialorder %v3261, 8.507059e+37
        %v3263 = vand.u32 %v3251, 2147483648
        %v3264 = vor.u32 1.1754944e-38, %v3263
        %v3265 = vsel %vm3262, %v3264, %v3260
        %v3266 = vmul.f32 %v3241, %v3265
        %v3267 = vmin.f32 %v3266, 1.0
        %v3268 = vmax.f32 %v3267, -1.0
        %v3269 = vmul.f32 %v2746, %v2746
        %v3270 = vmin.f32 16.0, %v3269
        %v3271 = vmul.f32 %v3270, 2.1237322e-06
        %v3272 = vadd.f32 %v3271, 0.00028619796
        %v3273 = vmul.f32 %v3270, %v3272
        %v3274 = vadd.f32 %v3273, 0.0036580483
        %v3275 = vmul.f32 %v3270, %v3274
        %v3276 = vadd.f32 %v3275, 0.05243302
        %v3277 = vmul.f32 %v3270, %v3276
        %v3278 = vadd.f32 %v3277, 0.18741608
        %v3279 = vmul.f32 %v3270, %v3278
        %v3280 = vadd.f32 %v3279, 1.1283791
        %v3281 = vmul.f32 %v2746, %v3280
        %v3282 = vmul.f32 %v3270, 3.8918573e-05
        %v3283 = vadd.f32 %v3282, 0.001143296
        %v3284 = vmul.f32 %v3270, %v3283
        %v3285 = vadd.f32 %v3284, 0.014752088
        %v3286 = vmul.f32 %v3270, %v3285
        %v3287 = vadd.f32 %v3286, 0.112945676
        %v3288 = vmul.f32 %v3270, %v3287
        %v3289 = vadd.f32 %v3288, 0.4994258
        %v3290 = vmul.f32 %v3270, %v3289
        %v3291 = vadd.f32 %v3290, 1.0
        %v3292 = vrcp.pop %v3291
        %v3293 = vmul.f32 %v3291, %v3292
        %v3294 = vsub.f32 1.0, %v3293
        %v3295 = vmul.f32 %v3292, %v3294
        %v3296 = vadd.f32 %v3292, %v3295
        %vm3297 = vweird.f32 %v3291
        %vm3298 = vweird.f32 %v3292
        %vm3299 = vmor %vm3297, %vm3298
        %v3300 = vsel %vm3299, %v3292, %v3296
        %v3301 = vand.u32 2147483647, %v3291
        %vm3302 = vcmp.eq.f32.partialorder %v3301, 8.507059e+37
        %v3303 = vand.u32 %v3291, 2147483648
        %v3304 = vor.u32 1.1754944e-38, %v3303
        %v3305 = vsel %vm3302, %v3304, %v3300
        %v3306 = vmul.f32 %v3281, %v3305
        %v3307 = vmin.f32 %v3306, 1.0
        %v3308 = vmax.f32 %v3307, -1.0
        %v3309 = vmul.f32 %v2747, %v2747
        %v3310 = vmin.f32 16.0, %v3309
        %v3311 = vmul.f32 %v3310, 2.1237322e-06
        %v3312 = vadd.f32 %v3311, 0.00028619796
        %v3313 = vmul.f32 %v3310, %v3312
        %v3314 = vadd.f32 %v3313, 0.0036580483
        %v3315 = vmul.f32 %v3310, %v3314
        %v3316 = vadd.f32 %v3315, 0.05243302
        %v3317 = vmul.f32 %v3310, %v3316
        %v3318 = vadd.f32 %v3317, 0.18741608
        %v3319 = vmul.f32 %v3310, %v3318
        %v3320 = vadd.f32 %v3319, 1.1283791
        %v3321 = vmul.f32 %v2747, %v3320
        %v3322 = vmul.f32 %v3310, 3.8918573e-05
        %v3323 = vadd.f32 %v3322, 0.001143296
        %v3324 = vmul.f32 %v3310, %v3323
        %v3325 = vadd.f32 %v3324, 0.014752088
        %v3326 = vmul.f32 %v3310, %v3325
        %v3327 = vadd.f32 %v3326, 0.112945676
        %v3328 = vmul.f32 %v3310, %v3327
        %v3329 = vadd.f32 %v3328, 0.4994258
        %v3330 = vmul.f32 %v3310, %v3329
        %v3331 = vadd.f32 %v3330, 1.0
        %v3332 = vrcp.pop %v3331
        %v3333 = vmul.f32 %v3331, %v3332
        %v3334 = vsub.f32 1.0, %v3333
        %v3335 = vmul.f32 %v3332, %v3334
        %v3336 = vadd.f32 %v3332, %v3335
        %vm3337 = vweird.f32 %v3331
        %vm3338 = vweird.f32 %v3332
        %vm3339 = vmor %vm3337, %vm3338
        %v3340 = vsel %vm3339, %v3332, %v3336
        %v3341 = vand.u32 2147483647, %v3331
        %vm3342 = vcmp.eq.f32.partialorder %v3341, 8.507059e+37
        %v3343 = vand.u32 %v3331, 2147483648
        %v3344 = vor.u32 1.1754944e-38, %v3343
        %v3345 = vsel %vm3342, %v3344, %v3340
        %v3346 = vmul.f32 %v3321, %v3345
        %v3347 = vmin.f32 %v3346, 1.0
        %v3348 = vmax.f32 %v3347, -1.0
        %v3349 = vmul.f32 %v2748, %v2748
        %v3350 = vmin.f32 16.0, %v3349
        %v3351 = vmul.f32 %v3350, 2.1237322e-06
        %v3352 = vadd.f32 %v3351, 0.00028619796
        %v3353 = vmul.f32 %v3350, %v3352
        %v3354 = vadd.f32 %v3353, 0.0036580483
        %v3355 = vmul.f32 %v3350, %v3354
        %v3356 = vadd.f32 %v3355, 0.05243302
        %v3357 = vmul.f32 %v3350, %v3356
        %v3358 = vadd.f32 %v3357, 0.18741608
        %v3359 = vmul.f32 %v3350, %v3358
        %v3360 = vadd.f32 %v3359, 1.1283791
        %v3361 = vmul.f32 %v2748, %v3360
        %v3362 = vmul.f32 %v3350, 3.8918573e-05
        %v3363 = vadd.f32 %v3362, 0.001143296
        %v3364 = vmul.f32 %v3350, %v3363
        %v3365 = vadd.f32 %v3364, 0.014752088
        %v3366 = vmul.f32 %v3350, %v3365
        %v3367 = vadd.f32 %v3366, 0.112945676
        %v3368 = vmul.f32 %v3350, %v3367
        %v3369 = vadd.f32 %v3368, 0.4994258
        %v3370 = vmul.f32 %v3350, %v3369
        %v3371 = vadd.f32 %v3370, 1.0
        %v3372 = vrcp.pop %v3371
        %v3373 = vmul.f32 %v3371, %v3372
        %v3374 = vsub.f32 1.0, %v3373
        %v3375 = vmul.f32 %v3372, %v3374
        %v3376 = vadd.f32 %v3372, %v3375
        %vm3377 = vweird.f32 %v3371
        %vm3378 = vweird.f32 %v3372
        %vm3379 = vmor %vm3377, %vm3378
        %v3380 = vsel %vm3379, %v3372, %v3376
        %v3381 = vand.u32 2147483647, %v3371
        %vm3382 = vcmp.eq.f32.partialorder %v3381, 8.507059e+37
        %v3383 = vand.u32 %v3371, 2147483648
        %v3384 = vor.u32 1.1754944e-38, %v3383
        %v3385 = vsel %vm3382, %v3384, %v3380
        %v3386 = vmul.f32 %v3361, %v3385
        %v3387 = vmin.f32 %v3386, 1.0
        %v3388 = vmax.f32 %v3387, -1.0
        %v3389 = vadd.f32 %v2788, 1.0
        %v3390 = vadd.f32 %v2828, 1.0
        %v3391 = vadd.f32 %v2868, 1.0
        %v3392 = vadd.f32 %v2908, 1.0
        %v3393 = vadd.f32 %v2948, 1.0
        %v3394 = vadd.f32 %v2988, 1.0
        %v3395 = vadd.f32 %v3028, 1.0
        %v3396 = vadd.f32 %v3068, 1.0
        %v3397 = vadd.f32 %v3108, 1.0
        %v3398 = vadd.f32 %v3148, 1.0
        %v3399 = vadd.f32 %v3188, 1.0
        %v3400 = vadd.f32 %v3228, 1.0
        %v3401 = vadd.f32 %v3268, 1.0
        %v3402 = vadd.f32 %v3308, 1.0
        %v3403 = vadd.f32 %v3348, 1.0
        %v3404 = vadd.f32 %v3388, 1.0
        %v3405 = vmul.f32 %v2717, %v3389
        %v3406 = vmul.f32 %v2718, %v3390
        %v3407 = vmul.f32 %v2719, %v3391
        %v3408 = vmul.f32 %v2720, %v3392
        %v3409 = vmul.f32 %v2721, %v3393
        %v3410 = vmul.f32 %v2722, %v3394
        %v3411 = vmul.f32 %v2723, %v3395
        %v3412 = vmul.f32 %v2724, %v3396
        %v3413 = vmul.f32 %v2725, %v3397
        %v3414 = vmul.f32 %v2726, %v3398
        %v3415 = vmul.f32 %v2727, %v3399
        %v3416 = vmul.f32 %v2728, %v3400
        %v3417 = vmul.f32 %v2729, %v3401
        %v3418 = vmul.f32 %v2730, %v3402
        %v3419 = vmul.f32 %v2731, %v3403
        %v3420 = vmul.f32 %v2732, %v3404
        %v3421 = vsel %vm761, %v2129, %v3405
        %v3422 = vsel %vm761, %v2130, %v3406
        %v3423 = vsel %vm761, %v2131, %v3407
        %v3424 = vsel %vm761, %v2132, %v3408
        %v3425 = vsel %vm761, %v2133, %v3409
        %v3426 = vsel %vm761, %v2134, %v3410
        %v3427 = vsel %vm761, %v2135, %v3411
        %v3428 = vsel %vm761, %v2136, %v3412
        %v3429 = vsel %vm761, %v2137, %v3413
        %v3430 = vsel %vm761, %v2138, %v3414
        %v3431 = vsel %vm761, %v2139, %v3415
        %v3432 = vsel %vm761, %v2140, %v3416
        %v3433 = vsel %vm761, %v2141, %v3417
        %v3434 = vsel %vm761, %v2142, %v3418
        %v3435 = vsel %vm761, %v2143, %v3419
        %v3436 = vsel %vm761, %v2144, %v3420
        %s3437 = scalar_lea.vmem %s1, 40
        %v3438 = vld [vmem:[%s3437] sm:$0xff]
        %v3439 = vld [vmem:[%s3437 + $0x8] sm:$0xff]
        %v3440 = vld [vmem:[%s3437 + $0x10] sm:$0xff]
        %v3441 = vld [vmem:[%s3437 + $0x18] sm:$0xff]
        %v3442 = vld [vmem:[%s3437 + $0x20] sm:$0xf]
        %v3444 = vsel %vm937, %v3442, 0
        %3446 = vmatpush.msra.mxu0 0.0
        %3447 = vmatpush.msra.mxu0 0.0
        %3448 = vmatpush.msra.mxu0 0.0
        %3449 = vmatpush.msra.mxu0 0.0
        %3450 = vmatpush.msra.mxu0 0.0
        %3451 = vmatpush.msra.mxu0 0.0
        %3452 = vmatpush.msra.mxu0 0.0
        %3453 = vmatpush.msra.mxu0 0.0
        %3454 = vmatpush.msra.mxu0 0.0
        %3455 = vmatpush.msra.mxu0 0.0
        %3456 = vmatpush.msra.mxu0 0.0
        %3457 = vmatpush.msra.mxu0 %v3444
        %3458 = vmatpush.msra.mxu0 %v3441
        %3459 = vmatpush.msra.mxu0 %v3440
        %3460 = vmatpush.msra.mxu0 %v3439
        %3461 = vmatpush.msra.mxu0 %v3438
        %3462 = vmatmul.f32.gmra.mxu0 %v890
        %v3463 = vpop.f32.mrf.mxu0
        %v3464 = vadd.f32 0.0, %v3463
        %3465 = vmatmul.f32.gmra.mxu0 %v893
        %v3466 = vpop.f32.mrf.mxu0
        %v3467 = vadd.f32 0.0, %v3466
        %3468 = vmatmul.f32.gmra.mxu0 %v896
        %v3469 = vpop.f32.mrf.mxu0
        %v3470 = vadd.f32 0.0, %v3469
        %3471 = vmatmul.f32.gmra.mxu0 %v899
        %v3472 = vpop.f32.mrf.mxu0
        %v3473 = vadd.f32 0.0, %v3472
        %3474 = vmatmul.f32.gmra.mxu0 %v902
        %v3475 = vpop.f32.mrf.mxu0
        %v3476 = vadd.f32 0.0, %v3475
        %3477 = vmatmul.f32.gmra.mxu0 %v905
        %v3478 = vpop.f32.mrf.mxu0
        %v3479 = vadd.f32 0.0, %v3478
        %3480 = vmatmul.f32.gmra.mxu0 %v908
        %v3481 = vpop.f32.mrf.mxu0
        %v3482 = vadd.f32 0.0, %v3481
        %3483 = vmatmul.f32.gmra.mxu0 %v911
        %v3484 = vpop.f32.mrf.mxu0
        %v3485 = vadd.f32 0.0, %v3484
        %3486 = vmatmul.f32.gmra.mxu0 %v914
        %v3487 = vpop.f32.mrf.mxu0
        %v3488 = vadd.f32 0.0, %v3487
        %3489 = vmatmul.f32.gmra.mxu0 %v917
        %v3490 = vpop.f32.mrf.mxu0
        %v3491 = vadd.f32 0.0, %v3490
        %3492 = vmatmul.f32.gmra.mxu0 %v920
        %v3493 = vpop.f32.mrf.mxu0
        %v3494 = vadd.f32 0.0, %v3493
        %3495 = vmatmul.f32.gmra.mxu0 %v923
        %v3496 = vpop.f32.mrf.mxu0
        %v3497 = vadd.f32 0.0, %v3496
        %3498 = vmatmul.f32.gmra.mxu0 %v926
        %v3499 = vpop.f32.mrf.mxu0
        %v3500 = vadd.f32 0.0, %v3499
        %3501 = vmatmul.f32.gmra.mxu0 %v929
        %v3502 = vpop.f32.mrf.mxu0
        %v3503 = vadd.f32 0.0, %v3502
        %3504 = vmatmul.f32.gmra.mxu0 %v932
        %v3505 = vpop.f32.mrf.mxu0
        %v3506 = vadd.f32 0.0, %v3505
        %3507 = vmatmul.f32.gmra.mxu0 %v935
        %v3508 = vpop.f32.mrf.mxu0
        %v3509 = vadd.f32 0.0, %v3508
        %3510 = vdwg.mxu0
        %v3511 = vadd.f32 %v3464, %v1006
        %v3512 = vadd.f32 %v3467, %v1006
        %v3513 = vadd.f32 %v3470, %v1006
        %v3514 = vadd.f32 %v3473, %v1006
        %v3515 = vadd.f32 %v3476, %v1006
        %v3516 = vadd.f32 %v3479, %v1006
        %v3517 = vadd.f32 %v3482, %v1006
        %v3518 = vadd.f32 %v3485, %v1006
        %v3519 = vadd.f32 %v3488, %v1006
        %v3520 = vadd.f32 %v3491, %v1006
        %v3521 = vadd.f32 %v3494, %v1006
        %v3522 = vadd.f32 %v3497, %v1006
        %v3523 = vadd.f32 %v3500, %v1006
        %v3524 = vadd.f32 %v3503, %v1006
        %v3525 = vadd.f32 %v3506, %v1006
        %v3526 = vadd.f32 %v3509, %v1006
        %v3527 = vsel %vm761, %v3511, 0.0
        %3528 = vadd.xlane.f32.xlu0 %v3527
        %v3529 = vpop.xlane.xlu0 %3528
        %v3530 = vsel %vm761, %v3512, 0.0
        %3531 = vadd.xlane.f32.xlu0 %v3530
        %v3532 = vpop.xlane.xlu0 %3531
        %v3533 = vsel %vm761, %v3513, 0.0
        %3534 = vadd.xlane.f32.xlu0 %v3533
        %v3535 = vpop.xlane.xlu0 %3534
        %v3536 = vsel %vm761, %v3514, 0.0
        %3537 = vadd.xlane.f32.xlu0 %v3536
        %v3538 = vpop.xlane.xlu0 %3537
        %v3539 = vsel %vm761, %v3515, 0.0
        %3540 = vadd.xlane.f32.xlu0 %v3539
        %v3541 = vpop.xlane.xlu0 %3540
        %v3542 = vsel %vm761, %v3516, 0.0
        %3543 = vadd.xlane.f32.xlu0 %v3542
        %v3544 = vpop.xlane.xlu0 %3543
        %v3545 = vsel %vm761, %v3517, 0.0
        %3546 = vadd.xlane.f32.xlu0 %v3545
        %v3547 = vpop.xlane.xlu0 %3546
        %v3548 = vsel %vm761, %v3518, 0.0
        %3549 = vadd.xlane.f32.xlu0 %v3548
        %v3550 = vpop.xlane.xlu0 %3549
        %v3551 = vsel %vm761, %v3519, 0.0
        %3552 = vadd.xlane.f32.xlu0 %v3551
        %v3553 = vpop.xlane.xlu0 %3552
        %v3554 = vsel %vm761, %v3520, 0.0
        %3555 = vadd.xlane.f32.xlu0 %v3554
        %v3556 = vpop.xlane.xlu0 %3555
        %v3557 = vsel %vm761, %v3521, 0.0
        %3558 = vadd.xlane.f32.xlu0 %v3557
        %v3559 = vpop.xlane.xlu0 %3558
        %v3560 = vsel %vm761, %v3522, 0.0
        %3561 = vadd.xlane.f32.xlu0 %v3560
        %v3562 = vpop.xlane.xlu0 %3561
        %v3563 = vsel %vm761, %v3523, 0.0
        %3564 = vadd.xlane.f32.xlu0 %v3563
        %v3565 = vpop.xlane.xlu0 %3564
        %v3566 = vsel %vm761, %v3524, 0.0
        %3567 = vadd.xlane.f32.xlu0 %v3566
        %v3568 = vpop.xlane.xlu0 %3567
        %v3569 = vsel %vm761, %v3525, 0.0
        %3570 = vadd.xlane.f32.xlu0 %v3569
        %v3571 = vpop.xlane.xlu0 %3570
        %v3572 = vsel %vm761, %v3526, 0.0
        %3573 = vadd.xlane.f32.xlu0 %v3572
        %v3574 = vpop.xlane.xlu0 %3573
        %v3575 = vmul.f32 %v3511, %v3511
        %v3576 = vmul.f32 %v3512, %v3512
        %v3577 = vmul.f32 %v3513, %v3513
        %v3578 = vmul.f32 %v3514, %v3514
        %v3579 = vmul.f32 %v3515, %v3515
        %v3580 = vmul.f32 %v3516, %v3516
        %v3581 = vmul.f32 %v3517, %v3517
        %v3582 = vmul.f32 %v3518, %v3518
        %v3583 = vmul.f32 %v3519, %v3519
        %v3584 = vmul.f32 %v3520, %v3520
        %v3585 = vmul.f32 %v3521, %v3521
        %v3586 = vmul.f32 %v3522, %v3522
        %v3587 = vmul.f32 %v3523, %v3523
        %v3588 = vmul.f32 %v3524, %v3524
        %v3589 = vmul.f32 %v3525, %v3525
        %v3590 = vmul.f32 %v3526, %v3526
        %v3591 = vsel %vm761, %v3575, 0.0
        %3592 = vadd.xlane.f32.xlu0 %v3591
        %v3593 = vpop.xlane.xlu0 %3592
        %v3594 = vsel %vm761, %v3576, 0.0
        %3595 = vadd.xlane.f32.xlu0 %v3594
        %v3596 = vpop.xlane.xlu0 %3595
        %v3597 = vsel %vm761, %v3577, 0.0
        %3598 = vadd.xlane.f32.xlu0 %v3597
        %v3599 = vpop.xlane.xlu0 %3598
        %v3600 = vsel %vm761, %v3578, 0.0
        %3601 = vadd.xlane.f32.xlu0 %v3600
        %v3602 = vpop.xlane.xlu0 %3601
        %v3603 = vsel %vm761, %v3579, 0.0
        %3604 = vadd.xlane.f32.xlu0 %v3603
        %v3605 = vpop.xlane.xlu0 %3604
        %v3606 = vsel %vm761, %v3580, 0.0
        %3607 = vadd.xlane.f32.xlu0 %v3606
        %v3608 = vpop.xlane.xlu0 %3607
        %v3609 = vsel %vm761, %v3581, 0.0
        %3610 = vadd.xlane.f32.xlu0 %v3609
        %v3611 = vpop.xlane.xlu0 %3610
        %v3612 = vsel %vm761, %v3582, 0.0
        %3613 = vadd.xlane.f32.xlu0 %v3612
        %v3614 = vpop.xlane.xlu0 %3613
        %v3615 = vsel %vm761, %v3583, 0.0
        %3616 = vadd.xlane.f32.xlu0 %v3615
        %v3617 = vpop.xlane.xlu0 %3616
        %v3618 = vsel %vm761, %v3584, 0.0
        %3619 = vadd.xlane.f32.xlu0 %v3618
        %v3620 = vpop.xlane.xlu0 %3619
        %v3621 = vsel %vm761, %v3585, 0.0
        %3622 = vadd.xlane.f32.xlu0 %v3621
        %v3623 = vpop.xlane.xlu0 %3622
        %v3624 = vsel %vm761, %v3586, 0.0
        %3625 = vadd.xlane.f32.xlu0 %v3624
        %v3626 = vpop.xlane.xlu0 %3625
        %v3627 = vsel %vm761, %v3587, 0.0
        %3628 = vadd.xlane.f32.xlu0 %v3627
        %v3629 = vpop.xlane.xlu0 %3628
        %v3630 = vsel %vm761, %v3588, 0.0
        %3631 = vadd.xlane.f32.xlu0 %v3630
        %v3632 = vpop.xlane.xlu0 %3631
        %v3633 = vsel %vm761, %v3589, 0.0
        %3634 = vadd.xlane.f32.xlu0 %v3633
        %v3635 = vpop.xlane.xlu0 %3634
        %v3636 = vsel %vm761, %v3590, 0.0
        %3637 = vadd.xlane.f32.xlu0 %v3636
        %v3638 = vpop.xlane.xlu0 %3637
        %v3639 = vmul.f32 %v3529, 0.125
        %v3640 = vmul.f32 %v3532, 0.125
        %v3641 = vmul.f32 %v3535, 0.125
        %v3642 = vmul.f32 %v3538, 0.125
        %v3643 = vmul.f32 %v3541, 0.125
        %v3644 = vmul.f32 %v3544, 0.125
        %v3645 = vmul.f32 %v3547, 0.125
        %v3646 = vmul.f32 %v3550, 0.125
        %v3647 = vmul.f32 %v3553, 0.125
        %v3648 = vmul.f32 %v3556, 0.125
        %v3649 = vmul.f32 %v3559, 0.125
        %v3650 = vmul.f32 %v3562, 0.125
        %v3651 = vmul.f32 %v3565, 0.125
        %v3652 = vmul.f32 %v3568, 0.125
        %v3653 = vmul.f32 %v3571, 0.125
        %v3654 = vmul.f32 %v3574, 0.125
        %v3655 = vmul.f32 %v3593, 0.125
        %v3656 = vmul.f32 %v3596, 0.125
        %v3657 = vmul.f32 %v3599, 0.125
        %v3658 = vmul.f32 %v3602, 0.125
        %v3659 = vmul.f32 %v3605, 0.125
        %v3660 = vmul.f32 %v3608, 0.125
        %v3661 = vmul.f32 %v3611, 0.125
        %v3662 = vmul.f32 %v3614, 0.125
        %v3663 = vmul.f32 %v3617, 0.125
        %v3664 = vmul.f32 %v3620, 0.125
        %v3665 = vmul.f32 %v3623, 0.125
        %v3666 = vmul.f32 %v3626, 0.125
        %v3667 = vmul.f32 %v3629, 0.125
        %v3668 = vmul.f32 %v3632, 0.125
        %v3669 = vmul.f32 %v3635, 0.125
        %v3670 = vmul.f32 %v3638, 0.125
        %v3671 = vmul.f32 %v3639, %v3639
        %v3672 = vmul.f32 %v3640, %v3640
        %v3673 = vmul.f32 %v3641, %v3641
        %v3674 = vmul.f32 %v3642, %v3642
        %v3675 = vmul.f32 %v3643, %v3643
        %v3676 = vmul.f32 %v3644, %v3644
        %v3677 = vmul.f32 %v3645, %v3645
        %v3678 = vmul.f32 %v3646, %v3646
        %v3679 = vmul.f32 %v3647, %v3647
        %v3680 = vmul.f32 %v3648, %v3648
        %v3681 = vmul.f32 %v3649, %v3649
        %v3682 = vmul.f32 %v3650, %v3650
        %v3683 = vmul.f32 %v3651, %v3651
        %v3684 = vmul.f32 %v3652, %v3652
        %v3685 = vmul.f32 %v3653, %v3653
        %v3686 = vmul.f32 %v3654, %v3654
        %v3687 = vsub.f32 %v3655, %v3671
        %v3688 = vsub.f32 %v3656, %v3672
        %v3689 = vsub.f32 %v3657, %v3673
        %v3690 = vsub.f32 %v3658, %v3674
        %v3691 = vsub.f32 %v3659, %v3675
        %v3692 = vsub.f32 %v3660, %v3676
        %v3693 = vsub.f32 %v3661, %v3677
        %v3694 = vsub.f32 %v3662, %v3678
        %v3695 = vsub.f32 %v3663, %v3679
        %v3696 = vsub.f32 %v3664, %v3680
        %v3697 = vsub.f32 %v3665, %v3681
        %v3698 = vsub.f32 %v3666, %v3682
        %v3699 = vsub.f32 %v3667, %v3683
        %v3700 = vsub.f32 %v3668, %v3684
        %v3701 = vsub.f32 %v3669, %v3685
        %v3702 = vsub.f32 %v3670, %v3686
        %v3703 = vsub.f32 %v3511, %v3639
        %v3704 = vsub.f32 %v3512, %v3640
        %v3705 = vsub.f32 %v3513, %v3641
        %v3706 = vsub.f32 %v3514, %v3642
        %v3707 = vsub.f32 %v3515, %v3643
        %v3708 = vsub.f32 %v3516, %v3644
        %v3709 = vsub.f32 %v3517, %v3645
        %v3710 = vsub.f32 %v3518, %v3646
        %v3711 = vsub.f32 %v3519, %v3647
        %v3712 = vsub.f32 %v3520, %v3648
        %v3713 = vsub.f32 %v3521, %v3649
        %v3714 = vsub.f32 %v3522, %v3650
        %v3715 = vsub.f32 %v3523, %v3651
        %v3716 = vsub.f32 %v3524, %v3652
        %v3717 = vsub.f32 %v3525, %v3653
        %v3718 = vsub.f32 %v3526, %v3654
        %v3719 = vadd.f32 %v3687, 1e-06
        %v3720 = vadd.f32 %v3688, 1e-06
        %v3721 = vadd.f32 %v3689, 1e-06
        %v3722 = vadd.f32 %v3690, 1e-06
        %v3723 = vadd.f32 %v3691, 1e-06
        %v3724 = vadd.f32 %v3692, 1e-06
        %v3725 = vadd.f32 %v3693, 1e-06
        %v3726 = vadd.f32 %v3694, 1e-06
        %v3727 = vadd.f32 %v3695, 1e-06
        %v3728 = vadd.f32 %v3696, 1e-06
        %v3729 = vadd.f32 %v3697, 1e-06
        %v3730 = vadd.f32 %v3698, 1e-06
        %v3731 = vadd.f32 %v3699, 1e-06
        %v3732 = vadd.f32 %v3700, 1e-06
        %v3733 = vadd.f32 %v3701, 1e-06
        %v3734 = vadd.f32 %v3702, 1e-06
        %v3735 = vrsqrt.pop %v3719
        %v3736 = vmul.f32 %v3735, %v3719
        %v3737 = vmul.f32 %v3736, %v3735
        %v3738 = vmul.f32 0.5, %v3737
        %v3739 = vsub.f32 1.5, %v3738
        %v3740 = vmul.f32 %v3735, %v3739
        %vm3741 = vweird.f32 %v3719
        %vm3742 = vweird.f32 %v3735
        %vm3743 = vmor %vm3741, %vm3742
        %v3744 = vsel %vm3743, %v3735, %v3740
        %v3745 = vrsqrt.pop %v3720
        %v3746 = vmul.f32 %v3745, %v3720
        %v3747 = vmul.f32 %v3746, %v3745
        %v3748 = vmul.f32 0.5, %v3747
        %v3749 = vsub.f32 1.5, %v3748
        %v3750 = vmul.f32 %v3745, %v3749
        %vm3751 = vweird.f32 %v3720
        %vm3752 = vweird.f32 %v3745
        %vm3753 = vmor %vm3751, %vm3752
        %v3754 = vsel %vm3753, %v3745, %v3750
        %v3755 = vrsqrt.pop %v3721
        %v3756 = vmul.f32 %v3755, %v3721
        %v3757 = vmul.f32 %v3756, %v3755
        %v3758 = vmul.f32 0.5, %v3757
        %v3759 = vsub.f32 1.5, %v3758
        %v3760 = vmul.f32 %v3755, %v3759
        %vm3761 = vweird.f32 %v3721
        %vm3762 = vweird.f32 %v3755
        %vm3763 = vmor %vm3761, %vm3762
        %v3764 = vsel %vm3763, %v3755, %v3760
        %v3765 = vrsqrt.pop %v3722
        %v3766 = vmul.f32 %v3765, %v3722
        %v3767 = vmul.f32 %v3766, %v3765
        %v3768 = vmul.f32 0.5, %v3767
        %v3769 = vsub.f32 1.5, %v3768
        %v3770 = vmul.f32 %v3765, %v3769
        %vm3771 = vweird.f32 %v3722
        %vm3772 = vweird.f32 %v3765
        %vm3773 = vmor %vm3771, %vm3772
        %v3774 = vsel %vm3773, %v3765, %v3770
        %v3775 = vrsqrt.pop %v3723
        %v3776 = vmul.f32 %v3775, %v3723
        %v3777 = vmul.f32 %v3776, %v3775
        %v3778 = vmul.f32 0.5, %v3777
        %v3779 = vsub.f32 1.5, %v3778
        %v3780 = vmul.f32 %v3775, %v3779
        %vm3781 = vweird.f32 %v3723
        %vm3782 = vweird.f32 %v3775
        %vm3783 = vmor %vm3781, %vm3782
        %v3784 = vsel %vm3783, %v3775, %v3780
        %v3785 = vrsqrt.pop %v3724
        %v3786 = vmul.f32 %v3785, %v3724
        %v3787 = vmul.f32 %v3786, %v3785
        %v3788 = vmul.f32 0.5, %v3787
        %v3789 = vsub.f32 1.5, %v3788
        %v3790 = vmul.f32 %v3785, %v3789
        %vm3791 = vweird.f32 %v3724
        %vm3792 = vweird.f32 %v3785
        %vm3793 = vmor %vm3791, %vm3792
        %v3794 = vsel %vm3793, %v3785, %v3790
        %v3795 = vrsqrt.pop %v3725
        %v3796 = vmul.f32 %v3795, %v3725
        %v3797 = vmul.f32 %v3796, %v3795
        %v3798 = vmul.f32 0.5, %v3797
        %v3799 = vsub.f32 1.5, %v3798
        %v3800 = vmul.f32 %v3795, %v3799
        %vm3801 = vweird.f32 %v3725
        %vm3802 = vweird.f32 %v3795
        %vm3803 = vmor %vm3801, %vm3802
        %v3804 = vsel %vm3803, %v3795, %v3800
        %v3805 = vrsqrt.pop %v3726
        %v3806 = vmul.f32 %v3805, %v3726
        %v3807 = vmul.f32 %v3806, %v3805
        %v3808 = vmul.f32 0.5, %v3807
        %v3809 = vsub.f32 1.5, %v3808
        %v3810 = vmul.f32 %v3805, %v3809
        %vm3811 = vweird.f32 %v3726
        %vm3812 = vweird.f32 %v3805
        %vm3813 = vmor %vm3811, %vm3812
        %v3814 = vsel %vm3813, %v3805, %v3810
        %v3815 = vrsqrt.pop %v3727
        %v3816 = vmul.f32 %v3815, %v3727
        %v3817 = vmul.f32 %v3816, %v3815
        %v3818 = vmul.f32 0.5, %v3817
        %v3819 = vsub.f32 1.5, %v3818
        %v3820 = vmul.f32 %v3815, %v3819
        %vm3821 = vweird.f32 %v3727
        %vm3822 = vweird.f32 %v3815
        %vm3823 = vmor %vm3821, %vm3822
        %v3824 = vsel %vm3823, %v3815, %v3820
        %v3825 = vrsqrt.pop %v3728
        %v3826 = vmul.f32 %v3825, %v3728
        %v3827 = vmul.f32 %v3826, %v3825
        %v3828 = vmul.f32 0.5, %v3827
        %v3829 = vsub.f32 1.5, %v3828
        %v3830 = vmul.f32 %v3825, %v3829
        %vm3831 = vweird.f32 %v3728
        %vm3832 = vweird.f32 %v3825
        %vm3833 = vmor %vm3831, %vm3832
        %v3834 = vsel %vm3833, %v3825, %v3830
        %v3835 = vrsqrt.pop %v3729
        %v3836 = vmul.f32 %v3835, %v3729
        %v3837 = vmul.f32 %v3836, %v3835
        %v3838 = vmul.f32 0.5, %v3837
        %v3839 = vsub.f32 1.5, %v3838
        %v3840 = vmul.f32 %v3835, %v3839
        %vm3841 = vweird.f32 %v3729
        %vm3842 = vweird.f32 %v3835
        %vm3843 = vmor %vm3841, %vm3842
        %v3844 = vsel %vm3843, %v3835, %v3840
        %v3845 = vrsqrt.pop %v3730
        %v3846 = vmul.f32 %v3845, %v3730
        %v3847 = vmul.f32 %v3846, %v3845
        %v3848 = vmul.f32 0.5, %v3847
        %v3849 = vsub.f32 1.5, %v3848
        %v3850 = vmul.f32 %v3845, %v3849
        %vm3851 = vweird.f32 %v3730
        %vm3852 = vweird.f32 %v3845
        %vm3853 = vmor %vm3851, %vm3852
        %v3854 = vsel %vm3853, %v3845, %v3850
        %v3855 = vrsqrt.pop %v3731
        %v3856 = vmul.f32 %v3855, %v3731
        %v3857 = vmul.f32 %v3856, %v3855
        %v3858 = vmul.f32 0.5, %v3857
        %v3859 = vsub.f32 1.5, %v3858
        %v3860 = vmul.f32 %v3855, %v3859
        %vm3861 = vweird.f32 %v3731
        %vm3862 = vweird.f32 %v3855
        %vm3863 = vmor %vm3861, %vm3862
        %v3864 = vsel %vm3863, %v3855, %v3860
        %v3865 = vrsqrt.pop %v3732
        %v3866 = vmul.f32 %v3865, %v3732
        %v3867 = vmul.f32 %v3866, %v3865
        %v3868 = vmul.f32 0.5, %v3867
        %v3869 = vsub.f32 1.5, %v3868
        %v3870 = vmul.f32 %v3865, %v3869
        %vm3871 = vweird.f32 %v3732
        %vm3872 = vweird.f32 %v3865
        %vm3873 = vmor %vm3871, %vm3872
        %v3874 = vsel %vm3873, %v3865, %v3870
        %v3875 = vrsqrt.pop %v3733
        %v3876 = vmul.f32 %v3875, %v3733
        %v3877 = vmul.f32 %v3876, %v3875
        %v3878 = vmul.f32 0.5, %v3877
        %v3879 = vsub.f32 1.5, %v3878
        %v3880 = vmul.f32 %v3875, %v3879
        %vm3881 = vweird.f32 %v3733
        %vm3882 = vweird.f32 %v3875
        %vm3883 = vmor %vm3881, %vm3882
        %v3884 = vsel %vm3883, %v3875, %v3880
        %v3885 = vrsqrt.pop %v3734
        %v3886 = vmul.f32 %v3885, %v3734
        %v3887 = vmul.f32 %v3886, %v3885
        %v3888 = vmul.f32 0.5, %v3887
        %v3889 = vsub.f32 1.5, %v3888
        %v3890 = vmul.f32 %v3885, %v3889
        %vm3891 = vweird.f32 %v3734
        %vm3892 = vweird.f32 %v3885
        %vm3893 = vmor %vm3891, %vm3892
        %v3894 = vsel %vm3893, %v3885, %v3890
        %v3895 = vmul.f32 %v3703, %v3744
        %v3896 = vmul.f32 %v3704, %v3754
        %v3897 = vmul.f32 %v3705, %v3764
        %v3898 = vmul.f32 %v3706, %v3774
        %v3899 = vmul.f32 %v3707, %v3784
        %v3900 = vmul.f32 %v3708, %v3794
        %v3901 = vmul.f32 %v3709, %v3804
        %v3902 = vmul.f32 %v3710, %v3814
        %v3903 = vmul.f32 %v3711, %v3824
        %v3904 = vmul.f32 %v3712, %v3834
        %v3905 = vmul.f32 %v3713, %v3844
        %v3906 = vmul.f32 %v3714, %v3854
        %v3907 = vmul.f32 %v3715, %v3864
        %v3908 = vmul.f32 %v3716, %v3874
        %v3909 = vmul.f32 %v3717, %v3884
        %v3910 = vmul.f32 %v3718, %v3894
        %v3911 = vmul.f32 %v3895, %v1407
        %v3912 = vmul.f32 %v3896, %v1407
        %v3913 = vmul.f32 %v3897, %v1407
        %v3914 = vmul.f32 %v3898, %v1407
        %v3915 = vmul.f32 %v3899, %v1407
        %v3916 = vmul.f32 %v3900, %v1407
        %v3917 = vmul.f32 %v3901, %v1407
        %v3918 = vmul.f32 %v3902, %v1407
        %v3919 = vmul.f32 %v3903, %v1407
        %v3920 = vmul.f32 %v3904, %v1407
        %v3921 = vmul.f32 %v3905, %v1407
        %v3922 = vmul.f32 %v3906, %v1407
        %v3923 = vmul.f32 %v3907, %v1407
        %v3924 = vmul.f32 %v3908, %v1407
        %v3925 = vmul.f32 %v3909, %v1407
        %v3926 = vmul.f32 %v3910, %v1407
        %v3927 = vadd.f32 %v3911, %v1424
        %v3928 = vadd.f32 %v3912, %v1424
        %v3929 = vadd.f32 %v3913, %v1424
        %v3930 = vadd.f32 %v3914, %v1424
        %v3931 = vadd.f32 %v3915, %v1424
        %v3932 = vadd.f32 %v3916, %v1424
        %v3933 = vadd.f32 %v3917, %v1424
        %v3934 = vadd.f32 %v3918, %v1424
        %v3935 = vadd.f32 %v3919, %v1424
        %v3936 = vadd.f32 %v3920, %v1424
        %v3937 = vadd.f32 %v3921, %v1424
        %v3938 = vadd.f32 %v3922, %v1424
        %v3939 = vadd.f32 %v3923, %v1424
        %v3940 = vadd.f32 %v3924, %v1424
        %v3941 = vadd.f32 %v3925, %v1424
        %v3942 = vadd.f32 %v3926, %v1424
        %v3943 = vmul.f32 %v3927, 0.5
        %v3944 = vmul.f32 %v3928, 0.5
        %v3945 = vmul.f32 %v3929, 0.5
        %v3946 = vmul.f32 %v3930, 0.5
        %v3947 = vmul.f32 %v3931, 0.5
        %v3948 = vmul.f32 %v3932, 0.5
        %v3949 = vmul.f32 %v3933, 0.5
        %v3950 = vmul.f32 %v3934, 0.5
        %v3951 = vmul.f32 %v3935, 0.5
        %v3952 = vmul.f32 %v3936, 0.5
        %v3953 = vmul.f32 %v3937, 0.5
        %v3954 = vmul.f32 %v3938, 0.5
        %v3955 = vmul.f32 %v3939, 0.5
        %v3956 = vmul.f32 %v3940, 0.5
        %v3957 = vmul.f32 %v3941, 0.5
        %v3958 = vmul.f32 %v3942, 0.5
        %v3959 = vmul.f32 %v3927, 0.70710677
        %v3960 = vmul.f32 %v3928, 0.70710677
        %v3961 = vmul.f32 %v3929, 0.70710677
        %v3962 = vmul.f32 %v3930, 0.70710677
        %v3963 = vmul.f32 %v3931, 0.70710677
        %v3964 = vmul.f32 %v3932, 0.70710677
        %v3965 = vmul.f32 %v3933, 0.70710677
        %v3966 = vmul.f32 %v3934, 0.70710677
        %v3967 = vmul.f32 %v3935, 0.70710677
        %v3968 = vmul.f32 %v3936, 0.70710677
        %v3969 = vmul.f32 %v3937, 0.70710677
        %v3970 = vmul.f32 %v3938, 0.70710677
        %v3971 = vmul.f32 %v3939, 0.70710677
        %v3972 = vmul.f32 %v3940, 0.70710677
        %v3973 = vmul.f32 %v3941, 0.70710677
        %v3974 = vmul.f32 %v3942, 0.70710677
        %v3975 = vmul.f32 %v3959, %v3959
        %v3976 = vmin.f32 16.0, %v3975
        %v3977 = vmul.f32 %v3976, 2.1237322e-06
        %v3978 = vadd.f32 %v3977, 0.00028619796
        %v3979 = vmul.f32 %v3976, %v3978
        %v3980 = vadd.f32 %v3979, 0.0036580483
        %v3981 = vmul.f32 %v3976, %v3980
        %v3982 = vadd.f32 %v3981, 0.05243302
        %v3983 = vmul.f32 %v3976, %v3982
        %v3984 = vadd.f32 %v3983, 0.18741608
        %v3985 = vmul.f32 %v3976, %v3984
        %v3986 = vadd.f32 %v3985, 1.1283791
        %v3987 = vmul.f32 %v3959, %v3986
        %v3988 = vmul.f32 %v3976, 3.8918573e-05
        %v3989 = vadd.f32 %v3988, 0.001143296
        %v3990 = vmul.f32 %v3976, %v3989
        %v3991 = vadd.f32 %v3990, 0.014752088
        %v3992 = vmul.f32 %v3976, %v3991
        %v3993 = vadd.f32 %v3992, 0.112945676
        %v3994 = vmul.f32 %v3976, %v3993
        %v3995 = vadd.f32 %v3994, 0.4994258
        %v3996 = vmul.f32 %v3976, %v3995
        %v3997 = vadd.f32 %v3996, 1.0
        %v3998 = vrcp.pop %v3997
        %v3999 = vmul.f32 %v3997, %v3998
        %v4000 = vsub.f32 1.0, %v3999
        %v4001 = vmul.f32 %v3998, %v4000
        %v4002 = vadd.f32 %v3998, %v4001
        %vm4003 = vweird.f32 %v3997
        %vm4004 = vweird.f32 %v3998
        %vm4005 = vmor %vm4003, %vm4004
        %v4006 = vsel %vm4005, %v3998, %v4002
        %v4007 = vand.u32 2147483647, %v3997
        %vm4008 = vcmp.eq.f32.partialorder %v4007, 8.507059e+37
        %v4009 = vand.u32 %v3997, 2147483648
        %v4010 = vor.u32 1.1754944e-38, %v4009
        %v4011 = vsel %vm4008, %v4010, %v4006
        %v4012 = vmul.f32 %v3987, %v4011
        %v4013 = vmin.f32 %v4012, 1.0
        %v4014 = vmax.f32 %v4013, -1.0
        %v4015 = vmul.f32 %v3960, %v3960
        %v4016 = vmin.f32 16.0, %v4015
        %v4017 = vmul.f32 %v4016, 2.1237322e-06
        %v4018 = vadd.f32 %v4017, 0.00028619796
        %v4019 = vmul.f32 %v4016, %v4018
        %v4020 = vadd.f32 %v4019, 0.0036580483
        %v4021 = vmul.f32 %v4016, %v4020
        %v4022 = vadd.f32 %v4021, 0.05243302
        %v4023 = vmul.f32 %v4016, %v4022
        %v4024 = vadd.f32 %v4023, 0.18741608
        %v4025 = vmul.f32 %v4016, %v4024
        %v4026 = vadd.f32 %v4025, 1.1283791
        %v4027 = vmul.f32 %v3960, %v4026
        %v4028 = vmul.f32 %v4016, 3.8918573e-05
        %v4029 = vadd.f32 %v4028, 0.001143296
        %v4030 = vmul.f32 %v4016, %v4029
        %v4031 = vadd.f32 %v4030, 0.014752088
        %v4032 = vmul.f32 %v4016, %v4031
        %v4033 = vadd.f32 %v4032, 0.112945676
        %v4034 = vmul.f32 %v4016, %v4033
        %v4035 = vadd.f32 %v4034, 0.4994258
        %v4036 = vmul.f32 %v4016, %v4035
        %v4037 = vadd.f32 %v4036, 1.0
        %v4038 = vrcp.pop %v4037
        %v4039 = vmul.f32 %v4037, %v4038
        %v4040 = vsub.f32 1.0, %v4039
        %v4041 = vmul.f32 %v4038, %v4040
        %v4042 = vadd.f32 %v4038, %v4041
        %vm4043 = vweird.f32 %v4037
        %vm4044 = vweird.f32 %v4038
        %vm4045 = vmor %vm4043, %vm4044
        %v4046 = vsel %vm4045, %v4038, %v4042
        %v4047 = vand.u32 2147483647, %v4037
        %vm4048 = vcmp.eq.f32.partialorder %v4047, 8.507059e+37
        %v4049 = vand.u32 %v4037, 2147483648
        %v4050 = vor.u32 1.1754944e-38, %v4049
        %v4051 = vsel %vm4048, %v4050, %v4046
        %v4052 = vmul.f32 %v4027, %v4051
        %v4053 = vmin.f32 %v4052, 1.0
        %v4054 = vmax.f32 %v4053, -1.0
        %v4055 = vmul.f32 %v3961, %v3961
        %v4056 = vmin.f32 16.0, %v4055
        %v4057 = vmul.f32 %v4056, 2.1237322e-06
        %v4058 = vadd.f32 %v4057, 0.00028619796
        %v4059 = vmul.f32 %v4056, %v4058
        %v4060 = vadd.f32 %v4059, 0.0036580483
        %v4061 = vmul.f32 %v4056, %v4060
        %v4062 = vadd.f32 %v4061, 0.05243302
        %v4063 = vmul.f32 %v4056, %v4062
        %v4064 = vadd.f32 %v4063, 0.18741608
        %v4065 = vmul.f32 %v4056, %v4064
        %v4066 = vadd.f32 %v4065, 1.1283791
        %v4067 = vmul.f32 %v3961, %v4066
        %v4068 = vmul.f32 %v4056, 3.8918573e-05
        %v4069 = vadd.f32 %v4068, 0.001143296
        %v4070 = vmul.f32 %v4056, %v4069
        %v4071 = vadd.f32 %v4070, 0.014752088
        %v4072 = vmul.f32 %v4056, %v4071
        %v4073 = vadd.f32 %v4072, 0.112945676
        %v4074 = vmul.f32 %v4056, %v4073
        %v4075 = vadd.f32 %v4074, 0.4994258
        %v4076 = vmul.f32 %v4056, %v4075
        %v4077 = vadd.f32 %v4076, 1.0
        %v4078 = vrcp.pop %v4077
        %v4079 = vmul.f32 %v4077, %v4078
        %v4080 = vsub.f32 1.0, %v4079
        %v4081 = vmul.f32 %v4078, %v4080
        %v4082 = vadd.f32 %v4078, %v4081
        %vm4083 = vweird.f32 %v4077
        %vm4084 = vweird.f32 %v4078
        %vm4085 = vmor %vm4083, %vm4084
        %v4086 = vsel %vm4085, %v4078, %v4082
        %v4087 = vand.u32 2147483647, %v4077
        %vm4088 = vcmp.eq.f32.partialorder %v4087, 8.507059e+37
        %v4089 = vand.u32 %v4077, 2147483648
        %v4090 = vor.u32 1.1754944e-38, %v4089
        %v4091 = vsel %vm4088, %v4090, %v4086
        %v4092 = vmul.f32 %v4067, %v4091
        %v4093 = vmin.f32 %v4092, 1.0
        %v4094 = vmax.f32 %v4093, -1.0
        %v4095 = vmul.f32 %v3962, %v3962
        %v4096 = vmin.f32 16.0, %v4095
        %v4097 = vmul.f32 %v4096, 2.1237322e-06
        %v4098 = vadd.f32 %v4097, 0.00028619796
        %v4099 = vmul.f32 %v4096, %v4098
        %v4100 = vadd.f32 %v4099, 0.0036580483
        %v4101 = vmul.f32 %v4096, %v4100
        %v4102 = vadd.f32 %v4101, 0.05243302
        %v4103 = vmul.f32 %v4096, %v4102
        %v4104 = vadd.f32 %v4103, 0.18741608
        %v4105 = vmul.f32 %v4096, %v4104
        %v4106 = vadd.f32 %v4105, 1.1283791
        %v4107 = vmul.f32 %v3962, %v4106
        %v4108 = vmul.f32 %v4096, 3.8918573e-05
        %v4109 = vadd.f32 %v4108, 0.001143296
        %v4110 = vmul.f32 %v4096, %v4109
        %v4111 = vadd.f32 %v4110, 0.014752088
        %v4112 = vmul.f32 %v4096, %v4111
        %v4113 = vadd.f32 %v4112, 0.112945676
        %v4114 = vmul.f32 %v4096, %v4113
        %v4115 = vadd.f32 %v4114, 0.4994258
        %v4116 = vmul.f32 %v4096, %v4115
        %v4117 = vadd.f32 %v4116, 1.0
        %v4118 = vrcp.pop %v4117
        %v4119 = vmul.f32 %v4117, %v4118
        %v4120 = vsub.f32 1.0, %v4119
        %v4121 = vmul.f32 %v4118, %v4120
        %v4122 = vadd.f32 %v4118, %v4121
        %vm4123 = vweird.f32 %v4117
        %vm4124 = vweird.f32 %v4118
        %vm4125 = vmor %vm4123, %vm4124
        %v4126 = vsel %vm4125, %v4118, %v4122
        %v4127 = vand.u32 2147483647, %v4117
        %vm4128 = vcmp.eq.f32.partialorder %v4127, 8.507059e+37
        %v4129 = vand.u32 %v4117, 2147483648
        %v4130 = vor.u32 1.1754944e-38, %v4129
        %v4131 = vsel %vm4128, %v4130, %v4126
        %v4132 = vmul.f32 %v4107, %v4131
        %v4133 = vmin.f32 %v4132, 1.0
        %v4134 = vmax.f32 %v4133, -1.0
        %v4135 = vmul.f32 %v3963, %v3963
        %v4136 = vmin.f32 16.0, %v4135
        %v4137 = vmul.f32 %v4136, 2.1237322e-06
        %v4138 = vadd.f32 %v4137, 0.00028619796
        %v4139 = vmul.f32 %v4136, %v4138
        %v4140 = vadd.f32 %v4139, 0.0036580483
        %v4141 = vmul.f32 %v4136, %v4140
        %v4142 = vadd.f32 %v4141, 0.05243302
        %v4143 = vmul.f32 %v4136, %v4142
        %v4144 = vadd.f32 %v4143, 0.18741608
        %v4145 = vmul.f32 %v4136, %v4144
        %v4146 = vadd.f32 %v4145, 1.1283791
        %v4147 = vmul.f32 %v3963, %v4146
        %v4148 = vmul.f32 %v4136, 3.8918573e-05
        %v4149 = vadd.f32 %v4148, 0.001143296
        %v4150 = vmul.f32 %v4136, %v4149
        %v4151 = vadd.f32 %v4150, 0.014752088
        %v4152 = vmul.f32 %v4136, %v4151
        %v4153 = vadd.f32 %v4152, 0.112945676
        %v4154 = vmul.f32 %v4136, %v4153
        %v4155 = vadd.f32 %v4154, 0.4994258
        %v4156 = vmul.f32 %v4136, %v4155
        %v4157 = vadd.f32 %v4156, 1.0
        %v4158 = vrcp.pop %v4157
        %v4159 = vmul.f32 %v4157, %v4158
        %v4160 = vsub.f32 1.0, %v4159
        %v4161 = vmul.f32 %v4158, %v4160
        %v4162 = vadd.f32 %v4158, %v4161
        %vm4163 = vweird.f32 %v4157
        %vm4164 = vweird.f32 %v4158
        %vm4165 = vmor %vm4163, %vm4164
        %v4166 = vsel %vm4165, %v4158, %v4162
        %v4167 = vand.u32 2147483647, %v4157
        %vm4168 = vcmp.eq.f32.partialorder %v4167, 8.507059e+37
        %v4169 = vand.u32 %v4157, 2147483648
        %v4170 = vor.u32 1.1754944e-38, %v4169
        %v4171 = vsel %vm4168, %v4170, %v4166
        %v4172 = vmul.f32 %v4147, %v4171
        %v4173 = vmin.f32 %v4172, 1.0
        %v4174 = vmax.f32 %v4173, -1.0
        %v4175 = vmul.f32 %v3964, %v3964
        %v4176 = vmin.f32 16.0, %v4175
        %v4177 = vmul.f32 %v4176, 2.1237322e-06
        %v4178 = vadd.f32 %v4177, 0.00028619796
        %v4179 = vmul.f32 %v4176, %v4178
        %v4180 = vadd.f32 %v4179, 0.0036580483
        %v4181 = vmul.f32 %v4176, %v4180
        %v4182 = vadd.f32 %v4181, 0.05243302
        %v4183 = vmul.f32 %v4176, %v4182
        %v4184 = vadd.f32 %v4183, 0.18741608
        %v4185 = vmul.f32 %v4176, %v4184
        %v4186 = vadd.f32 %v4185, 1.1283791
        %v4187 = vmul.f32 %v3964, %v4186
        %v4188 = vmul.f32 %v4176, 3.8918573e-05
        %v4189 = vadd.f32 %v4188, 0.001143296
        %v4190 = vmul.f32 %v4176, %v4189
        %v4191 = vadd.f32 %v4190, 0.014752088
        %v4192 = vmul.f32 %v4176, %v4191
        %v4193 = vadd.f32 %v4192, 0.112945676
        %v4194 = vmul.f32 %v4176, %v4193
        %v4195 = vadd.f32 %v4194, 0.4994258
        %v4196 = vmul.f32 %v4176, %v4195
        %v4197 = vadd.f32 %v4196, 1.0
        %v4198 = vrcp.pop %v4197
        %v4199 = vmul.f32 %v4197, %v4198
        %v4200 = vsub.f32 1.0, %v4199
        %v4201 = vmul.f32 %v4198, %v4200
        %v4202 = vadd.f32 %v4198, %v4201
        %vm4203 = vweird.f32 %v4197
        %vm4204 = vweird.f32 %v4198
        %vm4205 = vmor %vm4203, %vm4204
        %v4206 = vsel %vm4205, %v4198, %v4202
        %v4207 = vand.u32 2147483647, %v4197
        %vm4208 = vcmp.eq.f32.partialorder %v4207, 8.507059e+37
        %v4209 = vand.u32 %v4197, 2147483648
        %v4210 = vor.u32 1.1754944e-38, %v4209
        %v4211 = vsel %vm4208, %v4210, %v4206
        %v4212 = vmul.f32 %v4187, %v4211
        %v4213 = vmin.f32 %v4212, 1.0
        %v4214 = vmax.f32 %v4213, -1.0
        %v4215 = vmul.f32 %v3965, %v3965
        %v4216 = vmin.f32 16.0, %v4215
        %v4217 = vmul.f32 %v4216, 2.1237322e-06
        %v4218 = vadd.f32 %v4217, 0.00028619796
        %v4219 = vmul.f32 %v4216, %v4218
        %v4220 = vadd.f32 %v4219, 0.0036580483
        %v4221 = vmul.f32 %v4216, %v4220
        %v4222 = vadd.f32 %v4221, 0.05243302
        %v4223 = vmul.f32 %v4216, %v4222
        %v4224 = vadd.f32 %v4223, 0.18741608
        %v4225 = vmul.f32 %v4216, %v4224
        %v4226 = vadd.f32 %v4225, 1.1283791
        %v4227 = vmul.f32 %v3965, %v4226
        %v4228 = vmul.f32 %v4216, 3.8918573e-05
        %v4229 = vadd.f32 %v4228, 0.001143296
        %v4230 = vmul.f32 %v4216, %v4229
        %v4231 = vadd.f32 %v4230, 0.014752088
        %v4232 = vmul.f32 %v4216, %v4231
        %v4233 = vadd.f32 %v4232, 0.112945676
        %v4234 = vmul.f32 %v4216, %v4233
        %v4235 = vadd.f32 %v4234, 0.4994258
        %v4236 = vmul.f32 %v4216, %v4235
        %v4237 = vadd.f32 %v4236, 1.0
        %v4238 = vrcp.pop %v4237
        %v4239 = vmul.f32 %v4237, %v4238
        %v4240 = vsub.f32 1.0, %v4239
        %v4241 = vmul.f32 %v4238, %v4240
        %v4242 = vadd.f32 %v4238, %v4241
        %vm4243 = vweird.f32 %v4237
        %vm4244 = vweird.f32 %v4238
        %vm4245 = vmor %vm4243, %vm4244
        %v4246 = vsel %vm4245, %v4238, %v4242
        %v4247 = vand.u32 2147483647, %v4237
        %vm4248 = vcmp.eq.f32.partialorder %v4247, 8.507059e+37
        %v4249 = vand.u32 %v4237, 2147483648
        %v4250 = vor.u32 1.1754944e-38, %v4249
        %v4251 = vsel %vm4248, %v4250, %v4246
        %v4252 = vmul.f32 %v4227, %v4251
        %v4253 = vmin.f32 %v4252, 1.0
        %v4254 = vmax.f32 %v4253, -1.0
        %v4255 = vmul.f32 %v3966, %v3966
        %v4256 = vmin.f32 16.0, %v4255
        %v4257 = vmul.f32 %v4256, 2.1237322e-06
        %v4258 = vadd.f32 %v4257, 0.00028619796
        %v4259 = vmul.f32 %v4256, %v4258
        %v4260 = vadd.f32 %v4259, 0.0036580483
        %v4261 = vmul.f32 %v4256, %v4260
        %v4262 = vadd.f32 %v4261, 0.05243302
        %v4263 = vmul.f32 %v4256, %v4262
        %v4264 = vadd.f32 %v4263, 0.18741608
        %v4265 = vmul.f32 %v4256, %v4264
        %v4266 = vadd.f32 %v4265, 1.1283791
        %v4267 = vmul.f32 %v3966, %v4266
        %v4268 = vmul.f32 %v4256, 3.8918573e-05
        %v4269 = vadd.f32 %v4268, 0.001143296
        %v4270 = vmul.f32 %v4256, %v4269
        %v4271 = vadd.f32 %v4270, 0.014752088
        %v4272 = vmul.f32 %v4256, %v4271
        %v4273 = vadd.f32 %v4272, 0.112945676
        %v4274 = vmul.f32 %v4256, %v4273
        %v4275 = vadd.f32 %v4274, 0.4994258
        %v4276 = vmul.f32 %v4256, %v4275
        %v4277 = vadd.f32 %v4276, 1.0
        %v4278 = vrcp.pop %v4277
        %v4279 = vmul.f32 %v4277, %v4278
        %v4280 = vsub.f32 1.0, %v4279
        %v4281 = vmul.f32 %v4278, %v4280
        %v4282 = vadd.f32 %v4278, %v4281
        %vm4283 = vweird.f32 %v4277
        %vm4284 = vweird.f32 %v4278
        %vm4285 = vmor %vm4283, %vm4284
        %v4286 = vsel %vm4285, %v4278, %v4282
        %v4287 = vand.u32 2147483647, %v4277
        %vm4288 = vcmp.eq.f32.partialorder %v4287, 8.507059e+37
        %v4289 = vand.u32 %v4277, 2147483648
        %v4290 = vor.u32 1.1754944e-38, %v4289
        %v4291 = vsel %vm4288, %v4290, %v4286
        %v4292 = vmul.f32 %v4267, %v4291
        %v4293 = vmin.f32 %v4292, 1.0
        %v4294 = vmax.f32 %v4293, -1.0
        %v4295 = vmul.f32 %v3967, %v3967
        %v4296 = vmin.f32 16.0, %v4295
        %v4297 = vmul.f32 %v4296, 2.1237322e-06
        %v4298 = vadd.f32 %v4297, 0.00028619796
        %v4299 = vmul.f32 %v4296, %v4298
        %v4300 = vadd.f32 %v4299, 0.0036580483
        %v4301 = vmul.f32 %v4296, %v4300
        %v4302 = vadd.f32 %v4301, 0.05243302
        %v4303 = vmul.f32 %v4296, %v4302
        %v4304 = vadd.f32 %v4303, 0.18741608
        %v4305 = vmul.f32 %v4296, %v4304
        %v4306 = vadd.f32 %v4305, 1.1283791
        %v4307 = vmul.f32 %v3967, %v4306
        %v4308 = vmul.f32 %v4296, 3.8918573e-05
        %v4309 = vadd.f32 %v4308, 0.001143296
        %v4310 = vmul.f32 %v4296, %v4309
        %v4311 = vadd.f32 %v4310, 0.014752088
        %v4312 = vmul.f32 %v4296, %v4311
        %v4313 = vadd.f32 %v4312, 0.112945676
        %v4314 = vmul.f32 %v4296, %v4313
        %v4315 = vadd.f32 %v4314, 0.4994258
        %v4316 = vmul.f32 %v4296, %v4315
        %v4317 = vadd.f32 %v4316, 1.0
        %v4318 = vrcp.pop %v4317
        %v4319 = vmul.f32 %v4317, %v4318
        %v4320 = vsub.f32 1.0, %v4319
        %v4321 = vmul.f32 %v4318, %v4320
        %v4322 = vadd.f32 %v4318, %v4321
        %vm4323 = vweird.f32 %v4317
        %vm4324 = vweird.f32 %v4318
        %vm4325 = vmor %vm4323, %vm4324
        %v4326 = vsel %vm4325, %v4318, %v4322
        %v4327 = vand.u32 2147483647, %v4317
        %vm4328 = vcmp.eq.f32.partialorder %v4327, 8.507059e+37
        %v4329 = vand.u32 %v4317, 2147483648
        %v4330 = vor.u32 1.1754944e-38, %v4329
        %v4331 = vsel %vm4328, %v4330, %v4326
        %v4332 = vmul.f32 %v4307, %v4331
        %v4333 = vmin.f32 %v4332, 1.0
        %v4334 = vmax.f32 %v4333, -1.0
        %v4335 = vmul.f32 %v3968, %v3968
        %v4336 = vmin.f32 16.0, %v4335
        %v4337 = vmul.f32 %v4336, 2.1237322e-06
        %v4338 = vadd.f32 %v4337, 0.00028619796
        %v4339 = vmul.f32 %v4336, %v4338
        %v4340 = vadd.f32 %v4339, 0.0036580483
        %v4341 = vmul.f32 %v4336, %v4340
        %v4342 = vadd.f32 %v4341, 0.05243302
        %v4343 = vmul.f32 %v4336, %v4342
        %v4344 = vadd.f32 %v4343, 0.18741608
        %v4345 = vmul.f32 %v4336, %v4344
        %v4346 = vadd.f32 %v4345, 1.1283791
        %v4347 = vmul.f32 %v3968, %v4346
        %v4348 = vmul.f32 %v4336, 3.8918573e-05
        %v4349 = vadd.f32 %v4348, 0.001143296
        %v4350 = vmul.f32 %v4336, %v4349
        %v4351 = vadd.f32 %v4350, 0.014752088
        %v4352 = vmul.f32 %v4336, %v4351
        %v4353 = vadd.f32 %v4352, 0.112945676
        %v4354 = vmul.f32 %v4336, %v4353
        %v4355 = vadd.f32 %v4354, 0.4994258
        %v4356 = vmul.f32 %v4336, %v4355
        %v4357 = vadd.f32 %v4356, 1.0
        %v4358 = vrcp.pop %v4357
        %v4359 = vmul.f32 %v4357, %v4358
        %v4360 = vsub.f32 1.0, %v4359
        %v4361 = vmul.f32 %v4358, %v4360
        %v4362 = vadd.f32 %v4358, %v4361
        %vm4363 = vweird.f32 %v4357
        %vm4364 = vweird.f32 %v4358
        %vm4365 = vmor %vm4363, %vm4364
        %v4366 = vsel %vm4365, %v4358, %v4362
        %v4367 = vand.u32 2147483647, %v4357
        %vm4368 = vcmp.eq.f32.partialorder %v4367, 8.507059e+37
        %v4369 = vand.u32 %v4357, 2147483648
        %v4370 = vor.u32 1.1754944e-38, %v4369
        %v4371 = vsel %vm4368, %v4370, %v4366
        %v4372 = vmul.f32 %v4347, %v4371
        %v4373 = vmin.f32 %v4372, 1.0
        %v4374 = vmax.f32 %v4373, -1.0
        %v4375 = vmul.f32 %v3969, %v3969
        %v4376 = vmin.f32 16.0, %v4375
        %v4377 = vmul.f32 %v4376, 2.1237322e-06
        %v4378 = vadd.f32 %v4377, 0.00028619796
        %v4379 = vmul.f32 %v4376, %v4378
        %v4380 = vadd.f32 %v4379, 0.0036580483
        %v4381 = vmul.f32 %v4376, %v4380
        %v4382 = vadd.f32 %v4381, 0.05243302
        %v4383 = vmul.f32 %v4376, %v4382
        %v4384 = vadd.f32 %v4383, 0.18741608
        %v4385 = vmul.f32 %v4376, %v4384
        %v4386 = vadd.f32 %v4385, 1.1283791
        %v4387 = vmul.f32 %v3969, %v4386
        %v4388 = vmul.f32 %v4376, 3.8918573e-05
        %v4389 = vadd.f32 %v4388, 0.001143296
        %v4390 = vmul.f32 %v4376, %v4389
        %v4391 = vadd.f32 %v4390, 0.014752088
        %v4392 = vmul.f32 %v4376, %v4391
        %v4393 = vadd.f32 %v4392, 0.112945676
        %v4394 = vmul.f32 %v4376, %v4393
        %v4395 = vadd.f32 %v4394, 0.4994258
        %v4396 = vmul.f32 %v4376, %v4395
        %v4397 = vadd.f32 %v4396, 1.0
        %v4398 = vrcp.pop %v4397
        %v4399 = vmul.f32 %v4397, %v4398
        %v4400 = vsub.f32 1.0, %v4399
        %v4401 = vmul.f32 %v4398, %v4400
        %v4402 = vadd.f32 %v4398, %v4401
        %vm4403 = vweird.f32 %v4397
        %vm4404 = vweird.f32 %v4398
        %vm4405 = vmor %vm4403, %vm4404
        %v4406 = vsel %vm4405, %v4398, %v4402
        %v4407 = vand.u32 2147483647, %v4397
        %vm4408 = vcmp.eq.f32.partialorder %v4407, 8.507059e+37
        %v4409 = vand.u32 %v4397, 2147483648
        %v4410 = vor.u32 1.1754944e-38, %v4409
        %v4411 = vsel %vm4408, %v4410, %v4406
        %v4412 = vmul.f32 %v4387, %v4411
        %v4413 = vmin.f32 %v4412, 1.0
        %v4414 = vmax.f32 %v4413, -1.0
        %v4415 = vmul.f32 %v3970, %v3970
        %v4416 = vmin.f32 16.0, %v4415
        %v4417 = vmul.f32 %v4416, 2.1237322e-06
        %v4418 = vadd.f32 %v4417, 0.00028619796
        %v4419 = vmul.f32 %v4416, %v4418
        %v4420 = vadd.f32 %v4419, 0.0036580483
        %v4421 = vmul.f32 %v4416, %v4420
        %v4422 = vadd.f32 %v4421, 0.05243302
        %v4423 = vmul.f32 %v4416, %v4422
        %v4424 = vadd.f32 %v4423, 0.18741608
        %v4425 = vmul.f32 %v4416, %v4424
        %v4426 = vadd.f32 %v4425, 1.1283791
        %v4427 = vmul.f32 %v3970, %v4426
        %v4428 = vmul.f32 %v4416, 3.8918573e-05
        %v4429 = vadd.f32 %v4428, 0.001143296
        %v4430 = vmul.f32 %v4416, %v4429
        %v4431 = vadd.f32 %v4430, 0.014752088
        %v4432 = vmul.f32 %v4416, %v4431
        %v4433 = vadd.f32 %v4432, 0.112945676
        %v4434 = vmul.f32 %v4416, %v4433
        %v4435 = vadd.f32 %v4434, 0.4994258
        %v4436 = vmul.f32 %v4416, %v4435
        %v4437 = vadd.f32 %v4436, 1.0
        %v4438 = vrcp.pop %v4437
        %v4439 = vmul.f32 %v4437, %v4438
        %v4440 = vsub.f32 1.0, %v4439
        %v4441 = vmul.f32 %v4438, %v4440
        %v4442 = vadd.f32 %v4438, %v4441
        %vm4443 = vweird.f32 %v4437
        %vm4444 = vweird.f32 %v4438
        %vm4445 = vmor %vm4443, %vm4444
        %v4446 = vsel %vm4445, %v4438, %v4442
        %v4447 = vand.u32 2147483647, %v4437
        %vm4448 = vcmp.eq.f32.partialorder %v4447, 8.507059e+37
        %v4449 = vand.u32 %v4437, 2147483648
        %v4450 = vor.u32 1.1754944e-38, %v4449
        %v4451 = vsel %vm4448, %v4450, %v4446
        %v4452 = vmul.f32 %v4427, %v4451
        %v4453 = vmin.f32 %v4452, 1.0
        %v4454 = vmax.f32 %v4453, -1.0
        %v4455 = vmul.f32 %v3971, %v3971
        %v4456 = vmin.f32 16.0, %v4455
        %v4457 = vmul.f32 %v4456, 2.1237322e-06
        %v4458 = vadd.f32 %v4457, 0.00028619796
        %v4459 = vmul.f32 %v4456, %v4458
        %v4460 = vadd.f32 %v4459, 0.0036580483
        %v4461 = vmul.f32 %v4456, %v4460
        %v4462 = vadd.f32 %v4461, 0.05243302
        %v4463 = vmul.f32 %v4456, %v4462
        %v4464 = vadd.f32 %v4463, 0.18741608
        %v4465 = vmul.f32 %v4456, %v4464
        %v4466 = vadd.f32 %v4465, 1.1283791
        %v4467 = vmul.f32 %v3971, %v4466
        %v4468 = vmul.f32 %v4456, 3.8918573e-05
        %v4469 = vadd.f32 %v4468, 0.001143296
        %v4470 = vmul.f32 %v4456, %v4469
        %v4471 = vadd.f32 %v4470, 0.014752088
        %v4472 = vmul.f32 %v4456, %v4471
        %v4473 = vadd.f32 %v4472, 0.112945676
        %v4474 = vmul.f32 %v4456, %v4473
        %v4475 = vadd.f32 %v4474, 0.4994258
        %v4476 = vmul.f32 %v4456, %v4475
        %v4477 = vadd.f32 %v4476, 1.0
        %v4478 = vrcp.pop %v4477
        %v4479 = vmul.f32 %v4477, %v4478
        %v4480 = vsub.f32 1.0, %v4479
        %v4481 = vmul.f32 %v4478, %v4480
        %v4482 = vadd.f32 %v4478, %v4481
        %vm4483 = vweird.f32 %v4477
        %vm4484 = vweird.f32 %v4478
        %vm4485 = vmor %vm4483, %vm4484
        %v4486 = vsel %vm4485, %v4478, %v4482
        %v4487 = vand.u32 2147483647, %v4477
        %vm4488 = vcmp.eq.f32.partialorder %v4487, 8.507059e+37
        %v4489 = vand.u32 %v4477, 2147483648
        %v4490 = vor.u32 1.1754944e-38, %v4489
        %v4491 = vsel %vm4488, %v4490, %v4486
        %v4492 = vmul.f32 %v4467, %v4491
        %v4493 = vmin.f32 %v4492, 1.0
        %v4494 = vmax.f32 %v4493, -1.0
        %v4495 = vmul.f32 %v3972, %v3972
        %v4496 = vmin.f32 16.0, %v4495
        %v4497 = vmul.f32 %v4496, 2.1237322e-06
        %v4498 = vadd.f32 %v4497, 0.00028619796
        %v4499 = vmul.f32 %v4496, %v4498
        %v4500 = vadd.f32 %v4499, 0.0036580483
        %v4501 = vmul.f32 %v4496, %v4500
        %v4502 = vadd.f32 %v4501, 0.05243302
        %v4503 = vmul.f32 %v4496, %v4502
        %v4504 = vadd.f32 %v4503, 0.18741608
        %v4505 = vmul.f32 %v4496, %v4504
        %v4506 = vadd.f32 %v4505, 1.1283791
        %v4507 = vmul.f32 %v3972, %v4506
        %v4508 = vmul.f32 %v4496, 3.8918573e-05
        %v4509 = vadd.f32 %v4508, 0.001143296
        %v4510 = vmul.f32 %v4496, %v4509
        %v4511 = vadd.f32 %v4510, 0.014752088
        %v4512 = vmul.f32 %v4496, %v4511
        %v4513 = vadd.f32 %v4512, 0.112945676
        %v4514 = vmul.f32 %v4496, %v4513
        %v4515 = vadd.f32 %v4514, 0.4994258
        %v4516 = vmul.f32 %v4496, %v4515
        %v4517 = vadd.f32 %v4516, 1.0
        %v4518 = vrcp.pop %v4517
        %v4519 = vmul.f32 %v4517, %v4518
        %v4520 = vsub.f32 1.0, %v4519
        %v4521 = vmul.f32 %v4518, %v4520
        %v4522 = vadd.f32 %v4518, %v4521
        %vm4523 = vweird.f32 %v4517
        %vm4524 = vweird.f32 %v4518
        %vm4525 = vmor %vm4523, %vm4524
        %v4526 = vsel %vm4525, %v4518, %v4522
        %v4527 = vand.u32 2147483647, %v4517
        %vm4528 = vcmp.eq.f32.partialorder %v4527, 8.507059e+37
        %v4529 = vand.u32 %v4517, 2147483648
        %v4530 = vor.u32 1.1754944e-38, %v4529
        %v4531 = vsel %vm4528, %v4530, %v4526
        %v4532 = vmul.f32 %v4507, %v4531
        %v4533 = vmin.f32 %v4532, 1.0
        %v4534 = vmax.f32 %v4533, -1.0
        %v4535 = vmul.f32 %v3973, %v3973
        %v4536 = vmin.f32 16.0, %v4535
        %v4537 = vmul.f32 %v4536, 2.1237322e-06
        %v4538 = vadd.f32 %v4537, 0.00028619796
        %v4539 = vmul.f32 %v4536, %v4538
        %v4540 = vadd.f32 %v4539, 0.0036580483
        %v4541 = vmul.f32 %v4536, %v4540
        %v4542 = vadd.f32 %v4541, 0.05243302
        %v4543 = vmul.f32 %v4536, %v4542
        %v4544 = vadd.f32 %v4543, 0.18741608
        %v4545 = vmul.f32 %v4536, %v4544
        %v4546 = vadd.f32 %v4545, 1.1283791
        %v4547 = vmul.f32 %v3973, %v4546
        %v4548 = vmul.f32 %v4536, 3.8918573e-05
        %v4549 = vadd.f32 %v4548, 0.001143296
        %v4550 = vmul.f32 %v4536, %v4549
        %v4551 = vadd.f32 %v4550, 0.014752088
        %v4552 = vmul.f32 %v4536, %v4551
        %v4553 = vadd.f32 %v4552, 0.112945676
        %v4554 = vmul.f32 %v4536, %v4553
        %v4555 = vadd.f32 %v4554, 0.4994258
        %v4556 = vmul.f32 %v4536, %v4555
        %v4557 = vadd.f32 %v4556, 1.0
        %v4558 = vrcp.pop %v4557
        %v4559 = vmul.f32 %v4557, %v4558
        %v4560 = vsub.f32 1.0, %v4559
        %v4561 = vmul.f32 %v4558, %v4560
        %v4562 = vadd.f32 %v4558, %v4561
        %vm4563 = vweird.f32 %v4557
        %vm4564 = vweird.f32 %v4558
        %vm4565 = vmor %vm4563, %vm4564
        %v4566 = vsel %vm4565, %v4558, %v4562
        %v4567 = vand.u32 2147483647, %v4557
        %vm4568 = vcmp.eq.f32.partialorder %v4567, 8.507059e+37
        %v4569 = vand.u32 %v4557, 2147483648
        %v4570 = vor.u32 1.1754944e-38, %v4569
        %v4571 = vsel %vm4568, %v4570, %v4566
        %v4572 = vmul.f32 %v4547, %v4571
        %v4573 = vmin.f32 %v4572, 1.0
        %v4574 = vmax.f32 %v4573, -1.0
        %v4575 = vmul.f32 %v3974, %v3974
        %v4576 = vmin.f32 16.0, %v4575
        %v4577 = vmul.f32 %v4576, 2.1237322e-06
        %v4578 = vadd.f32 %v4577, 0.00028619796
        %v4579 = vmul.f32 %v4576, %v4578
        %v4580 = vadd.f32 %v4579, 0.0036580483
        %v4581 = vmul.f32 %v4576, %v4580
        %v4582 = vadd.f32 %v4581, 0.05243302
        %v4583 = vmul.f32 %v4576, %v4582
        %v4584 = vadd.f32 %v4583, 0.18741608
        %v4585 = vmul.f32 %v4576, %v4584
        %v4586 = vadd.f32 %v4585, 1.1283791
        %v4587 = vmul.f32 %v3974, %v4586
        %v4588 = vmul.f32 %v4576, 3.8918573e-05
        %v4589 = vadd.f32 %v4588, 0.001143296
        %v4590 = vmul.f32 %v4576, %v4589
        %v4591 = vadd.f32 %v4590, 0.014752088
        %v4592 = vmul.f32 %v4576, %v4591
        %v4593 = vadd.f32 %v4592, 0.112945676
        %v4594 = vmul.f32 %v4576, %v4593
        %v4595 = vadd.f32 %v4594, 0.4994258
        %v4596 = vmul.f32 %v4576, %v4595
        %v4597 = vadd.f32 %v4596, 1.0
        %v4598 = vrcp.pop %v4597
        %v4599 = vmul.f32 %v4597, %v4598
        %v4600 = vsub.f32 1.0, %v4599
        %v4601 = vmul.f32 %v4598, %v4600
        %v4602 = vadd.f32 %v4598, %v4601
        %vm4603 = vweird.f32 %v4597
        %vm4604 = vweird.f32 %v4598
        %vm4605 = vmor %vm4603, %vm4604
        %v4606 = vsel %vm4605, %v4598, %v4602
        %v4607 = vand.u32 2147483647, %v4597
        %vm4608 = vcmp.eq.f32.partialorder %v4607, 8.507059e+37
        %v4609 = vand.u32 %v4597, 2147483648
        %v4610 = vor.u32 1.1754944e-38, %v4609
        %v4611 = vsel %vm4608, %v4610, %v4606
        %v4612 = vmul.f32 %v4587, %v4611
        %v4613 = vmin.f32 %v4612, 1.0
        %v4614 = vmax.f32 %v4613, -1.0
        %v4615 = vadd.f32 %v4014, 1.0
        %v4616 = vadd.f32 %v4054, 1.0
        %v4617 = vadd.f32 %v4094, 1.0
        %v4618 = vadd.f32 %v4134, 1.0
        %v4619 = vadd.f32 %v4174, 1.0
        %v4620 = vadd.f32 %v4214, 1.0
        %v4621 = vadd.f32 %v4254, 1.0
        %v4622 = vadd.f32 %v4294, 1.0
        %v4623 = vadd.f32 %v4334, 1.0
        %v4624 = vadd.f32 %v4374, 1.0
        %v4625 = vadd.f32 %v4414, 1.0
        %v4626 = vadd.f32 %v4454, 1.0
        %v4627 = vadd.f32 %v4494, 1.0
        %v4628 = vadd.f32 %v4534, 1.0
        %v4629 = vadd.f32 %v4574, 1.0
        %v4630 = vadd.f32 %v4614, 1.0
        %v4631 = vmul.f32 %v3943, %v4615
        %v4632 = vmul.f32 %v3944, %v4616
        %v4633 = vmul.f32 %v3945, %v4617
        %v4634 = vmul.f32 %v3946, %v4618
        %v4635 = vmul.f32 %v3947, %v4619
        %v4636 = vmul.f32 %v3948, %v4620
        %v4637 = vmul.f32 %v3949, %v4621
        %v4638 = vmul.f32 %v3950, %v4622
        %v4639 = vmul.f32 %v3951, %v4623
        %v4640 = vmul.f32 %v3952, %v4624
        %v4641 = vmul.f32 %v3953, %v4625
        %v4642 = vmul.f32 %v3954, %v4626
        %v4643 = vmul.f32 %v3955, %v4627
        %v4644 = vmul.f32 %v3956, %v4628
        %v4645 = vmul.f32 %v3957, %v4629
        %v4646 = vmul.f32 %v3958, %v4630
        %v4647 = vadd.f32 %v3464, %v2147
        %v4648 = vadd.f32 %v3467, %v2147
        %v4649 = vadd.f32 %v3470, %v2147
        %v4650 = vadd.f32 %v3473, %v2147
        %v4651 = vadd.f32 %v3476, %v2147
        %v4652 = vadd.f32 %v3479, %v2147
        %v4653 = vadd.f32 %v3482, %v2147
        %v4654 = vadd.f32 %v3485, %v2147
        %v4655 = vadd.f32 %v3488, %v2147
        %v4656 = vadd.f32 %v3491, %v2147
        %v4657 = vadd.f32 %v3494, %v2147
        %v4658 = vadd.f32 %v3497, %v2147
        %v4659 = vadd.f32 %v3500, %v2147
        %v4660 = vadd.f32 %v3503, %v2147
        %v4661 = vadd.f32 %v3506, %v2147
        %v4662 = vadd.f32 %v3509, %v2147
        %4679 = vrot.lane.b32.xlu0 %v4647, 120
        %v4680 = vpop.permute.xlu0 %4679
        %4681 = vrot.lane.b32.xlu0 %v4648, 120
        %v4682 = vpop.permute.xlu0 %4681
        %4683 = vrot.lane.b32.xlu0 %v4649, 120
        %v4684 = vpop.permute.xlu0 %4683
        %4685 = vrot.lane.b32.xlu0 %v4650, 120
        %v4686 = vpop.permute.xlu0 %4685
        %4687 = vrot.lane.b32.xlu0 %v4651, 120
        %v4688 = vpop.permute.xlu0 %4687
        %4689 = vrot.lane.b32.xlu0 %v4652, 120
        %v4690 = vpop.permute.xlu0 %4689
        %4691 = vrot.lane.b32.xlu0 %v4653, 120
        %v4692 = vpop.permute.xlu0 %4691
        %4693 = vrot.lane.b32.xlu0 %v4654, 120
        %v4694 = vpop.permute.xlu0 %4693
        %4695 = vrot.lane.b32.xlu0 %v4655, 120
        %v4696 = vpop.permute.xlu0 %4695
        %4697 = vrot.lane.b32.xlu0 %v4656, 120
        %v4698 = vpop.permute.xlu0 %4697
        %4699 = vrot.lane.b32.xlu0 %v4657, 120
        %v4700 = vpop.permute.xlu0 %4699
        %4701 = vrot.lane.b32.xlu0 %v4658, 120
        %v4702 = vpop.permute.xlu0 %4701
        %4703 = vrot.lane.b32.xlu0 %v4659, 120
        %v4704 = vpop.permute.xlu0 %4703
        %4705 = vrot.lane.b32.xlu0 %v4660, 120
        %v4706 = vpop.permute.xlu0 %4705
        %4707 = vrot.lane.b32.xlu0 %v4661, 120
        %v4708 = vpop.permute.xlu0 %4707
        %4709 = vrot.lane.b32.xlu0 %v4662, 120
        %v4710 = vpop.permute.xlu0 %4709
        %v4727 = vsel %vm761, %v4680, 0.0
        %4728 = vadd.xlane.f32.xlu0 %v4727
        %v4729 = vpop.xlane.xlu0 %4728
        %v4730 = vsel %vm761, %v4682, 0.0
        %4731 = vadd.xlane.f32.xlu0 %v4730
        %v4732 = vpop.xlane.xlu0 %4731
        %v4733 = vsel %vm761, %v4684, 0.0
        %4734 = vadd.xlane.f32.xlu0 %v4733
        %v4735 = vpop.xlane.xlu0 %4734
        %v4736 = vsel %vm761, %v4686, 0.0
        %4737 = vadd.xlane.f32.xlu0 %v4736
        %v4738 = vpop.xlane.xlu0 %4737
        %v4739 = vsel %vm761, %v4688, 0.0
        %4740 = vadd.xlane.f32.xlu0 %v4739
        %v4741 = vpop.xlane.xlu0 %4740
        %v4742 = vsel %vm761, %v4690, 0.0
        %4743 = vadd.xlane.f32.xlu0 %v4742
        %v4744 = vpop.xlane.xlu0 %4743
        %v4745 = vsel %vm761, %v4692, 0.0
        %4746 = vadd.xlane.f32.xlu0 %v4745
        %v4747 = vpop.xlane.xlu0 %4746
        %v4748 = vsel %vm761, %v4694, 0.0
        %4749 = vadd.xlane.f32.xlu0 %v4748
        %v4750 = vpop.xlane.xlu0 %4749
        %v4751 = vsel %vm761, %v4696, 0.0
        %4752 = vadd.xlane.f32.xlu0 %v4751
        %v4753 = vpop.xlane.xlu0 %4752
        %v4754 = vsel %vm761, %v4698, 0.0
        %4755 = vadd.xlane.f32.xlu0 %v4754
        %v4756 = vpop.xlane.xlu0 %4755
        %v4757 = vsel %vm761, %v4700, 0.0
        %4758 = vadd.xlane.f32.xlu0 %v4757
        %v4759 = vpop.xlane.xlu0 %4758
        %v4760 = vsel %vm761, %v4702, 0.0
        %4761 = vadd.xlane.f32.xlu0 %v4760
        %v4762 = vpop.xlane.xlu0 %4761
        %v4763 = vsel %vm761, %v4704, 0.0
        %4764 = vadd.xlane.f32.xlu0 %v4763
        %v4765 = vpop.xlane.xlu0 %4764
        %v4766 = vsel %vm761, %v4706, 0.0
        %4767 = vadd.xlane.f32.xlu0 %v4766
        %v4768 = vpop.xlane.xlu0 %4767
        %v4769 = vsel %vm761, %v4708, 0.0
        %4770 = vadd.xlane.f32.xlu0 %v4769
        %v4771 = vpop.xlane.xlu0 %4770
        %v4772 = vsel %vm761, %v4710, 0.0
        %4773 = vadd.xlane.f32.xlu0 %v4772
        %v4774 = vpop.xlane.xlu0 %4773
        %v4775 = vmul.f32 %v4647, %v4647
        %v4776 = vmul.f32 %v4648, %v4648
        %v4777 = vmul.f32 %v4649, %v4649
        %v4778 = vmul.f32 %v4650, %v4650
        %v4779 = vmul.f32 %v4651, %v4651
        %v4780 = vmul.f32 %v4652, %v4652
        %v4781 = vmul.f32 %v4653, %v4653
        %v4782 = vmul.f32 %v4654, %v4654
        %v4783 = vmul.f32 %v4655, %v4655
        %v4784 = vmul.f32 %v4656, %v4656
        %v4785 = vmul.f32 %v4657, %v4657
        %v4786 = vmul.f32 %v4658, %v4658
        %v4787 = vmul.f32 %v4659, %v4659
        %v4788 = vmul.f32 %v4660, %v4660
        %v4789 = vmul.f32 %v4661, %v4661
        %v4790 = vmul.f32 %v4662, %v4662
        %4807 = vrot.lane.b32.xlu0 %v4775, 120
        %v4808 = vpop.permute.xlu0 %4807
        %4809 = vrot.lane.b32.xlu0 %v4776, 120
        %v4810 = vpop.permute.xlu0 %4809
        %4811 = vrot.lane.b32.xlu0 %v4777, 120
        %v4812 = vpop.permute.xlu0 %4811
        %4813 = vrot.lane.b32.xlu0 %v4778, 120
        %v4814 = vpop.permute.xlu0 %4813
        %4815 = vrot.lane.b32.xlu0 %v4779, 120
        %v4816 = vpop.permute.xlu0 %4815
        %4817 = vrot.lane.b32.xlu0 %v4780, 120
        %v4818 = vpop.permute.xlu0 %4817
        %4819 = vrot.lane.b32.xlu0 %v4781, 120
        %v4820 = vpop.permute.xlu0 %4819
        %4821 = vrot.lane.b32.xlu0 %v4782, 120
        %v4822 = vpop.permute.xlu0 %4821
        %4823 = vrot.lane.b32.xlu0 %v4783, 120
        %v4824 = vpop.permute.xlu0 %4823
        %4825 = vrot.lane.b32.xlu0 %v4784, 120
        %v4826 = vpop.permute.xlu0 %4825
        %4827 = vrot.lane.b32.xlu0 %v4785, 120
        %v4828 = vpop.permute.xlu0 %4827
        %4829 = vrot.lane.b32.xlu0 %v4786, 120
        %v4830 = vpop.permute.xlu0 %4829
        %4831 = vrot.lane.b32.xlu0 %v4787, 120
        %v4832 = vpop.permute.xlu0 %4831
        %4833 = vrot.lane.b32.xlu0 %v4788, 120
        %v4834 = vpop.permute.xlu0 %4833
        %4835 = vrot.lane.b32.xlu0 %v4789, 120
        %v4836 = vpop.permute.xlu0 %4835
        %4837 = vrot.lane.b32.xlu0 %v4790, 120
        %v4838 = vpop.permute.xlu0 %4837
        %v4855 = vsel %vm761, %v4808, 0.0
        %4856 = vadd.xlane.f32.xlu0 %v4855
        %v4857 = vpop.xlane.xlu0 %4856
        %v4858 = vsel %vm761, %v4810, 0.0
        %4859 = vadd.xlane.f32.xlu0 %v4858
        %v4860 = vpop.xlane.xlu0 %4859
        %v4861 = vsel %vm761, %v4812, 0.0
        %4862 = vadd.xlane.f32.xlu0 %v4861
        %v4863 = vpop.xlane.xlu0 %4862
        %v4864 = vsel %vm761, %v4814, 0.0
        %4865 = vadd.xlane.f32.xlu0 %v4864
        %v4866 = vpop.xlane.xlu0 %4865
        %v4867 = vsel %vm761, %v4816, 0.0
        %4868 = vadd.xlane.f32.xlu0 %v4867
        %v4869 = vpop.xlane.xlu0 %4868
        %v4870 = vsel %vm761, %v4818, 0.0
        %4871 = vadd.xlane.f32.xlu0 %v4870
        %v4872 = vpop.xlane.xlu0 %4871
        %v4873 = vsel %vm761, %v4820, 0.0
        %4874 = vadd.xlane.f32.xlu0 %v4873
        %v4875 = vpop.xlane.xlu0 %4874
        %v4876 = vsel %vm761, %v4822, 0.0
        %4877 = vadd.xlane.f32.xlu0 %v4876
        %v4878 = vpop.xlane.xlu0 %4877
        %v4879 = vsel %vm761, %v4824, 0.0
        %4880 = vadd.xlane.f32.xlu0 %v4879
        %v4881 = vpop.xlane.xlu0 %4880
        %v4882 = vsel %vm761, %v4826, 0.0
        %4883 = vadd.xlane.f32.xlu0 %v4882
        %v4884 = vpop.xlane.xlu0 %4883
        %v4885 = vsel %vm761, %v4828, 0.0
        %4886 = vadd.xlane.f32.xlu0 %v4885
        %v4887 = vpop.xlane.xlu0 %4886
        %v4888 = vsel %vm761, %v4830, 0.0
        %4889 = vadd.xlane.f32.xlu0 %v4888
        %v4890 = vpop.xlane.xlu0 %4889
        %v4891 = vsel %vm761, %v4832, 0.0
        %4892 = vadd.xlane.f32.xlu0 %v4891
        %v4893 = vpop.xlane.xlu0 %4892
        %v4894 = vsel %vm761, %v4834, 0.0
        %4895 = vadd.xlane.f32.xlu0 %v4894
        %v4896 = vpop.xlane.xlu0 %4895
        %v4897 = vsel %vm761, %v4836, 0.0
        %4898 = vadd.xlane.f32.xlu0 %v4897
        %v4899 = vpop.xlane.xlu0 %4898
        %v4900 = vsel %vm761, %v4838, 0.0
        %4901 = vadd.xlane.f32.xlu0 %v4900
        %v4902 = vpop.xlane.xlu0 %4901
        %v4903 = vmul.f32 %v4729, 0.125
        %v4904 = vmul.f32 %v4732, 0.125
        %v4905 = vmul.f32 %v4735, 0.125
        %v4906 = vmul.f32 %v4738, 0.125
        %v4907 = vmul.f32 %v4741, 0.125
        %v4908 = vmul.f32 %v4744, 0.125
        %v4909 = vmul.f32 %v4747, 0.125
        %v4910 = vmul.f32 %v4750, 0.125
        %v4911 = vmul.f32 %v4753, 0.125
        %v4912 = vmul.f32 %v4756, 0.125
        %v4913 = vmul.f32 %v4759, 0.125
        %v4914 = vmul.f32 %v4762, 0.125
        %v4915 = vmul.f32 %v4765, 0.125
        %v4916 = vmul.f32 %v4768, 0.125
        %v4917 = vmul.f32 %v4771, 0.125
        %v4918 = vmul.f32 %v4774, 0.125
        %v4919 = vmul.f32 %v4857, 0.125
        %v4920 = vmul.f32 %v4860, 0.125
        %v4921 = vmul.f32 %v4863, 0.125
        %v4922 = vmul.f32 %v4866, 0.125
        %v4923 = vmul.f32 %v4869, 0.125
        %v4924 = vmul.f32 %v4872, 0.125
        %v4925 = vmul.f32 %v4875, 0.125
        %v4926 = vmul.f32 %v4878, 0.125
        %v4927 = vmul.f32 %v4881, 0.125
        %v4928 = vmul.f32 %v4884, 0.125
        %v4929 = vmul.f32 %v4887, 0.125
        %v4930 = vmul.f32 %v4890, 0.125
        %v4931 = vmul.f32 %v4893, 0.125
        %v4932 = vmul.f32 %v4896, 0.125
        %v4933 = vmul.f32 %v4899, 0.125
        %v4934 = vmul.f32 %v4902, 0.125
        %v4935 = vmul.f32 %v4903, %v4903
        %v4936 = vmul.f32 %v4904, %v4904
        %v4937 = vmul.f32 %v4905, %v4905
        %v4938 = vmul.f32 %v4906, %v4906
        %v4939 = vmul.f32 %v4907, %v4907
        %v4940 = vmul.f32 %v4908, %v4908
        %v4941 = vmul.f32 %v4909, %v4909
        %v4942 = vmul.f32 %v4910, %v4910
        %v4943 = vmul.f32 %v4911, %v4911
        %v4944 = vmul.f32 %v4912, %v4912
        %v4945 = vmul.f32 %v4913, %v4913
        %v4946 = vmul.f32 %v4914, %v4914
        %v4947 = vmul.f32 %v4915, %v4915
        %v4948 = vmul.f32 %v4916, %v4916
        %v4949 = vmul.f32 %v4917, %v4917
        %v4950 = vmul.f32 %v4918, %v4918
        %v4951 = vsub.f32 %v4919, %v4935
        %v4952 = vsub.f32 %v4920, %v4936
        %v4953 = vsub.f32 %v4921, %v4937
        %v4954 = vsub.f32 %v4922, %v4938
        %v4955 = vsub.f32 %v4923, %v4939
        %v4956 = vsub.f32 %v4924, %v4940
        %v4957 = vsub.f32 %v4925, %v4941
        %v4958 = vsub.f32 %v4926, %v4942
        %v4959 = vsub.f32 %v4927, %v4943
        %v4960 = vsub.f32 %v4928, %v4944
        %v4961 = vsub.f32 %v4929, %v4945
        %v4962 = vsub.f32 %v4930, %v4946
        %v4963 = vsub.f32 %v4931, %v4947
        %v4964 = vsub.f32 %v4932, %v4948
        %v4965 = vsub.f32 %v4933, %v4949
        %v4966 = vsub.f32 %v4934, %v4950
        %v4967 = vsub.f32 %v4647, %v4903
        %v4968 = vsub.f32 %v4648, %v4904
        %v4969 = vsub.f32 %v4649, %v4905
        %v4970 = vsub.f32 %v4650, %v4906
        %v4971 = vsub.f32 %v4651, %v4907
        %v4972 = vsub.f32 %v4652, %v4908
        %v4973 = vsub.f32 %v4653, %v4909
        %v4974 = vsub.f32 %v4654, %v4910
        %v4975 = vsub.f32 %v4655, %v4911
        %v4976 = vsub.f32 %v4656, %v4912
        %v4977 = vsub.f32 %v4657, %v4913
        %v4978 = vsub.f32 %v4658, %v4914
        %v4979 = vsub.f32 %v4659, %v4915
        %v4980 = vsub.f32 %v4660, %v4916
        %v4981 = vsub.f32 %v4661, %v4917
        %v4982 = vsub.f32 %v4662, %v4918
        %v4983 = vadd.f32 %v4951, 1e-06
        %v4984 = vadd.f32 %v4952, 1e-06
        %v4985 = vadd.f32 %v4953, 1e-06
        %v4986 = vadd.f32 %v4954, 1e-06
        %v4987 = vadd.f32 %v4955, 1e-06
        %v4988 = vadd.f32 %v4956, 1e-06
        %v4989 = vadd.f32 %v4957, 1e-06
        %v4990 = vadd.f32 %v4958, 1e-06
        %v4991 = vadd.f32 %v4959, 1e-06
        %v4992 = vadd.f32 %v4960, 1e-06
        %v4993 = vadd.f32 %v4961, 1e-06
        %v4994 = vadd.f32 %v4962, 1e-06
        %v4995 = vadd.f32 %v4963, 1e-06
        %v4996 = vadd.f32 %v4964, 1e-06
        %v4997 = vadd.f32 %v4965, 1e-06
        %v4998 = vadd.f32 %v4966, 1e-06
        %v4999 = vrsqrt.pop %v4983
        %v5000 = vmul.f32 %v4999, %v4983
        %v5001 = vmul.f32 %v5000, %v4999
        %v5002 = vmul.f32 0.5, %v5001
        %v5003 = vsub.f32 1.5, %v5002
        %v5004 = vmul.f32 %v4999, %v5003
        %vm5005 = vweird.f32 %v4983
        %vm5006 = vweird.f32 %v4999
        %vm5007 = vmor %vm5005, %vm5006
        %v5008 = vsel %vm5007, %v4999, %v5004
        %v5009 = vrsqrt.pop %v4984
        %v5010 = vmul.f32 %v5009, %v4984
        %v5011 = vmul.f32 %v5010, %v5009
        %v5012 = vmul.f32 0.5, %v5011
        %v5013 = vsub.f32 1.5, %v5012
        %v5014 = vmul.f32 %v5009, %v5013
        %vm5015 = vweird.f32 %v4984
        %vm5016 = vweird.f32 %v5009
        %vm5017 = vmor %vm5015, %vm5016
        %v5018 = vsel %vm5017, %v5009, %v5014
        %v5019 = vrsqrt.pop %v4985
        %v5020 = vmul.f32 %v5019, %v4985
        %v5021 = vmul.f32 %v5020, %v5019
        %v5022 = vmul.f32 0.5, %v5021
        %v5023 = vsub.f32 1.5, %v5022
        %v5024 = vmul.f32 %v5019, %v5023
        %vm5025 = vweird.f32 %v4985
        %vm5026 = vweird.f32 %v5019
        %vm5027 = vmor %vm5025, %vm5026
        %v5028 = vsel %vm5027, %v5019, %v5024
        %v5029 = vrsqrt.pop %v4986
        %v5030 = vmul.f32 %v5029, %v4986
        %v5031 = vmul.f32 %v5030, %v5029
        %v5032 = vmul.f32 0.5, %v5031
        %v5033 = vsub.f32 1.5, %v5032
        %v5034 = vmul.f32 %v5029, %v5033
        %vm5035 = vweird.f32 %v4986
        %vm5036 = vweird.f32 %v5029
        %vm5037 = vmor %vm5035, %vm5036
        %v5038 = vsel %vm5037, %v5029, %v5034
        %v5039 = vrsqrt.pop %v4987
        %v5040 = vmul.f32 %v5039, %v4987
        %v5041 = vmul.f32 %v5040, %v5039
        %v5042 = vmul.f32 0.5, %v5041
        %v5043 = vsub.f32 1.5, %v5042
        %v5044 = vmul.f32 %v5039, %v5043
        %vm5045 = vweird.f32 %v4987
        %vm5046 = vweird.f32 %v5039
        %vm5047 = vmor %vm5045, %vm5046
        %v5048 = vsel %vm5047, %v5039, %v5044
        %v5049 = vrsqrt.pop %v4988
        %v5050 = vmul.f32 %v5049, %v4988
        %v5051 = vmul.f32 %v5050, %v5049
        %v5052 = vmul.f32 0.5, %v5051
        %v5053 = vsub.f32 1.5, %v5052
        %v5054 = vmul.f32 %v5049, %v5053
        %vm5055 = vweird.f32 %v4988
        %vm5056 = vweird.f32 %v5049
        %vm5057 = vmor %vm5055, %vm5056
        %v5058 = vsel %vm5057, %v5049, %v5054
        %v5059 = vrsqrt.pop %v4989
        %v5060 = vmul.f32 %v5059, %v4989
        %v5061 = vmul.f32 %v5060, %v5059
        %v5062 = vmul.f32 0.5, %v5061
        %v5063 = vsub.f32 1.5, %v5062
        %v5064 = vmul.f32 %v5059, %v5063
        %vm5065 = vweird.f32 %v4989
        %vm5066 = vweird.f32 %v5059
        %vm5067 = vmor %vm5065, %vm5066
        %v5068 = vsel %vm5067, %v5059, %v5064
        %v5069 = vrsqrt.pop %v4990
        %v5070 = vmul.f32 %v5069, %v4990
        %v5071 = vmul.f32 %v5070, %v5069
        %v5072 = vmul.f32 0.5, %v5071
        %v5073 = vsub.f32 1.5, %v5072
        %v5074 = vmul.f32 %v5069, %v5073
        %vm5075 = vweird.f32 %v4990
        %vm5076 = vweird.f32 %v5069
        %vm5077 = vmor %vm5075, %vm5076
        %v5078 = vsel %vm5077, %v5069, %v5074
        %v5079 = vrsqrt.pop %v4991
        %v5080 = vmul.f32 %v5079, %v4991
        %v5081 = vmul.f32 %v5080, %v5079
        %v5082 = vmul.f32 0.5, %v5081
        %v5083 = vsub.f32 1.5, %v5082
        %v5084 = vmul.f32 %v5079, %v5083
        %vm5085 = vweird.f32 %v4991
        %vm5086 = vweird.f32 %v5079
        %vm5087 = vmor %vm5085, %vm5086
        %v5088 = vsel %vm5087, %v5079, %v5084
        %v5089 = vrsqrt.pop %v4992
        %v5090 = vmul.f32 %v5089, %v4992
        %v5091 = vmul.f32 %v5090, %v5089
        %v5092 = vmul.f32 0.5, %v5091
        %v5093 = vsub.f32 1.5, %v5092
        %v5094 = vmul.f32 %v5089, %v5093
        %vm5095 = vweird.f32 %v4992
        %vm5096 = vweird.f32 %v5089
        %vm5097 = vmor %vm5095, %vm5096
        %v5098 = vsel %vm5097, %v5089, %v5094
        %v5099 = vrsqrt.pop %v4993
        %v5100 = vmul.f32 %v5099, %v4993
        %v5101 = vmul.f32 %v5100, %v5099
        %v5102 = vmul.f32 0.5, %v5101
        %v5103 = vsub.f32 1.5, %v5102
        %v5104 = vmul.f32 %v5099, %v5103
        %vm5105 = vweird.f32 %v4993
        %vm5106 = vweird.f32 %v5099
        %vm5107 = vmor %vm5105, %vm5106
        %v5108 = vsel %vm5107, %v5099, %v5104
        %v5109 = vrsqrt.pop %v4994
        %v5110 = vmul.f32 %v5109, %v4994
        %v5111 = vmul.f32 %v5110, %v5109
        %v5112 = vmul.f32 0.5, %v5111
        %v5113 = vsub.f32 1.5, %v5112
        %v5114 = vmul.f32 %v5109, %v5113
        %vm5115 = vweird.f32 %v4994
        %vm5116 = vweird.f32 %v5109
        %vm5117 = vmor %vm5115, %vm5116
        %v5118 = vsel %vm5117, %v5109, %v5114
        %v5119 = vrsqrt.pop %v4995
        %v5120 = vmul.f32 %v5119, %v4995
        %v5121 = vmul.f32 %v5120, %v5119
        %v5122 = vmul.f32 0.5, %v5121
        %v5123 = vsub.f32 1.5, %v5122
        %v5124 = vmul.f32 %v5119, %v5123
        %vm5125 = vweird.f32 %v4995
        %vm5126 = vweird.f32 %v5119
        %vm5127 = vmor %vm5125, %vm5126
        %v5128 = vsel %vm5127, %v5119, %v5124
        %v5129 = vrsqrt.pop %v4996
        %v5130 = vmul.f32 %v5129, %v4996
        %v5131 = vmul.f32 %v5130, %v5129
        %v5132 = vmul.f32 0.5, %v5131
        %v5133 = vsub.f32 1.5, %v5132
        %v5134 = vmul.f32 %v5129, %v5133
        %vm5135 = vweird.f32 %v4996
        %vm5136 = vweird.f32 %v5129
        %vm5137 = vmor %vm5135, %vm5136
        %v5138 = vsel %vm5137, %v5129, %v5134
        %v5139 = vrsqrt.pop %v4997
        %v5140 = vmul.f32 %v5139, %v4997
        %v5141 = vmul.f32 %v5140, %v5139
        %v5142 = vmul.f32 0.5, %v5141
        %v5143 = vsub.f32 1.5, %v5142
        %v5144 = vmul.f32 %v5139, %v5143
        %vm5145 = vweird.f32 %v4997
        %vm5146 = vweird.f32 %v5139
        %vm5147 = vmor %vm5145, %vm5146
        %v5148 = vsel %vm5147, %v5139, %v5144
        %v5149 = vrsqrt.pop %v4998
        %v5150 = vmul.f32 %v5149, %v4998
        %v5151 = vmul.f32 %v5150, %v5149
        %v5152 = vmul.f32 0.5, %v5151
        %v5153 = vsub.f32 1.5, %v5152
        %v5154 = vmul.f32 %v5149, %v5153
        %vm5155 = vweird.f32 %v4998
        %vm5156 = vweird.f32 %v5149
        %vm5157 = vmor %vm5155, %vm5156
        %v5158 = vsel %vm5157, %v5149, %v5154
        %v5159 = vmul.f32 %v4967, %v5008
        %v5160 = vmul.f32 %v4968, %v5018
        %v5161 = vmul.f32 %v4969, %v5028
        %v5162 = vmul.f32 %v4970, %v5038
        %v5163 = vmul.f32 %v4971, %v5048
        %v5164 = vmul.f32 %v4972, %v5058
        %v5165 = vmul.f32 %v4973, %v5068
        %v5166 = vmul.f32 %v4974, %v5078
        %v5167 = vmul.f32 %v4975, %v5088
        %v5168 = vmul.f32 %v4976, %v5098
        %v5169 = vmul.f32 %v4977, %v5108
        %v5170 = vmul.f32 %v4978, %v5118
        %v5171 = vmul.f32 %v4979, %v5128
        %v5172 = vmul.f32 %v4980, %v5138
        %v5173 = vmul.f32 %v4981, %v5148
        %v5174 = vmul.f32 %v4982, %v5158
        %v5175 = vmul.f32 %v5159, %v2679
        %v5176 = vmul.f32 %v5160, %v2679
        %v5177 = vmul.f32 %v5161, %v2679
        %v5178 = vmul.f32 %v5162, %v2679
        %v5179 = vmul.f32 %v5163, %v2679
        %v5180 = vmul.f32 %v5164, %v2679
        %v5181 = vmul.f32 %v5165, %v2679
        %v5182 = vmul.f32 %v5166, %v2679
        %v5183 = vmul.f32 %v5167, %v2679
        %v5184 = vmul.f32 %v5168, %v2679
        %v5185 = vmul.f32 %v5169, %v2679
        %v5186 = vmul.f32 %v5170, %v2679
        %v5187 = vmul.f32 %v5171, %v2679
        %v5188 = vmul.f32 %v5172, %v2679
        %v5189 = vmul.f32 %v5173, %v2679
        %v5190 = vmul.f32 %v5174, %v2679
        %v5191 = vadd.f32 %v5175, %v2699
        %v5192 = vadd.f32 %v5176, %v2699
        %v5193 = vadd.f32 %v5177, %v2699
        %v5194 = vadd.f32 %v5178, %v2699
        %v5195 = vadd.f32 %v5179, %v2699
        %v5196 = vadd.f32 %v5180, %v2699
        %v5197 = vadd.f32 %v5181, %v2699
        %v5198 = vadd.f32 %v5182, %v2699
        %v5199 = vadd.f32 %v5183, %v2699
        %v5200 = vadd.f32 %v5184, %v2699
        %v5201 = vadd.f32 %v5185, %v2699
        %v5202 = vadd.f32 %v5186, %v2699
        %v5203 = vadd.f32 %v5187, %v2699
        %v5204 = vadd.f32 %v5188, %v2699
        %v5205 = vadd.f32 %v5189, %v2699
        %v5206 = vadd.f32 %v5190, %v2699
        %v5207 = vmul.f32 %v5191, 0.5
        %v5208 = vmul.f32 %v5192, 0.5
        %v5209 = vmul.f32 %v5193, 0.5
        %v5210 = vmul.f32 %v5194, 0.5
        %v5211 = vmul.f32 %v5195, 0.5
        %v5212 = vmul.f32 %v5196, 0.5
        %v5213 = vmul.f32 %v5197, 0.5
        %v5214 = vmul.f32 %v5198, 0.5
        %v5215 = vmul.f32 %v5199, 0.5
        %v5216 = vmul.f32 %v5200, 0.5
        %v5217 = vmul.f32 %v5201, 0.5
        %v5218 = vmul.f32 %v5202, 0.5
        %v5219 = vmul.f32 %v5203, 0.5
        %v5220 = vmul.f32 %v5204, 0.5
        %v5221 = vmul.f32 %v5205, 0.5
        %v5222 = vmul.f32 %v5206, 0.5
        %v5223 = vmul.f32 %v5191, 0.70710677
        %v5224 = vmul.f32 %v5192, 0.70710677
        %v5225 = vmul.f32 %v5193, 0.70710677
        %v5226 = vmul.f32 %v5194, 0.70710677
        %v5227 = vmul.f32 %v5195, 0.70710677
        %v5228 = vmul.f32 %v5196, 0.70710677
        %v5229 = vmul.f32 %v5197, 0.70710677
        %v5230 = vmul.f32 %v5198, 0.70710677
        %v5231 = vmul.f32 %v5199, 0.70710677
        %v5232 = vmul.f32 %v5200, 0.70710677
        %v5233 = vmul.f32 %v5201, 0.70710677
        %v5234 = vmul.f32 %v5202, 0.70710677
        %v5235 = vmul.f32 %v5203, 0.70710677
        %v5236 = vmul.f32 %v5204, 0.70710677
        %v5237 = vmul.f32 %v5205, 0.70710677
        %v5238 = vmul.f32 %v5206, 0.70710677
        %v5239 = vmul.f32 %v5223, %v5223
        %v5240 = vmin.f32 16.0, %v5239
        %v5241 = vmul.f32 %v5240, 2.1237322e-06
        %v5242 = vadd.f32 %v5241, 0.00028619796
        %v5243 = vmul.f32 %v5240, %v5242
        %v5244 = vadd.f32 %v5243, 0.0036580483
        %v5245 = vmul.f32 %v5240, %v5244
        %v5246 = vadd.f32 %v5245, 0.05243302
        %v5247 = vmul.f32 %v5240, %v5246
        %v5248 = vadd.f32 %v5247, 0.18741608
        %v5249 = vmul.f32 %v5240, %v5248
        %v5250 = vadd.f32 %v5249, 1.1283791
        %v5251 = vmul.f32 %v5223, %v5250
        %v5252 = vmul.f32 %v5240, 3.8918573e-05
        %v5253 = vadd.f32 %v5252, 0.001143296
        %v5254 = vmul.f32 %v5240, %v5253
        %v5255 = vadd.f32 %v5254, 0.014752088
        %v5256 = vmul.f32 %v5240, %v5255
        %v5257 = vadd.f32 %v5256, 0.112945676
        %v5258 = vmul.f32 %v5240, %v5257
        %v5259 = vadd.f32 %v5258, 0.4994258
        %v5260 = vmul.f32 %v5240, %v5259
        %v5261 = vadd.f32 %v5260, 1.0
        %v5262 = vrcp.pop %v5261
        %v5263 = vmul.f32 %v5261, %v5262
        %v5264 = vsub.f32 1.0, %v5263
        %v5265 = vmul.f32 %v5262, %v5264
        %v5266 = vadd.f32 %v5262, %v5265
        %vm5267 = vweird.f32 %v5261
        %vm5268 = vweird.f32 %v5262
        %vm5269 = vmor %vm5267, %vm5268
        %v5270 = vsel %vm5269, %v5262, %v5266
        %v5271 = vand.u32 2147483647, %v5261
        %vm5272 = vcmp.eq.f32.partialorder %v5271, 8.507059e+37
        %v5273 = vand.u32 %v5261, 2147483648
        %v5274 = vor.u32 1.1754944e-38, %v5273
        %v5275 = vsel %vm5272, %v5274, %v5270
        %v5276 = vmul.f32 %v5251, %v5275
        %v5277 = vmin.f32 %v5276, 1.0
        %v5278 = vmax.f32 %v5277, -1.0
        %v5279 = vmul.f32 %v5224, %v5224
        %v5280 = vmin.f32 16.0, %v5279
        %v5281 = vmul.f32 %v5280, 2.1237322e-06
        %v5282 = vadd.f32 %v5281, 0.00028619796
        %v5283 = vmul.f32 %v5280, %v5282
        %v5284 = vadd.f32 %v5283, 0.0036580483
        %v5285 = vmul.f32 %v5280, %v5284
        %v5286 = vadd.f32 %v5285, 0.05243302
        %v5287 = vmul.f32 %v5280, %v5286
        %v5288 = vadd.f32 %v5287, 0.18741608
        %v5289 = vmul.f32 %v5280, %v5288
        %v5290 = vadd.f32 %v5289, 1.1283791
        %v5291 = vmul.f32 %v5224, %v5290
        %v5292 = vmul.f32 %v5280, 3.8918573e-05
        %v5293 = vadd.f32 %v5292, 0.001143296
        %v5294 = vmul.f32 %v5280, %v5293
        %v5295 = vadd.f32 %v5294, 0.014752088
        %v5296 = vmul.f32 %v5280, %v5295
        %v5297 = vadd.f32 %v5296, 0.112945676
        %v5298 = vmul.f32 %v5280, %v5297
        %v5299 = vadd.f32 %v5298, 0.4994258
        %v5300 = vmul.f32 %v5280, %v5299
        %v5301 = vadd.f32 %v5300, 1.0
        %v5302 = vrcp.pop %v5301
        %v5303 = vmul.f32 %v5301, %v5302
        %v5304 = vsub.f32 1.0, %v5303
        %v5305 = vmul.f32 %v5302, %v5304
        %v5306 = vadd.f32 %v5302, %v5305
        %vm5307 = vweird.f32 %v5301
        %vm5308 = vweird.f32 %v5302
        %vm5309 = vmor %vm5307, %vm5308
        %v5310 = vsel %vm5309, %v5302, %v5306
        %v5311 = vand.u32 2147483647, %v5301
        %vm5312 = vcmp.eq.f32.partialorder %v5311, 8.507059e+37
        %v5313 = vand.u32 %v5301, 2147483648
        %v5314 = vor.u32 1.1754944e-38, %v5313
        %v5315 = vsel %vm5312, %v5314, %v5310
        %v5316 = vmul.f32 %v5291, %v5315
        %v5317 = vmin.f32 %v5316, 1.0
        %v5318 = vmax.f32 %v5317, -1.0
        %v5319 = vmul.f32 %v5225, %v5225
        %v5320 = vmin.f32 16.0, %v5319
        %v5321 = vmul.f32 %v5320, 2.1237322e-06
        %v5322 = vadd.f32 %v5321, 0.00028619796
        %v5323 = vmul.f32 %v5320, %v5322
        %v5324 = vadd.f32 %v5323, 0.0036580483
        %v5325 = vmul.f32 %v5320, %v5324
        %v5326 = vadd.f32 %v5325, 0.05243302
        %v5327 = vmul.f32 %v5320, %v5326
        %v5328 = vadd.f32 %v5327, 0.18741608
        %v5329 = vmul.f32 %v5320, %v5328
        %v5330 = vadd.f32 %v5329, 1.1283791
        %v5331 = vmul.f32 %v5225, %v5330
        %v5332 = vmul.f32 %v5320, 3.8918573e-05
        %v5333 = vadd.f32 %v5332, 0.001143296
        %v5334 = vmul.f32 %v5320, %v5333
        %v5335 = vadd.f32 %v5334, 0.014752088
        %v5336 = vmul.f32 %v5320, %v5335
        %v5337 = vadd.f32 %v5336, 0.112945676
        %v5338 = vmul.f32 %v5320, %v5337
        %v5339 = vadd.f32 %v5338, 0.4994258
        %v5340 = vmul.f32 %v5320, %v5339
        %v5341 = vadd.f32 %v5340, 1.0
        %v5342 = vrcp.pop %v5341
        %v5343 = vmul.f32 %v5341, %v5342
        %v5344 = vsub.f32 1.0, %v5343
        %v5345 = vmul.f32 %v5342, %v5344
        %v5346 = vadd.f32 %v5342, %v5345
        %vm5347 = vweird.f32 %v5341
        %vm5348 = vweird.f32 %v5342
        %vm5349 = vmor %vm5347, %vm5348
        %v5350 = vsel %vm5349, %v5342, %v5346
        %v5351 = vand.u32 2147483647, %v5341
        %vm5352 = vcmp.eq.f32.partialorder %v5351, 8.507059e+37
        %v5353 = vand.u32 %v5341, 2147483648
        %v5354 = vor.u32 1.1754944e-38, %v5353
        %v5355 = vsel %vm5352, %v5354, %v5350
        %v5356 = vmul.f32 %v5331, %v5355
        %v5357 = vmin.f32 %v5356, 1.0
        %v5358 = vmax.f32 %v5357, -1.0
        %v5359 = vmul.f32 %v5226, %v5226
        %v5360 = vmin.f32 16.0, %v5359
        %v5361 = vmul.f32 %v5360, 2.1237322e-06
        %v5362 = vadd.f32 %v5361, 0.00028619796
        %v5363 = vmul.f32 %v5360, %v5362
        %v5364 = vadd.f32 %v5363, 0.0036580483
        %v5365 = vmul.f32 %v5360, %v5364
        %v5366 = vadd.f32 %v5365, 0.05243302
        %v5367 = vmul.f32 %v5360, %v5366
        %v5368 = vadd.f32 %v5367, 0.18741608
        %v5369 = vmul.f32 %v5360, %v5368
        %v5370 = vadd.f32 %v5369, 1.1283791
        %v5371 = vmul.f32 %v5226, %v5370
        %v5372 = vmul.f32 %v5360, 3.8918573e-05
        %v5373 = vadd.f32 %v5372, 0.001143296
        %v5374 = vmul.f32 %v5360, %v5373
        %v5375 = vadd.f32 %v5374, 0.014752088
        %v5376 = vmul.f32 %v5360, %v5375
        %v5377 = vadd.f32 %v5376, 0.112945676
        %v5378 = vmul.f32 %v5360, %v5377
        %v5379 = vadd.f32 %v5378, 0.4994258
        %v5380 = vmul.f32 %v5360, %v5379
        %v5381 = vadd.f32 %v5380, 1.0
        %v5382 = vrcp.pop %v5381
        %v5383 = vmul.f32 %v5381, %v5382
        %v5384 = vsub.f32 1.0, %v5383
        %v5385 = vmul.f32 %v5382, %v5384
        %v5386 = vadd.f32 %v5382, %v5385
        %vm5387 = vweird.f32 %v5381
        %vm5388 = vweird.f32 %v5382
        %vm5389 = vmor %vm5387, %vm5388
        %v5390 = vsel %vm5389, %v5382, %v5386
        %v5391 = vand.u32 2147483647, %v5381
        %vm5392 = vcmp.eq.f32.partialorder %v5391, 8.507059e+37
        %v5393 = vand.u32 %v5381, 2147483648
        %v5394 = vor.u32 1.1754944e-38, %v5393
        %v5395 = vsel %vm5392, %v5394, %v5390
        %v5396 = vmul.f32 %v5371, %v5395
        %v5397 = vmin.f32 %v5396, 1.0
        %v5398 = vmax.f32 %v5397, -1.0
        %v5399 = vmul.f32 %v5227, %v5227
        %v5400 = vmin.f32 16.0, %v5399
        %v5401 = vmul.f32 %v5400, 2.1237322e-06
        %v5402 = vadd.f32 %v5401, 0.00028619796
        %v5403 = vmul.f32 %v5400, %v5402
        %v5404 = vadd.f32 %v5403, 0.0036580483
        %v5405 = vmul.f32 %v5400, %v5404
        %v5406 = vadd.f32 %v5405, 0.05243302
        %v5407 = vmul.f32 %v5400, %v5406
        %v5408 = vadd.f32 %v5407, 0.18741608
        %v5409 = vmul.f32 %v5400, %v5408
        %v5410 = vadd.f32 %v5409, 1.1283791
        %v5411 = vmul.f32 %v5227, %v5410
        %v5412 = vmul.f32 %v5400, 3.8918573e-05
        %v5413 = vadd.f32 %v5412, 0.001143296
        %v5414 = vmul.f32 %v5400, %v5413
        %v5415 = vadd.f32 %v5414, 0.014752088
        %v5416 = vmul.f32 %v5400, %v5415
        %v5417 = vadd.f32 %v5416, 0.112945676
        %v5418 = vmul.f32 %v5400, %v5417
        %v5419 = vadd.f32 %v5418, 0.4994258
        %v5420 = vmul.f32 %v5400, %v5419
        %v5421 = vadd.f32 %v5420, 1.0
        %v5422 = vrcp.pop %v5421
        %v5423 = vmul.f32 %v5421, %v5422
        %v5424 = vsub.f32 1.0, %v5423
        %v5425 = vmul.f32 %v5422, %v5424
        %v5426 = vadd.f32 %v5422, %v5425
        %vm5427 = vweird.f32 %v5421
        %vm5428 = vweird.f32 %v5422
        %vm5429 = vmor %vm5427, %vm5428
        %v5430 = vsel %vm5429, %v5422, %v5426
        %v5431 = vand.u32 2147483647, %v5421
        %vm5432 = vcmp.eq.f32.partialorder %v5431, 8.507059e+37
        %v5433 = vand.u32 %v5421, 2147483648
        %v5434 = vor.u32 1.1754944e-38, %v5433
        %v5435 = vsel %vm5432, %v5434, %v5430
        %v5436 = vmul.f32 %v5411, %v5435
        %v5437 = vmin.f32 %v5436, 1.0
        %v5438 = vmax.f32 %v5437, -1.0
        %v5439 = vmul.f32 %v5228, %v5228
        %v5440 = vmin.f32 16.0, %v5439
        %v5441 = vmul.f32 %v5440, 2.1237322e-06
        %v5442 = vadd.f32 %v5441, 0.00028619796
        %v5443 = vmul.f32 %v5440, %v5442
        %v5444 = vadd.f32 %v5443, 0.0036580483
        %v5445 = vmul.f32 %v5440, %v5444
        %v5446 = vadd.f32 %v5445, 0.05243302
        %v5447 = vmul.f32 %v5440, %v5446
        %v5448 = vadd.f32 %v5447, 0.18741608
        %v5449 = vmul.f32 %v5440, %v5448
        %v5450 = vadd.f32 %v5449, 1.1283791
        %v5451 = vmul.f32 %v5228, %v5450
        %v5452 = vmul.f32 %v5440, 3.8918573e-05
        %v5453 = vadd.f32 %v5452, 0.001143296
        %v5454 = vmul.f32 %v5440, %v5453
        %v5455 = vadd.f32 %v5454, 0.014752088
        %v5456 = vmul.f32 %v5440, %v5455
        %v5457 = vadd.f32 %v5456, 0.112945676
        %v5458 = vmul.f32 %v5440, %v5457
        %v5459 = vadd.f32 %v5458, 0.4994258
        %v5460 = vmul.f32 %v5440, %v5459
        %v5461 = vadd.f32 %v5460, 1.0
        %v5462 = vrcp.pop %v5461
        %v5463 = vmul.f32 %v5461, %v5462
        %v5464 = vsub.f32 1.0, %v5463
        %v5465 = vmul.f32 %v5462, %v5464
        %v5466 = vadd.f32 %v5462, %v5465
        %vm5467 = vweird.f32 %v5461
        %vm5468 = vweird.f32 %v5462
        %vm5469 = vmor %vm5467, %vm5468
        %v5470 = vsel %vm5469, %v5462, %v5466
        %v5471 = vand.u32 2147483647, %v5461
        %vm5472 = vcmp.eq.f32.partialorder %v5471, 8.507059e+37
        %v5473 = vand.u32 %v5461, 2147483648
        %v5474 = vor.u32 1.1754944e-38, %v5473
        %v5475 = vsel %vm5472, %v5474, %v5470
        %v5476 = vmul.f32 %v5451, %v5475
        %v5477 = vmin.f32 %v5476, 1.0
        %v5478 = vmax.f32 %v5477, -1.0
        %v5479 = vmul.f32 %v5229, %v5229
        %v5480 = vmin.f32 16.0, %v5479
        %v5481 = vmul.f32 %v5480, 2.1237322e-06
        %v5482 = vadd.f32 %v5481, 0.00028619796
        %v5483 = vmul.f32 %v5480, %v5482
        %v5484 = vadd.f32 %v5483, 0.0036580483
        %v5485 = vmul.f32 %v5480, %v5484
        %v5486 = vadd.f32 %v5485, 0.05243302
        %v5487 = vmul.f32 %v5480, %v5486
        %v5488 = vadd.f32 %v5487, 0.18741608
        %v5489 = vmul.f32 %v5480, %v5488
        %v5490 = vadd.f32 %v5489, 1.1283791
        %v5491 = vmul.f32 %v5229, %v5490
        %v5492 = vmul.f32 %v5480, 3.8918573e-05
        %v5493 = vadd.f32 %v5492, 0.001143296
        %v5494 = vmul.f32 %v5480, %v5493
        %v5495 = vadd.f32 %v5494, 0.014752088
        %v5496 = vmul.f32 %v5480, %v5495
        %v5497 = vadd.f32 %v5496, 0.112945676
        %v5498 = vmul.f32 %v5480, %v5497
        %v5499 = vadd.f32 %v5498, 0.4994258
        %v5500 = vmul.f32 %v5480, %v5499
        %v5501 = vadd.f32 %v5500, 1.0
        %v5502 = vrcp.pop %v5501
        %v5503 = vmul.f32 %v5501, %v5502
        %v5504 = vsub.f32 1.0, %v5503
        %v5505 = vmul.f32 %v5502, %v5504
        %v5506 = vadd.f32 %v5502, %v5505
        %vm5507 = vweird.f32 %v5501
        %vm5508 = vweird.f32 %v5502
        %vm5509 = vmor %vm5507, %vm5508
        %v5510 = vsel %vm5509, %v5502, %v5506
        %v5511 = vand.u32 2147483647, %v5501
        %vm5512 = vcmp.eq.f32.partialorder %v5511, 8.507059e+37
        %v5513 = vand.u32 %v5501, 2147483648
        %v5514 = vor.u32 1.1754944e-38, %v5513
        %v5515 = vsel %vm5512, %v5514, %v5510
        %v5516 = vmul.f32 %v5491, %v5515
        %v5517 = vmin.f32 %v5516, 1.0
        %v5518 = vmax.f32 %v5517, -1.0
        %v5519 = vmul.f32 %v5230, %v5230
        %v5520 = vmin.f32 16.0, %v5519
        %v5521 = vmul.f32 %v5520, 2.1237322e-06
        %v5522 = vadd.f32 %v5521, 0.00028619796
        %v5523 = vmul.f32 %v5520, %v5522
        %v5524 = vadd.f32 %v5523, 0.0036580483
        %v5525 = vmul.f32 %v5520, %v5524
        %v5526 = vadd.f32 %v5525, 0.05243302
        %v5527 = vmul.f32 %v5520, %v5526
        %v5528 = vadd.f32 %v5527, 0.18741608
        %v5529 = vmul.f32 %v5520, %v5528
        %v5530 = vadd.f32 %v5529, 1.1283791
        %v5531 = vmul.f32 %v5230, %v5530
        %v5532 = vmul.f32 %v5520, 3.8918573e-05
        %v5533 = vadd.f32 %v5532, 0.001143296
        %v5534 = vmul.f32 %v5520, %v5533
        %v5535 = vadd.f32 %v5534, 0.014752088
        %v5536 = vmul.f32 %v5520, %v5535
        %v5537 = vadd.f32 %v5536, 0.112945676
        %v5538 = vmul.f32 %v5520, %v5537
        %v5539 = vadd.f32 %v5538, 0.4994258
        %v5540 = vmul.f32 %v5520, %v5539
        %v5541 = vadd.f32 %v5540, 1.0
        %v5542 = vrcp.pop %v5541
        %v5543 = vmul.f32 %v5541, %v5542
        %v5544 = vsub.f32 1.0, %v5543
        %v5545 = vmul.f32 %v5542, %v5544
        %v5546 = vadd.f32 %v5542, %v5545
        %vm5547 = vweird.f32 %v5541
        %vm5548 = vweird.f32 %v5542
        %vm5549 = vmor %vm5547, %vm5548
        %v5550 = vsel %vm5549, %v5542, %v5546
        %v5551 = vand.u32 2147483647, %v5541
        %vm5552 = vcmp.eq.f32.partialorder %v5551, 8.507059e+37
        %v5553 = vand.u32 %v5541, 2147483648
        %v5554 = vor.u32 1.1754944e-38, %v5553
        %v5555 = vsel %vm5552, %v5554, %v5550
        %v5556 = vmul.f32 %v5531, %v5555
        %v5557 = vmin.f32 %v5556, 1.0
        %v5558 = vmax.f32 %v5557, -1.0
        %v5559 = vmul.f32 %v5231, %v5231
        %v5560 = vmin.f32 16.0, %v5559
        %v5561 = vmul.f32 %v5560, 2.1237322e-06
        %v5562 = vadd.f32 %v5561, 0.00028619796
        %v5563 = vmul.f32 %v5560, %v5562
        %v5564 = vadd.f32 %v5563, 0.0036580483
        %v5565 = vmul.f32 %v5560, %v5564
        %v5566 = vadd.f32 %v5565, 0.05243302
        %v5567 = vmul.f32 %v5560, %v5566
        %v5568 = vadd.f32 %v5567, 0.18741608
        %v5569 = vmul.f32 %v5560, %v5568
        %v5570 = vadd.f32 %v5569, 1.1283791
        %v5571 = vmul.f32 %v5231, %v5570
        %v5572 = vmul.f32 %v5560, 3.8918573e-05
        %v5573 = vadd.f32 %v5572, 0.001143296
        %v5574 = vmul.f32 %v5560, %v5573
        %v5575 = vadd.f32 %v5574, 0.014752088
        %v5576 = vmul.f32 %v5560, %v5575
        %v5577 = vadd.f32 %v5576, 0.112945676
        %v5578 = vmul.f32 %v5560, %v5577
        %v5579 = vadd.f32 %v5578, 0.4994258
        %v5580 = vmul.f32 %v5560, %v5579
        %v5581 = vadd.f32 %v5580, 1.0
        %v5582 = vrcp.pop %v5581
        %v5583 = vmul.f32 %v5581, %v5582
        %v5584 = vsub.f32 1.0, %v5583
        %v5585 = vmul.f32 %v5582, %v5584
        %v5586 = vadd.f32 %v5582, %v5585
        %vm5587 = vweird.f32 %v5581
        %vm5588 = vweird.f32 %v5582
        %vm5589 = vmor %vm5587, %vm5588
        %v5590 = vsel %vm5589, %v5582, %v5586
        %v5591 = vand.u32 2147483647, %v5581
        %vm5592 = vcmp.eq.f32.partialorder %v5591, 8.507059e+37
        %v5593 = vand.u32 %v5581, 2147483648
        %v5594 = vor.u32 1.1754944e-38, %v5593
        %v5595 = vsel %vm5592, %v5594, %v5590
        %v5596 = vmul.f32 %v5571, %v5595
        %v5597 = vmin.f32 %v5596, 1.0
        %v5598 = vmax.f32 %v5597, -1.0
        %v5599 = vmul.f32 %v5232, %v5232
        %v5600 = vmin.f32 16.0, %v5599
        %v5601 = vmul.f32 %v5600, 2.1237322e-06
        %v5602 = vadd.f32 %v5601, 0.00028619796
        %v5603 = vmul.f32 %v5600, %v5602
        %v5604 = vadd.f32 %v5603, 0.0036580483
        %v5605 = vmul.f32 %v5600, %v5604
        %v5606 = vadd.f32 %v5605, 0.05243302
        %v5607 = vmul.f32 %v5600, %v5606
        %v5608 = vadd.f32 %v5607, 0.18741608
        %v5609 = vmul.f32 %v5600, %v5608
        %v5610 = vadd.f32 %v5609, 1.1283791
        %v5611 = vmul.f32 %v5232, %v5610
        %v5612 = vmul.f32 %v5600, 3.8918573e-05
        %v5613 = vadd.f32 %v5612, 0.001143296
        %v5614 = vmul.f32 %v5600, %v5613
        %v5615 = vadd.f32 %v5614, 0.014752088
        %v5616 = vmul.f32 %v5600, %v5615
        %v5617 = vadd.f32 %v5616, 0.112945676
        %v5618 = vmul.f32 %v5600, %v5617
        %v5619 = vadd.f32 %v5618, 0.4994258
        %v5620 = vmul.f32 %v5600, %v5619
        %v5621 = vadd.f32 %v5620, 1.0
        %v5622 = vrcp.pop %v5621
        %v5623 = vmul.f32 %v5621, %v5622
        %v5624 = vsub.f32 1.0, %v5623
        %v5625 = vmul.f32 %v5622, %v5624
        %v5626 = vadd.f32 %v5622, %v5625
        %vm5627 = vweird.f32 %v5621
        %vm5628 = vweird.f32 %v5622
        %vm5629 = vmor %vm5627, %vm5628
        %v5630 = vsel %vm5629, %v5622, %v5626
        %v5631 = vand.u32 2147483647, %v5621
        %vm5632 = vcmp.eq.f32.partialorder %v5631, 8.507059e+37
        %v5633 = vand.u32 %v5621, 2147483648
        %v5634 = vor.u32 1.1754944e-38, %v5633
        %v5635 = vsel %vm5632, %v5634, %v5630
        %v5636 = vmul.f32 %v5611, %v5635
        %v5637 = vmin.f32 %v5636, 1.0
        %v5638 = vmax.f32 %v5637, -1.0
        %v5639 = vmul.f32 %v5233, %v5233
        %v5640 = vmin.f32 16.0, %v5639
        %v5641 = vmul.f32 %v5640, 2.1237322e-06
        %v5642 = vadd.f32 %v5641, 0.00028619796
        %v5643 = vmul.f32 %v5640, %v5642
        %v5644 = vadd.f32 %v5643, 0.0036580483
        %v5645 = vmul.f32 %v5640, %v5644
        %v5646 = vadd.f32 %v5645, 0.05243302
        %v5647 = vmul.f32 %v5640, %v5646
        %v5648 = vadd.f32 %v5647, 0.18741608
        %v5649 = vmul.f32 %v5640, %v5648
        %v5650 = vadd.f32 %v5649, 1.1283791
        %v5651 = vmul.f32 %v5233, %v5650
        %v5652 = vmul.f32 %v5640, 3.8918573e-05
        %v5653 = vadd.f32 %v5652, 0.001143296
        %v5654 = vmul.f32 %v5640, %v5653
        %v5655 = vadd.f32 %v5654, 0.014752088
        %v5656 = vmul.f32 %v5640, %v5655
        %v5657 = vadd.f32 %v5656, 0.112945676
        %v5658 = vmul.f32 %v5640, %v5657
        %v5659 = vadd.f32 %v5658, 0.4994258
        %v5660 = vmul.f32 %v5640, %v5659
        %v5661 = vadd.f32 %v5660, 1.0
        %v5662 = vrcp.pop %v5661
        %v5663 = vmul.f32 %v5661, %v5662
        %v5664 = vsub.f32 1.0, %v5663
        %v5665 = vmul.f32 %v5662, %v5664
        %v5666 = vadd.f32 %v5662, %v5665
        %vm5667 = vweird.f32 %v5661
        %vm5668 = vweird.f32 %v5662
        %vm5669 = vmor %vm5667, %vm5668
        %v5670 = vsel %vm5669, %v5662, %v5666
        %v5671 = vand.u32 2147483647, %v5661
        %vm5672 = vcmp.eq.f32.partialorder %v5671, 8.507059e+37
        %v5673 = vand.u32 %v5661, 2147483648
        %v5674 = vor.u32 1.1754944e-38, %v5673
        %v5675 = vsel %vm5672, %v5674, %v5670
        %v5676 = vmul.f32 %v5651, %v5675
        %v5677 = vmin.f32 %v5676, 1.0
        %v5678 = vmax.f32 %v5677, -1.0
        %v5679 = vmul.f32 %v5234, %v5234
        %v5680 = vmin.f32 16.0, %v5679
        %v5681 = vmul.f32 %v5680, 2.1237322e-06
        %v5682 = vadd.f32 %v5681, 0.00028619796
        %v5683 = vmul.f32 %v5680, %v5682
        %v5684 = vadd.f32 %v5683, 0.0036580483
        %v5685 = vmul.f32 %v5680, %v5684
        %v5686 = vadd.f32 %v5685, 0.05243302
        %v5687 = vmul.f32 %v5680, %v5686
        %v5688 = vadd.f32 %v5687, 0.18741608
        %v5689 = vmul.f32 %v5680, %v5688
        %v5690 = vadd.f32 %v5689, 1.1283791
        %v5691 = vmul.f32 %v5234, %v5690
        %v5692 = vmul.f32 %v5680, 3.8918573e-05
        %v5693 = vadd.f32 %v5692, 0.001143296
        %v5694 = vmul.f32 %v5680, %v5693
        %v5695 = vadd.f32 %v5694, 0.014752088
        %v5696 = vmul.f32 %v5680, %v5695
        %v5697 = vadd.f32 %v5696, 0.112945676
        %v5698 = vmul.f32 %v5680, %v5697
        %v5699 = vadd.f32 %v5698, 0.4994258
        %v5700 = vmul.f32 %v5680, %v5699
        %v5701 = vadd.f32 %v5700, 1.0
        %v5702 = vrcp.pop %v5701
        %v5703 = vmul.f32 %v5701, %v5702
        %v5704 = vsub.f32 1.0, %v5703
        %v5705 = vmul.f32 %v5702, %v5704
        %v5706 = vadd.f32 %v5702, %v5705
        %vm5707 = vweird.f32 %v5701
        %vm5708 = vweird.f32 %v5702
        %vm5709 = vmor %vm5707, %vm5708
        %v5710 = vsel %vm5709, %v5702, %v5706
        %v5711 = vand.u32 2147483647, %v5701
        %vm5712 = vcmp.eq.f32.partialorder %v5711, 8.507059e+37
        %v5713 = vand.u32 %v5701, 2147483648
        %v5714 = vor.u32 1.1754944e-38, %v5713
        %v5715 = vsel %vm5712, %v5714, %v5710
        %v5716 = vmul.f32 %v5691, %v5715
        %v5717 = vmin.f32 %v5716, 1.0
        %v5718 = vmax.f32 %v5717, -1.0
        %v5719 = vmul.f32 %v5235, %v5235
        %v5720 = vmin.f32 16.0, %v5719
        %v5721 = vmul.f32 %v5720, 2.1237322e-06
        %v5722 = vadd.f32 %v5721, 0.00028619796
        %v5723 = vmul.f32 %v5720, %v5722
        %v5724 = vadd.f32 %v5723, 0.0036580483
        %v5725 = vmul.f32 %v5720, %v5724
        %v5726 = vadd.f32 %v5725, 0.05243302
        %v5727 = vmul.f32 %v5720, %v5726
        %v5728 = vadd.f32 %v5727, 0.18741608
        %v5729 = vmul.f32 %v5720, %v5728
        %v5730 = vadd.f32 %v5729, 1.1283791
        %v5731 = vmul.f32 %v5235, %v5730
        %v5732 = vmul.f32 %v5720, 3.8918573e-05
        %v5733 = vadd.f32 %v5732, 0.001143296
        %v5734 = vmul.f32 %v5720, %v5733
        %v5735 = vadd.f32 %v5734, 0.014752088
        %v5736 = vmul.f32 %v5720, %v5735
        %v5737 = vadd.f32 %v5736, 0.112945676
        %v5738 = vmul.f32 %v5720, %v5737
        %v5739 = vadd.f32 %v5738, 0.4994258
        %v5740 = vmul.f32 %v5720, %v5739
        %v5741 = vadd.f32 %v5740, 1.0
        %v5742 = vrcp.pop %v5741
        %v5743 = vmul.f32 %v5741, %v5742
        %v5744 = vsub.f32 1.0, %v5743
        %v5745 = vmul.f32 %v5742, %v5744
        %v5746 = vadd.f32 %v5742, %v5745
        %vm5747 = vweird.f32 %v5741
        %vm5748 = vweird.f32 %v5742
        %vm5749 = vmor %vm5747, %vm5748
        %v5750 = vsel %vm5749, %v5742, %v5746
        %v5751 = vand.u32 2147483647, %v5741
        %vm5752 = vcmp.eq.f32.partialorder %v5751, 8.507059e+37
        %v5753 = vand.u32 %v5741, 2147483648
        %v5754 = vor.u32 1.1754944e-38, %v5753
        %v5755 = vsel %vm5752, %v5754, %v5750
        %v5756 = vmul.f32 %v5731, %v5755
        %v5757 = vmin.f32 %v5756, 1.0
        %v5758 = vmax.f32 %v5757, -1.0
        %v5759 = vmul.f32 %v5236, %v5236
        %v5760 = vmin.f32 16.0, %v5759
        %v5761 = vmul.f32 %v5760, 2.1237322e-06
        %v5762 = vadd.f32 %v5761, 0.00028619796
        %v5763 = vmul.f32 %v5760, %v5762
        %v5764 = vadd.f32 %v5763, 0.0036580483
        %v5765 = vmul.f32 %v5760, %v5764
        %v5766 = vadd.f32 %v5765, 0.05243302
        %v5767 = vmul.f32 %v5760, %v5766
        %v5768 = vadd.f32 %v5767, 0.18741608
        %v5769 = vmul.f32 %v5760, %v5768
        %v5770 = vadd.f32 %v5769, 1.1283791
        %v5771 = vmul.f32 %v5236, %v5770
        %v5772 = vmul.f32 %v5760, 3.8918573e-05
        %v5773 = vadd.f32 %v5772, 0.001143296
        %v5774 = vmul.f32 %v5760, %v5773
        %v5775 = vadd.f32 %v5774, 0.014752088
        %v5776 = vmul.f32 %v5760, %v5775
        %v5777 = vadd.f32 %v5776, 0.112945676
        %v5778 = vmul.f32 %v5760, %v5777
        %v5779 = vadd.f32 %v5778, 0.4994258
        %v5780 = vmul.f32 %v5760, %v5779
        %v5781 = vadd.f32 %v5780, 1.0
        %v5782 = vrcp.pop %v5781
        %v5783 = vmul.f32 %v5781, %v5782
        %v5784 = vsub.f32 1.0, %v5783
        %v5785 = vmul.f32 %v5782, %v5784
        %v5786 = vadd.f32 %v5782, %v5785
        %vm5787 = vweird.f32 %v5781
        %vm5788 = vweird.f32 %v5782
        %vm5789 = vmor %vm5787, %vm5788
        %v5790 = vsel %vm5789, %v5782, %v5786
        %v5791 = vand.u32 2147483647, %v5781
        %vm5792 = vcmp.eq.f32.partialorder %v5791, 8.507059e+37
        %v5793 = vand.u32 %v5781, 2147483648
        %v5794 = vor.u32 1.1754944e-38, %v5793
        %v5795 = vsel %vm5792, %v5794, %v5790
        %v5796 = vmul.f32 %v5771, %v5795
        %v5797 = vmin.f32 %v5796, 1.0
        %v5798 = vmax.f32 %v5797, -1.0
        %v5799 = vmul.f32 %v5237, %v5237
        %v5800 = vmin.f32 16.0, %v5799
        %v5801 = vmul.f32 %v5800, 2.1237322e-06
        %v5802 = vadd.f32 %v5801, 0.00028619796
        %v5803 = vmul.f32 %v5800, %v5802
        %v5804 = vadd.f32 %v5803, 0.0036580483
        %v5805 = vmul.f32 %v5800, %v5804
        %v5806 = vadd.f32 %v5805, 0.05243302
        %v5807 = vmul.f32 %v5800, %v5806
        %v5808 = vadd.f32 %v5807, 0.18741608
        %v5809 = vmul.f32 %v5800, %v5808
        %v5810 = vadd.f32 %v5809, 1.1283791
        %v5811 = vmul.f32 %v5237, %v5810
        %v5812 = vmul.f32 %v5800, 3.8918573e-05
        %v5813 = vadd.f32 %v5812, 0.001143296
        %v5814 = vmul.f32 %v5800, %v5813
        %v5815 = vadd.f32 %v5814, 0.014752088
        %v5816 = vmul.f32 %v5800, %v5815
        %v5817 = vadd.f32 %v5816, 0.112945676
        %v5818 = vmul.f32 %v5800, %v5817
        %v5819 = vadd.f32 %v5818, 0.4994258
        %v5820 = vmul.f32 %v5800, %v5819
        %v5821 = vadd.f32 %v5820, 1.0
        %v5822 = vrcp.pop %v5821
        %v5823 = vmul.f32 %v5821, %v5822
        %v5824 = vsub.f32 1.0, %v5823
        %v5825 = vmul.f32 %v5822, %v5824
        %v5826 = vadd.f32 %v5822, %v5825
        %vm5827 = vweird.f32 %v5821
        %vm5828 = vweird.f32 %v5822
        %vm5829 = vmor %vm5827, %vm5828
        %v5830 = vsel %vm5829, %v5822, %v5826
        %v5831 = vand.u32 2147483647, %v5821
        %vm5832 = vcmp.eq.f32.partialorder %v5831, 8.507059e+37
        %v5833 = vand.u32 %v5821, 2147483648
        %v5834 = vor.u32 1.1754944e-38, %v5833
        %v5835 = vsel %vm5832, %v5834, %v5830
        %v5836 = vmul.f32 %v5811, %v5835
        %v5837 = vmin.f32 %v5836, 1.0
        %v5838 = vmax.f32 %v5837, -1.0
        %v5839 = vmul.f32 %v5238, %v5238
        %v5840 = vmin.f32 16.0, %v5839
        %v5841 = vmul.f32 %v5840, 2.1237322e-06
        %v5842 = vadd.f32 %v5841, 0.00028619796
        %v5843 = vmul.f32 %v5840, %v5842
        %v5844 = vadd.f32 %v5843, 0.0036580483
        %v5845 = vmul.f32 %v5840, %v5844
        %v5846 = vadd.f32 %v5845, 0.05243302
        %v5847 = vmul.f32 %v5840, %v5846
        %v5848 = vadd.f32 %v5847, 0.18741608
        %v5849 = vmul.f32 %v5840, %v5848
        %v5850 = vadd.f32 %v5849, 1.1283791
        %v5851 = vmul.f32 %v5238, %v5850
        %v5852 = vmul.f32 %v5840, 3.8918573e-05
        %v5853 = vadd.f32 %v5852, 0.001143296
        %v5854 = vmul.f32 %v5840, %v5853
        %v5855 = vadd.f32 %v5854, 0.014752088
        %v5856 = vmul.f32 %v5840, %v5855
        %v5857 = vadd.f32 %v5856, 0.112945676
        %v5858 = vmul.f32 %v5840, %v5857
        %v5859 = vadd.f32 %v5858, 0.4994258
        %v5860 = vmul.f32 %v5840, %v5859
        %v5861 = vadd.f32 %v5860, 1.0
        %v5862 = vrcp.pop %v5861
        %v5863 = vmul.f32 %v5861, %v5862
        %v5864 = vsub.f32 1.0, %v5863
        %v5865 = vmul.f32 %v5862, %v5864
        %v5866 = vadd.f32 %v5862, %v5865
        %vm5867 = vweird.f32 %v5861
        %vm5868 = vweird.f32 %v5862
        %vm5869 = vmor %vm5867, %vm5868
        %v5870 = vsel %vm5869, %v5862, %v5866
        %v5871 = vand.u32 2147483647, %v5861
        %vm5872 = vcmp.eq.f32.partialorder %v5871, 8.507059e+37
        %v5873 = vand.u32 %v5861, 2147483648
        %v5874 = vor.u32 1.1754944e-38, %v5873
        %v5875 = vsel %vm5872, %v5874, %v5870
        %v5876 = vmul.f32 %v5851, %v5875
        %v5877 = vmin.f32 %v5876, 1.0
        %v5878 = vmax.f32 %v5877, -1.0
        %v5879 = vadd.f32 %v5278, 1.0
        %v5880 = vadd.f32 %v5318, 1.0
        %v5881 = vadd.f32 %v5358, 1.0
        %v5882 = vadd.f32 %v5398, 1.0
        %v5883 = vadd.f32 %v5438, 1.0
        %v5884 = vadd.f32 %v5478, 1.0
        %v5885 = vadd.f32 %v5518, 1.0
        %v5886 = vadd.f32 %v5558, 1.0
        %v5887 = vadd.f32 %v5598, 1.0
        %v5888 = vadd.f32 %v5638, 1.0
        %v5889 = vadd.f32 %v5678, 1.0
        %v5890 = vadd.f32 %v5718, 1.0
        %v5891 = vadd.f32 %v5758, 1.0
        %v5892 = vadd.f32 %v5798, 1.0
        %v5893 = vadd.f32 %v5838, 1.0
        %v5894 = vadd.f32 %v5878, 1.0
        %v5895 = vmul.f32 %v5207, %v5879
        %v5896 = vmul.f32 %v5208, %v5880
        %v5897 = vmul.f32 %v5209, %v5881
        %v5898 = vmul.f32 %v5210, %v5882
        %v5899 = vmul.f32 %v5211, %v5883
        %v5900 = vmul.f32 %v5212, %v5884
        %v5901 = vmul.f32 %v5213, %v5885
        %v5902 = vmul.f32 %v5214, %v5886
        %v5903 = vmul.f32 %v5215, %v5887
        %v5904 = vmul.f32 %v5216, %v5888
        %v5905 = vmul.f32 %v5217, %v5889
        %v5906 = vmul.f32 %v5218, %v5890
        %v5907 = vmul.f32 %v5219, %v5891
        %v5908 = vmul.f32 %v5220, %v5892
        %v5909 = vmul.f32 %v5221, %v5893
        %v5910 = vmul.f32 %v5222, %v5894
        %v5911 = vsel %vm761, %v4631, %v5895
        %v5912 = vsel %vm761, %v4632, %v5896
        %v5913 = vsel %vm761, %v4633, %v5897
        %v5914 = vsel %vm761, %v4634, %v5898
        %v5915 = vsel %vm761, %v4635, %v5899
        %v5916 = vsel %vm761, %v4636, %v5900
        %v5917 = vsel %vm761, %v4637, %v5901
        %v5918 = vsel %vm761, %v4638, %v5902
        %v5919 = vsel %vm761, %v4639, %v5903
        %v5920 = vsel %vm761, %v4640, %v5904
        %v5921 = vsel %vm761, %v4641, %v5905
        %v5922 = vsel %vm761, %v4642, %v5906
        %v5923 = vsel %vm761, %v4643, %v5907
        %v5924 = vsel %vm761, %v4644, %v5908
        %v5925 = vsel %vm761, %v4645, %v5909
        %v5926 = vsel %vm761, %v4646, %v5910
        %5927 = vst.msk [vmem:[%s187] sm:$0xff] %vm795, %v3421
        %5928 = vst.msk [vmem:[%s187 + $0x8] sm:$0xff] %vm795, %v3422
        %5929 = vst.msk [vmem:[%s187 + $0x10] sm:$0xff] %vm795, %v5911
        %5930 = vst.msk [vmem:[%s187 + $0x18] sm:$0xff] %vm795, %v5912
        %5931 = vst.msk [vmem:[%s187 + $0x20] sm:$0xff] %vm795, %v3423
        %5932 = vst.msk [vmem:[%s187 + $0x28] sm:$0xff] %vm795, %v3424
        %5933 = vst.msk [vmem:[%s187 + $0x30] sm:$0xff] %vm795, %v5913
        %5934 = vst.msk [vmem:[%s187 + $0x38] sm:$0xff] %vm795, %v5914
        %5935 = vst.msk [vmem:[%s187 + $0x40] sm:$0xff] %vm795, %v3425
        %5936 = vst.msk [vmem:[%s187 + $0x48] sm:$0xff] %vm795, %v3426
        %5937 = vst.msk [vmem:[%s187 + $0x50] sm:$0xff] %vm795, %v5915
        %5938 = vst.msk [vmem:[%s187 + $0x58] sm:$0xff] %vm795, %v5916
        %5939 = vst.msk [vmem:[%s187 + $0x60] sm:$0xff] %vm795, %v3427
        %5940 = vst.msk [vmem:[%s187 + $0x68] sm:$0xff] %vm795, %v3428
        %5941 = vst.msk [vmem:[%s187 + $0x70] sm:$0xff] %vm795, %v5917
        %5942 = vst.msk [vmem:[%s187 + $0x78] sm:$0xff] %vm795, %v5918
        %5943 = vst.msk [vmem:[%s187 + $0x80] sm:$0xff] %vm795, %v3429
        %5944 = vst.msk [vmem:[%s187 + $0x88] sm:$0xff] %vm795, %v3430
        %5945 = vst.msk [vmem:[%s187 + $0x90] sm:$0xff] %vm795, %v5919
        %5946 = vst.msk [vmem:[%s187 + $0x98] sm:$0xff] %vm795, %v5920
        %5947 = vst.msk [vmem:[%s187 + $0xa0] sm:$0xff] %vm795, %v3431
        %5948 = vst.msk [vmem:[%s187 + $0xa8] sm:$0xff] %vm795, %v3432
        %5949 = vst.msk [vmem:[%s187 + $0xb0] sm:$0xff] %vm795, %v5921
        %5950 = vst.msk [vmem:[%s187 + $0xb8] sm:$0xff] %vm795, %v5922
        %5951 = vst.msk [vmem:[%s187 + $0xc0] sm:$0xff] %vm795, %v3433
        %5952 = vst.msk [vmem:[%s187 + $0xc8] sm:$0xff] %vm795, %v3434
        %5953 = vst.msk [vmem:[%s187 + $0xd0] sm:$0xff] %vm795, %v5923
        %5954 = vst.msk [vmem:[%s187 + $0xd8] sm:$0xff] %vm795, %v5924
        %5955 = vst.msk [vmem:[%s187 + $0xe0] sm:$0xff] %vm795, %v3435
        %5956 = vst.msk [vmem:[%s187 + $0xe8] sm:$0xff] %vm795, %v3436
        %5957 = vst.msk [vmem:[%s187 + $0xf0] sm:$0xff] %vm795, %v5925
        %5958 = vst.msk [vmem:[%s187 + $0xf8] sm:$0xff] %vm795, %v5926
        %s5959 = sand.u32 %s111, 1
        %s5960 = scalar_lea.sflag [#allocation3], %s5959
        %s5961 = sand.u32 %s111, 1
        %s5962 = smul.addr %s5961, 256
        %s5963 = scalar_lea.vmem [#allocation2], %s5962
        // Predicated region
        $region33: #{tpu_custom_call.1} parent=31 // pred_check
          %p5964 = pneg %p121
        $region34: #{tpu_custom_call.1} parent=31 // pred_check_branch
          %5966 = sbr.rel (%p5964) target = $region36
        $region35: #{tpu_custom_call.1} parent=31 // pred_region
          %s5967 = smul.u32 8, %s22
          %5969 = vsyncadd %s5960, 0
          %s5970 = smul.addr %s5967, 4
          %s5971 = smul.addr %s21, 64
          %s5972 = sadd.s32 %s5970, %s5971
          %s5973 = smul.addr %s5972, 8
          %s5974 = scalar_lea.hbm %s3, %s5973
          %s5975 = sshll.u32 %s5963, 4
          %s5976 = int_to_ptr.vmem [resolvable:$true] %s5975
          %s5977 = sshll.u32 %s5974, 4
          %s5978 = int_to_ptr.hbm [resolvable:$true] %s5977
          %5983 = dma.vmem_to_hbm [thread:$0]  %s5976, 4096, %s5978, %s5960, 128, 128, 8
        $region36: #{tpu_custom_call.1} parent=31 // pred_fallthru
          _
      $region32: #{tpu_custom_call.1} parent=5 // pred_fallthru
        _
      %p5984 = scmp.le.s32.totalorder 2, %s12
      // Predicated region
      $region37: #{tpu_custom_call.1} parent=5 // pred_check
        %p5985 = pneg %p5984
      $region38: #{tpu_custom_call.1} parent=5 // pred_check_branch
        %5987 = sbr.rel (%p5985) target = $region40
      $region39: #{tpu_custom_call.1} parent=5 // pred_region
        %s5988 = ssub.s32 %s12, 2
        // Predicated region
        $region41: #{tpu_custom_call.1} parent=39 // pred_check
          %p5989 = pneg %p127
        $region42: #{tpu_custom_call.1} parent=39 // pred_check_branch
          %5991 = sbr.rel (%p5989) target = $region44
        $region43: #{tpu_custom_call.1} parent=39 // pred_region
          %s5992 = sand.u32 %s112, 1
          %s5993 = scalar_lea.sflag [#allocation3], %s5992
          %s5994 = sand.u32 %s112, 1
          %s5995 = smul.addr %s5994, 256
          %s5996 = scalar_lea.vmem [#allocation2], %s5995
          %5998 = dma.done %s5993, 4096
        $region44: #{tpu_custom_call.1} parent=39 // pred_fallthru
          _
      $region40: #{tpu_custom_call.1} parent=5 // pred_fallthru
        _
    $region6: #{tpu_custom_call.1} parent=1 // loop_footer
      %s16 = sadd.s32 1, %s12
    $region7: #{tpu_custom_call.1} parent=1 // loop_footer_branch
      %11 = sbr.rel target = $region3
    $region8: #{tpu_custom_call.1} parent=1 // loop_exit
      _
    %5999 = vsyncpa [#allocation3], 1
    %s6000 = scalar_lea.sflag [#allocation3], 1
    %6001 = vsyncpa %s6000, 1

</llo_original>
